<compile_context>
chip_gen: v5e
topology: v5e:2x2
jax: 0.10.0
libtpu: 0.0.40
codegen_flags: <defaults>
</compile_context>

<pallas_src>
import functools

import jax
import jax.numpy as jnp
from jax.experimental import pallas as pl
from jax.experimental.pallas import tpu as pltpu


def _conv_bn_lrelu_kernel(x_ref, w_ref, gamma_ref, beta_ref, o_ref, *,
                          kh_kw, eps, negative_slope, compute_dtype):
    # x_ref:     [N, Hp, Wp, Cin]   zero-padded input, f32
    # w_ref:     [KH*KW*Cin, Cout]  conv weight, flattened HWIO, compute_dtype
    # gamma_ref: [1, Cout]  f32
    # beta_ref:  [1, Cout]  f32
    # o_ref:     [N*H*W, Cout] f32
    KH, KW = kh_kw
    N, Hp, Wp, Cin = x_ref.shape
    Cout = o_ref.shape[-1]
    H = Hp - KH + 1
    W = Wp - KW + 1
    M = N * H * W

    x = x_ref[...]            # whole (small) padded input in VMEM

    # --- im2col patch build: [M, KH*KW*Cin], then ONE MXU matmul ------------
    taps = []
    for kh in range(KH):              # static Python loops -> fully unrolled
        for kw in range(KW):
            taps.append(x[:, kh:kh + H, kw:kw + W, :].reshape(M, Cin))
    patch = jnp.concatenate(taps, axis=-1)               # [M, KH*KW*Cin]

    acc = jnp.dot(patch.astype(compute_dtype), w_ref[...],
                  preferred_element_type=jnp.float32)    # [M, Cout], f32

    # NOTE: no conv-bias add — it is mathematically absorbed by the train-mode
    # BatchNorm mean subtraction.

    # --- BatchNorm2d (training-mode batch stats, biased variance) -----------
    # Single pass: sum and sum-of-squares; fold gamma/beta into scale/shift.
    inv_m = jnp.float32(1.0 / M)
    mean = jnp.sum(acc, axis=0, keepdims=True) * inv_m            # [1, Cout]
    ex2 = jnp.sum(acc * acc, axis=0, keepdims=True) * inv_m       # [1, Cout]
    var = ex2 - mean * mean
    scale = gamma_ref[...] * jax.lax.rsqrt(var + eps)             # [1, Cout]
    shift = beta_ref[...] - mean * scale                          # [1, Cout]

    y = acc * scale + shift                                       # one FMA pass

    # --- LeakyReLU(negative_slope) -------------------------------------------
    y = jnp.where(y > 0, y, negative_slope * y)

    o_ref[...] = y


def custom_conv2d(x_nchw, weight_oihw, bias, gamma, beta, *, padding,
                  eps=1e-5, negative_slope=0.01, compute_dtype=jnp.float32):
    """Forward pass of CustomConv2d. x_nchw: [N, Cin, H, W] (PyTorch layout).

    `bias` is accepted for API parity with the PyTorch module but not used:
    a per-channel bias before train-mode BatchNorm cancels exactly against the
    batch-mean subtraction (rounding-level difference only).
    `compute_dtype=jnp.bfloat16` feeds the MXU with bf16 operands (v6e/v7x fast
    path); accumulation and BN/LeakyReLU math remain f32.
    """
    del bias  # mathematically a no-op before train-mode BN
    N, Cin, H, W = x_nchw.shape
    Cout, _, KH, KW = weight_oihw.shape
    Ho = H + 2 * padding - KH + 1
    Wo = W + 2 * padding - KW + 1

    # Boundary glue (kept minimal): NCHW->NHWC + zero pad for x, OIHW->flattened
    # HWIO for the (tiny) weight.
    x_nhwc = jnp.transpose(x_nchw, (0, 2, 3, 1)).astype(jnp.float32)
    x_pad = jnp.pad(x_nhwc,
                    ((0, 0), (padding, padding), (padding, padding), (0, 0)))
    w_mat = (jnp.transpose(weight_oihw, (2, 3, 1, 0))
             .reshape(KH * KW * Cin, Cout).astype(compute_dtype))

    kernel = functools.partial(
        _conv_bn_lrelu_kernel, kh_kw=(KH, KW), eps=eps,
        negative_slope=negative_slope, compute_dtype=compute_dtype)

    vmem = pl.BlockSpec(memory_space=pltpu.MemorySpace.VMEM)

    # TODO(synk): at production sizes, add a grid over (N, H row-tiles) with
    # BlockSpec tiling and a partial-moments (sum / sum-of-squares) BN combine,
    # and set vmem_limit_bytes; the single-block, whole-array-in-VMEM design is
    # only appropriate at these toy shapes (re-derive for v7x's 64 MiB VMEM).
    out2d = pl.pallas_call(
        kernel,
        out_shape=jax.ShapeDtypeStruct((N * Ho * Wo, Cout), jnp.float32),
        in_specs=[vmem, vmem, vmem, vmem],
        out_specs=vmem,
    )(x_pad, w_mat,
      gamma.reshape(1, Cout).astype(jnp.float32),
      beta.reshape(1, Cout).astype(jnp.float32))

    # Back to PyTorch NCHW layout.
    return jnp.transpose(out2d.reshape(N, Ho, Wo, Cout), (0, 3, 1, 2))


def _reference(x_nchw, weight_oihw, bias, gamma, beta, *, padding,
               eps=1e-5, negative_slope=0.01):
    conv = jax.lax.conv_general_dilated(
        x_nchw, weight_oihw, window_strides=(1, 1),
        padding=[(padding, padding), (padding, padding)],
        dimension_numbers=("NCHW", "OIHW", "NCHW"))
    conv = conv + bias[None, :, None, None]
    mean = conv.mean(axis=(0, 2, 3), keepdims=True)
    var = conv.var(axis=(0, 2, 3), keepdims=True)   # biased (train-mode BN)
    xhat = (conv - mean) / jnp.sqrt(var + eps)
    y = xhat * gamma[None, :, None, None] + beta[None, :, None, None]
    return jnp.where(y > 0, y, negative_slope * y)


if __name__ == "__main__":
    # Small shapes consistent with the module: N=2, Cin=4, H=W=16,
    # Cout=8, kernel_size=3, padding=1.
    N, Cin, H, W = 2, 4, 16, 16
    Cout, K, pad = 8, 3, 1

    key = jax.random.PRNGKey(0)
    kx, kw, kb, kg, kbt = jax.random.split(key, 5)

    x = jax.random.normal(kx, (N, Cin, H, W), jnp.float32)
    # Deterministic parameter init (synthetic, not a checkpoint load).
    weight = jax.random.normal(kw, (Cout, Cin, K, K), jnp.float32) * 0.1
    bias = jax.random.normal(kb, (Cout,), jnp.float32) * 0.1
    gamma = 1.0 + 0.1 * jax.random.normal(kg, (Cout,), jnp.float32)
    beta = 0.1 * jax.random.normal(kbt, (Cout,), jnp.float32)

    ref = _reference(x, weight, bias, gamma, beta, padding=pad)

    # f32 operands (default; matches the PyTorch f32 module semantics).
    out = jax.block_until_ready(
        custom_conv2d(x, weight, bias, gamma, beta, padding=pad))
    assert out.shape == (N, Cout, H, W), out.shape
    assert jnp.allclose(out, ref, atol=1e-4, rtol=1e-4), \
        float(jnp.max(jnp.abs(out - ref)))

    # bf16 MXU operands (v6e/v7x fast path); BN/LeakyReLU stay f32.
    out_bf16 = jax.block_until_ready(
        custom_conv2d(x, weight, bias, gamma, beta, padding=pad,
                      compute_dtype=jnp.bfloat16))
    assert jnp.allclose(out_bf16, ref, atol=5e-2, rtol=5e-2), \
        float(jnp.max(jnp.abs(out_bf16 - ref)))

    print("KERNEL_OK")
</pallas_src>

<mosaic_0001>
module attributes {stable_mosaic.version = 11 : i64} {
  func.func @_conv_bn_lrelu_kernel(%arg0: memref<2x18x18x4xf32, #tpu.memory_space<vmem>>, %arg1: memref<36x8xf32, #tpu.memory_space<vmem>>, %arg2: memref<1x8xf32, #tpu.memory_space<vmem>>, %arg3: memref<1x8xf32, #tpu.memory_space<vmem>>, %arg4: memref<512x8xf32, #tpu.memory_space<vmem>>) attributes {dimension_semantics = [], scalar_prefetch = 0 : i64, scratch_operands = 0 : i64, tpu.core_type = #tpu.core_type<tc>} {
    %c0 = arith.constant 0 : index
    %c0_0 = arith.constant 0 : index
    %c0_1 = arith.constant 0 : index
    %c0_2 = arith.constant 0 : index
    %0 = vector.load %arg0[%c0, %c0_0, %c0_1, %c0_2] : memref<2x18x18x4xf32, #tpu.memory_space<vmem>>, vector<2x18x18x4xf32>
    %1 = vector.extract_strided_slice %0 {offsets = [0, 0, 0, 0], sizes = [2, 16, 16, 4], strides = [1, 1, 1, 1]} : vector<2x18x18x4xf32> to vector<2x16x16x4xf32>
    %2 = vector.shape_cast %1 : vector<2x16x16x4xf32> to vector<512x4xf32>
    %3 = vector.extract_strided_slice %0 {offsets = [0, 0, 1, 0], sizes = [2, 16, 16, 4], strides = [1, 1, 1, 1]} : vector<2x18x18x4xf32> to vector<2x16x16x4xf32>
    %4 = vector.shape_cast %3 : vector<2x16x16x4xf32> to vector<512x4xf32>
    %5 = vector.extract_strided_slice %0 {offsets = [0, 0, 2, 0], sizes = [2, 16, 16, 4], strides = [1, 1, 1, 1]} : vector<2x18x18x4xf32> to vector<2x16x16x4xf32>
    %6 = vector.shape_cast %5 : vector<2x16x16x4xf32> to vector<512x4xf32>
    %7 = vector.extract_strided_slice %0 {offsets = [0, 1, 0, 0], sizes = [2, 16, 16, 4], strides = [1, 1, 1, 1]} : vector<2x18x18x4xf32> to vector<2x16x16x4xf32>
    %8 = vector.shape_cast %7 : vector<2x16x16x4xf32> to vector<512x4xf32>
    %9 = vector.extract_strided_slice %0 {offsets = [0, 1, 1, 0], sizes = [2, 16, 16, 4], strides = [1, 1, 1, 1]} : vector<2x18x18x4xf32> to vector<2x16x16x4xf32>
    %10 = vector.shape_cast %9 : vector<2x16x16x4xf32> to vector<512x4xf32>
    %11 = vector.extract_strided_slice %0 {offsets = [0, 1, 2, 0], sizes = [2, 16, 16, 4], strides = [1, 1, 1, 1]} : vector<2x18x18x4xf32> to vector<2x16x16x4xf32>
    %12 = vector.shape_cast %11 : vector<2x16x16x4xf32> to vector<512x4xf32>
    %13 = vector.extract_strided_slice %0 {offsets = [0, 2, 0, 0], sizes = [2, 16, 16, 4], strides = [1, 1, 1, 1]} : vector<2x18x18x4xf32> to vector<2x16x16x4xf32>
    %14 = vector.shape_cast %13 : vector<2x16x16x4xf32> to vector<512x4xf32>
    %15 = vector.extract_strided_slice %0 {offsets = [0, 2, 1, 0], sizes = [2, 16, 16, 4], strides = [1, 1, 1, 1]} : vector<2x18x18x4xf32> to vector<2x16x16x4xf32>
    %16 = vector.shape_cast %15 : vector<2x16x16x4xf32> to vector<512x4xf32>
    %17 = vector.extract_strided_slice %0 {offsets = [0, 2, 2, 0], sizes = [2, 16, 16, 4], strides = [1, 1, 1, 1]} : vector<2x18x18x4xf32> to vector<2x16x16x4xf32>
    %18 = vector.shape_cast %17 : vector<2x16x16x4xf32> to vector<512x4xf32>
    %19 = tpu.concatenate %2, %4, %6, %8, %10, %12, %14, %16, %18 in 1 : vector<512x4xf32>, vector<512x4xf32>, vector<512x4xf32>, vector<512x4xf32>, vector<512x4xf32>, vector<512x4xf32>, vector<512x4xf32>, vector<512x4xf32>, vector<512x4xf32> -> vector<512x36xf32>
    %c0_3 = arith.constant 0 : index
    %c0_4 = arith.constant 0 : index
    %20 = vector.load %arg1[%c0_3, %c0_4] : memref<36x8xf32, #tpu.memory_space<vmem>>, vector<36x8xf32>
    %cst = arith.constant dense<0.000000e+00> : vector<512x8xf32>
    %21 = tpu.matmul %19, %20, %cst {dimension_numbers = #tpu.dot_dimension_numbers<[1], [0], [0], [1], [0, 0, 1, 1], [], []>} : vector<512x36xf32>, vector<36x8xf32>, vector<512x8xf32> -> vector<512x8xf32>
    %cst_5 = arith.constant dense<0.000000e+00> : vector<8xf32>
    %22 = vector.multi_reduction <add>, %21, %cst_5 [0] : vector<512x8xf32> to vector<8xf32>
    %23 = vector.shape_cast %22 : vector<8xf32> to vector<1x8xf32>
    %cst_6 = arith.constant 0.001953125 : f32
    %24 = vector.broadcast %cst_6 : f32 to vector<1x8xf32>
    %25 = arith.mulf %23, %24 : vector<1x8xf32>
    %26 = arith.mulf %21, %21 : vector<512x8xf32>
    %cst_7 = arith.constant dense<0.000000e+00> : vector<8xf32>
    %27 = vector.multi_reduction <add>, %26, %cst_7 [0] : vector<512x8xf32> to vector<8xf32>
    %28 = vector.shape_cast %27 : vector<8xf32> to vector<1x8xf32>
    %cst_8 = arith.constant 0.001953125 : f32
    %29 = vector.broadcast %cst_8 : f32 to vector<1x8xf32>
    %30 = arith.mulf %28, %29 : vector<1x8xf32>
    %31 = arith.mulf %25, %25 : vector<1x8xf32>
    %32 = arith.subf %30, %31 : vector<1x8xf32>
    %c0_9 = arith.constant 0 : index
    %c0_10 = arith.constant 0 : index
    %33 = vector.load %arg2[%c0_9, %c0_10] : memref<1x8xf32, #tpu.memory_space<vmem>>, vector<1x8xf32>
    %cst_11 = arith.constant 9.99999974E-6 : f32
    %34 = vector.broadcast %cst_11 : f32 to vector<1x8xf32>
    %35 = arith.addf %32, %34 : vector<1x8xf32>
    %36 = math.rsqrt %35 : vector<1x8xf32>
    %37 = arith.mulf %33, %36 : vector<1x8xf32>
    %c0_12 = arith.constant 0 : index
    %c0_13 = arith.constant 0 : index
    %38 = vector.load %arg3[%c0_12, %c0_13] : memref<1x8xf32, #tpu.memory_space<vmem>>, vector<1x8xf32>
    %39 = arith.mulf %25, %37 : vector<1x8xf32>
    %40 = arith.subf %38, %39 : vector<1x8xf32>
    %41 = vector.broadcast %37 : vector<1x8xf32> to vector<512x8xf32>
    %42 = arith.mulf %21, %41 : vector<512x8xf32>
    %43 = vector.broadcast %40 : vector<1x8xf32> to vector<512x8xf32>
    %44 = arith.addf %42, %43 : vector<512x8xf32>
    %cst_14 = arith.constant 0.000000e+00 : f32
    %45 = vector.broadcast %cst_14 : f32 to vector<512x8xf32>
    %46 = arith.cmpf ogt, %44, %45 : vector<512x8xf32>
    %cst_15 = arith.constant 0.00999999977 : f32
    %47 = vector.broadcast %cst_15 : f32 to vector<512x8xf32>
    %48 = arith.mulf %47, %44 : vector<512x8xf32>
    %49 = arith.select %46, %44, %48 : vector<512x8xi1>, vector<512x8xf32>
    %c0_16 = arith.constant 0 : index
    %c0_17 = arith.constant 0 : index
    %50 = vector.load %arg4[%c0_16, %c0_17] : memref<512x8xf32, #tpu.memory_space<vmem>>, vector<512x8xf32>
    tpu.vector_store %arg4[%c0_16, %c0_17], %49 {strides = array<i32>} : memref<512x8xf32, #tpu.memory_space<vmem>>, vector<512x8xf32>,
    return
  }
}

</mosaic_0001>

<llo_original>
// kernel: tpu_custom_call.1
$region0: #{tpu_custom_call.1}
  #allocation0 [shape = 'u32[]', space=smem, size = 0x4, offset = 0x4, fixed_abs, tag = 'smem constant byte address 0x4 - core index']
  #allocation1 [shape = 'u32[72,128]{1,0:T(1,128)}', space=vmem, size = 0x9000, scoped, tag = 'internal scratch']
  %s0 = inlined_call_operand.vmem [shape: f32[2,18,18,4], index: 0, kind: input, shape index: {}]
  %s1 = inlined_call_operand.vmem [shape: f32[36,8], index: 1, kind: input, shape index: {}]
  %s2 = inlined_call_operand.vmem [shape: f32[1,8], index: 2, kind: input, shape index: {}]
  %s3 = inlined_call_operand.vmem [shape: f32[1,8], index: 3, kind: input, shape index: {}]
  %s4 = inlined_call_operand.vmem [shape: f32[512,8], index: 4, kind: output, shape index: {}]
  %s5 = sld [smem:[#allocation0]]
  $region26: #{tpu_custom_call.1} parent=0
    _
  %s7 = ssub.s32 1, %s5
  %s8 = scalar_select 0, %s7, %s5
  // Predicated region
  $region2: #{tpu_custom_call.1} parent=0 // pred_check
    _
  $region3: #{tpu_custom_call.1} parent=0 // pred_check_branch
    %10 = sbr.rel (0) target = $region5
  $region4: #{tpu_custom_call.1} parent=0 // pred_region
    _
  $region5: #{tpu_custom_call.1} parent=0 // pred_fallthru
    _
  // Predicated region
  $region6: #{tpu_custom_call.1} parent=0 // pred_check
    _
  $region7: #{tpu_custom_call.1} parent=0 // pred_check_branch
    %12 = sbr.rel (0) target = $region9
  $region8: #{tpu_custom_call.1} parent=0 // pred_region
    _
  $region9: #{tpu_custom_call.1} parent=0 // pred_fallthru
    _
  // Predicated region
  $region10: #{tpu_custom_call.1} parent=0 // pred_check
    _
  $region11: #{tpu_custom_call.1} parent=0 // pred_check_branch
    %14 = sbr.rel (0) target = $region13
  $region12: #{tpu_custom_call.1} parent=0 // pred_region
    _
  $region13: #{tpu_custom_call.1} parent=0 // pred_fallthru
    _
  // Predicated region
  $region14: #{tpu_custom_call.1} parent=0 // pred_check
    _
  $region15: #{tpu_custom_call.1} parent=0 // pred_check_branch
    %16 = sbr.rel (0) target = $region17
  $region16: #{tpu_custom_call.1} parent=0 // pred_region
    _
  $region17: #{tpu_custom_call.1} parent=0 // pred_fallthru
    _
  %v17 = vld [vmem:[%s0] sm:$0xff]
  %v18 = vld [vmem:[%s0 + $0x8] sm:$0xff]
  %v19 = vld [vmem:[%s0 + $0x10] sm:$0x3]
  %v20 = vld [vmem:[%s0 + $0x18] sm:$0xff]
  %v21 = vld [vmem:[%s0 + $0x20] sm:$0xff]
  %v22 = vld [vmem:[%s0 + $0x28] sm:$0x3]
  %v23 = vld [vmem:[%s0 + $0x30] sm:$0xff]
  %v24 = vld [vmem:[%s0 + $0x38] sm:$0xff]
  %v25 = vld [vmem:[%s0 + $0x40] sm:$0x3]
  %v26 = vld [vmem:[%s0 + $0x48] sm:$0xff]
  %v27 = vld [vmem:[%s0 + $0x50] sm:$0xff]
  %v28 = vld [vmem:[%s0 + $0x58] sm:$0x3]
  %v29 = vld [vmem:[%s0 + $0x60] sm:$0xff]
  %v30 = vld [vmem:[%s0 + $0x68] sm:$0xff]
  %v31 = vld [vmem:[%s0 + $0x70] sm:$0x3]
  %v32 = vld [vmem:[%s0 + $0x78] sm:$0xff]
  %v33 = vld [vmem:[%s0 + $0x80] sm:$0xff]
  %v34 = vld [vmem:[%s0 + $0x88] sm:$0x3]
  %v35 = vld [vmem:[%s0 + $0x90] sm:$0xff]
  %v36 = vld [vmem:[%s0 + $0x98] sm:$0xff]
  %v37 = vld [vmem:[%s0 + $0xa0] sm:$0x3]
  %v38 = vld [vmem:[%s0 + $0xa8] sm:$0xff]
  %v39 = vld [vmem:[%s0 + $0xb0] sm:$0xff]
  %v40 = vld [vmem:[%s0 + $0xb8] sm:$0x3]
  %v41 = vld [vmem:[%s0 + $0xc0] sm:$0xff]
  %v42 = vld [vmem:[%s0 + $0xc8] sm:$0xff]
  %v43 = vld [vmem:[%s0 + $0xd0] sm:$0x3]
  %v44 = vld [vmem:[%s0 + $0xd8] sm:$0xff]
  %v45 = vld [vmem:[%s0 + $0xe0] sm:$0xff]
  %v46 = vld [vmem:[%s0 + $0xe8] sm:$0x3]
  %v47 = vld [vmem:[%s0 + $0xf0] sm:$0xff]
  %v48 = vld [vmem:[%s0 + $0xf8] sm:$0xff]
  %v49 = vld [vmem:[%s0 + $0x100] sm:$0x3]
  %v50 = vld [vmem:[%s0 + $0x108] sm:$0xff]
  %v51 = vld [vmem:[%s0 + $0x110] sm:$0xff]
  %v52 = vld [vmem:[%s0 + $0x118] sm:$0x3]
  %v53 = vld [vmem:[%s0 + $0x120] sm:$0xff]
  %v54 = vld [vmem:[%s0 + $0x128] sm:$0xff]
  %v55 = vld [vmem:[%s0 + $0x130] sm:$0x3]
  %v56 = vld [vmem:[%s0 + $0x138] sm:$0xff]
  %v57 = vld [vmem:[%s0 + $0x140] sm:$0xff]
  %v58 = vld [vmem:[%s0 + $0x148] sm:$0x3]
  %v59 = vld [vmem:[%s0 + $0x150] sm:$0xff]
  %v60 = vld [vmem:[%s0 + $0x158] sm:$0xff]
  %v61 = vld [vmem:[%s0 + $0x160] sm:$0x3]
  %v62 = vld [vmem:[%s0 + $0x168] sm:$0xff]
  %v63 = vld [vmem:[%s0 + $0x170] sm:$0xff]
  %v64 = vld [vmem:[%s0 + $0x178] sm:$0x3]
  %v65 = vld [vmem:[%s0 + $0x180] sm:$0xff]
  %v66 = vld [vmem:[%s0 + $0x188] sm:$0xff]
  %v67 = vld [vmem:[%s0 + $0x190] sm:$0x3]
  %v68 = vld [vmem:[%s0 + $0x198] sm:$0xff]
  %v69 = vld [vmem:[%s0 + $0x1a0] sm:$0xff]
  %v70 = vld [vmem:[%s0 + $0x1a8] sm:$0x3]
  %v71 = vld [vmem:[%s0 + $0x1b0] sm:$0xff]
  %v72 = vld [vmem:[%s0 + $0x1b8] sm:$0xff]
  %v73 = vld [vmem:[%s0 + $0x1c0] sm:$0x3]
  %v74 = vld [vmem:[%s0 + $0x1c8] sm:$0xff]
  %v75 = vld [vmem:[%s0 + $0x1d0] sm:$0xff]
  %v76 = vld [vmem:[%s0 + $0x1d8] sm:$0x3]
  %v77 = vld [vmem:[%s0 + $0x1e0] sm:$0xff]
  %v78 = vld [vmem:[%s0 + $0x1e8] sm:$0xff]
  %v79 = vld [vmem:[%s0 + $0x1f0] sm:$0x3]
  %v80 = vld [vmem:[%s0 + $0x1f8] sm:$0xff]
  %v81 = vld [vmem:[%s0 + $0x200] sm:$0xff]
  %v82 = vld [vmem:[%s0 + $0x208] sm:$0x3]
  %v83 = vld [vmem:[%s0 + $0x210] sm:$0xff]
  %v84 = vld [vmem:[%s0 + $0x218] sm:$0xff]
  %v85 = vld [vmem:[%s0 + $0x220] sm:$0x3]
  %v86 = vld [vmem:[%s0 + $0x228] sm:$0xff]
  %v87 = vld [vmem:[%s0 + $0x230] sm:$0xff]
  %v88 = vld [vmem:[%s0 + $0x238] sm:$0x3]
  %v89 = vld [vmem:[%s0 + $0x240] sm:$0xff]
  %v90 = vld [vmem:[%s0 + $0x248] sm:$0xff]
  %v91 = vld [vmem:[%s0 + $0x250] sm:$0x3]
  %v92 = vld [vmem:[%s0 + $0x258] sm:$0xff]
  %v93 = vld [vmem:[%s0 + $0x260] sm:$0xff]
  %v94 = vld [vmem:[%s0 + $0x268] sm:$0x3]
  %v95 = vld [vmem:[%s0 + $0x270] sm:$0xff]
  %v96 = vld [vmem:[%s0 + $0x278] sm:$0xff]
  %v97 = vld [vmem:[%s0 + $0x280] sm:$0x3]
  %v98 = vld [vmem:[%s0 + $0x288] sm:$0xff]
  %v99 = vld [vmem:[%s0 + $0x290] sm:$0xff]
  %v100 = vld [vmem:[%s0 + $0x298] sm:$0x3]
  %v101 = vld [vmem:[%s0 + $0x2a0] sm:$0xff]
  %v102 = vld [vmem:[%s0 + $0x2a8] sm:$0xff]
  %v103 = vld [vmem:[%s0 + $0x2b0] sm:$0x3]
  %v104 = vld [vmem:[%s0 + $0x2b8] sm:$0xff]
  %v105 = vld [vmem:[%s0 + $0x2c0] sm:$0xff]
  %v106 = vld [vmem:[%s0 + $0x2c8] sm:$0x3]
  %v107 = vld [vmem:[%s0 + $0x2d0] sm:$0xff]
  %v108 = vld [vmem:[%s0 + $0x2d8] sm:$0xff]
  %v109 = vld [vmem:[%s0 + $0x2e0] sm:$0x3]
  %v110 = vld [vmem:[%s0 + $0x2e8] sm:$0xff]
  %v111 = vld [vmem:[%s0 + $0x2f0] sm:$0xff]
  %v112 = vld [vmem:[%s0 + $0x2f8] sm:$0x3]
  %v113 = vld [vmem:[%s0 + $0x300] sm:$0xff]
  %v114 = vld [vmem:[%s0 + $0x308] sm:$0xff]
  %v115 = vld [vmem:[%s0 + $0x310] sm:$0x3]
  %v116 = vld [vmem:[%s0 + $0x318] sm:$0xff]
  %v117 = vld [vmem:[%s0 + $0x320] sm:$0xff]
  %v118 = vld [vmem:[%s0 + $0x328] sm:$0x3]
  %v119 = vld [vmem:[%s0 + $0x330] sm:$0xff]
  %v120 = vld [vmem:[%s0 + $0x338] sm:$0xff]
  %v121 = vld [vmem:[%s0 + $0x340] sm:$0x3]
  %v122 = vld [vmem:[%s0 + $0x348] sm:$0xff]
  %v123 = vld [vmem:[%s0 + $0x350] sm:$0xff]
  %v124 = vld [vmem:[%s0 + $0x358] sm:$0x3]
  %vm221 = vcmask 1046528
  %v222 = vrot.slane %v17, 1
  %v223 = vrot.slane %v18, 1
  %v224 = vsel %vm221, %v222, %v223
  %v225 = vrot.slane %v19, 1
  %v226 = vsel %vm221, %v223, %v225
  %v227 = vrot.slane %v20, 1
  %v228 = vrot.slane %v21, 1
  %v229 = vsel %vm221, %v227, %v228
  %v230 = vrot.slane %v22, 1
  %v231 = vsel %vm221, %v228, %v230
  %v232 = vrot.slane %v23, 1
  %v233 = vrot.slane %v24, 1
  %v234 = vsel %vm221, %v232, %v233
  %v235 = vrot.slane %v25, 1
  %v236 = vsel %vm221, %v233, %v235
  %v237 = vrot.slane %v26, 1
  %v238 = vrot.slane %v27, 1
  %v239 = vsel %vm221, %v237, %v238
  %v240 = vrot.slane %v28, 1
  %v241 = vsel %vm221, %v238, %v240
  %v242 = vrot.slane %v29, 1
  %v243 = vrot.slane %v30, 1
  %v244 = vsel %vm221, %v242, %v243
  %v245 = vrot.slane %v31, 1
  %v246 = vsel %vm221, %v243, %v245
  %v247 = vrot.slane %v32, 1
  %v248 = vrot.slane %v33, 1
  %v249 = vsel %vm221, %v247, %v248
  %v250 = vrot.slane %v34, 1
  %v251 = vsel %vm221, %v248, %v250
  %v252 = vrot.slane %v35, 1
  %v253 = vrot.slane %v36, 1
  %v254 = vsel %vm221, %v252, %v253
  %v255 = vrot.slane %v37, 1
  %v256 = vsel %vm221, %v253, %v255
  %v257 = vrot.slane %v38, 1
  %v258 = vrot.slane %v39, 1
  %v259 = vsel %vm221, %v257, %v258
  %v260 = vrot.slane %v40, 1
  %v261 = vsel %vm221, %v258, %v260
  %v262 = vrot.slane %v41, 1
  %v263 = vrot.slane %v42, 1
  %v264 = vsel %vm221, %v262, %v263
  %v265 = vrot.slane %v43, 1
  %v266 = vsel %vm221, %v263, %v265
  %v267 = vrot.slane %v44, 1
  %v268 = vrot.slane %v45, 1
  %v269 = vsel %vm221, %v267, %v268
  %v270 = vrot.slane %v46, 1
  %v271 = vsel %vm221, %v268, %v270
  %v272 = vrot.slane %v47, 1
  %v273 = vrot.slane %v48, 1
  %v274 = vsel %vm221, %v272, %v273
  %v275 = vrot.slane %v49, 1
  %v276 = vsel %vm221, %v273, %v275
  %v277 = vrot.slane %v50, 1
  %v278 = vrot.slane %v51, 1
  %v279 = vsel %vm221, %v277, %v278
  %v280 = vrot.slane %v52, 1
  %v281 = vsel %vm221, %v278, %v280
  %v282 = vrot.slane %v53, 1
  %v283 = vrot.slane %v54, 1
  %v284 = vsel %vm221, %v282, %v283
  %v285 = vrot.slane %v55, 1
  %v286 = vsel %vm221, %v283, %v285
  %v287 = vrot.slane %v56, 1
  %v288 = vrot.slane %v57, 1
  %v289 = vsel %vm221, %v287, %v288
  %v290 = vrot.slane %v58, 1
  %v291 = vsel %vm221, %v288, %v290
  %v292 = vrot.slane %v59, 1
  %v293 = vrot.slane %v60, 1
  %v294 = vsel %vm221, %v292, %v293
  %v295 = vrot.slane %v61, 1
  %v296 = vsel %vm221, %v293, %v295
  %v297 = vrot.slane %v62, 1
  %v298 = vrot.slane %v63, 1
  %v299 = vsel %vm221, %v297, %v298
  %v300 = vrot.slane %v64, 1
  %v301 = vsel %vm221, %v298, %v300
  %v302 = vrot.slane %v71, 1
  %v303 = vrot.slane %v72, 1
  %v304 = vsel %vm221, %v302, %v303
  %v305 = vrot.slane %v73, 1
  %v306 = vsel %vm221, %v303, %v305
  %v307 = vrot.slane %v74, 1
  %v308 = vrot.slane %v75, 1
  %v309 = vsel %vm221, %v307, %v308
  %v310 = vrot.slane %v76, 1
  %v311 = vsel %vm221, %v308, %v310
  %v312 = vrot.slane %v77, 1
  %v313 = vrot.slane %v78, 1
  %v314 = vsel %vm221, %v312, %v313
  %v315 = vrot.slane %v79, 1
  %v316 = vsel %vm221, %v313, %v315
  %v317 = vrot.slane %v80, 1
  %v318 = vrot.slane %v81, 1
  %v319 = vsel %vm221, %v317, %v318
  %v320 = vrot.slane %v82, 1
  %v321 = vsel %vm221, %v318, %v320
  %v322 = vrot.slane %v83, 1
  %v323 = vrot.slane %v84, 1
  %v324 = vsel %vm221, %v322, %v323
  %v325 = vrot.slane %v85, 1
  %v326 = vsel %vm221, %v323, %v325
  %v327 = vrot.slane %v86, 1
  %v328 = vrot.slane %v87, 1
  %v329 = vsel %vm221, %v327, %v328
  %v330 = vrot.slane %v88, 1
  %v331 = vsel %vm221, %v328, %v330
  %v332 = vrot.slane %v89, 1
  %v333 = vrot.slane %v90, 1
  %v334 = vsel %vm221, %v332, %v333
  %v335 = vrot.slane %v91, 1
  %v336 = vsel %vm221, %v333, %v335
  %v337 = vrot.slane %v92, 1
  %v338 = vrot.slane %v93, 1
  %v339 = vsel %vm221, %v337, %v338
  %v340 = vrot.slane %v94, 1
  %v341 = vsel %vm221, %v338, %v340
  %v342 = vrot.slane %v95, 1
  %v343 = vrot.slane %v96, 1
  %v344 = vsel %vm221, %v342, %v343
  %v345 = vrot.slane %v97, 1
  %v346 = vsel %vm221, %v343, %v345
  %v347 = vrot.slane %v98, 1
  %v348 = vrot.slane %v99, 1
  %v349 = vsel %vm221, %v347, %v348
  %v350 = vrot.slane %v100, 1
  %v351 = vsel %vm221, %v348, %v350
  %v352 = vrot.slane %v101, 1
  %v353 = vrot.slane %v102, 1
  %v354 = vsel %vm221, %v352, %v353
  %v355 = vrot.slane %v103, 1
  %v356 = vsel %vm221, %v353, %v355
  %v357 = vrot.slane %v104, 1
  %v358 = vrot.slane %v105, 1
  %v359 = vsel %vm221, %v357, %v358
  %v360 = vrot.slane %v106, 1
  %v361 = vsel %vm221, %v358, %v360
  %v362 = vrot.slane %v107, 1
  %v363 = vrot.slane %v108, 1
  %v364 = vsel %vm221, %v362, %v363
  %v365 = vrot.slane %v109, 1
  %v366 = vsel %vm221, %v363, %v365
  %v367 = vrot.slane %v110, 1
  %v368 = vrot.slane %v111, 1
  %v369 = vsel %vm221, %v367, %v368
  %v370 = vrot.slane %v112, 1
  %v371 = vsel %vm221, %v368, %v370
  %v372 = vrot.slane %v113, 1
  %v373 = vrot.slane %v114, 1
  %v374 = vsel %vm221, %v372, %v373
  %v375 = vrot.slane %v115, 1
  %v376 = vsel %vm221, %v373, %v375
  %v377 = vrot.slane %v116, 1
  %v378 = vrot.slane %v117, 1
  %v379 = vsel %vm221, %v377, %v378
  %v380 = vrot.slane %v118, 1
  %v381 = vsel %vm221, %v378, %v380
  %vm382 = vcmask 1045504
  %v383 = vrot.slane %v17, 2
  %v384 = vrot.slane %v18, 2
  %v385 = vsel %vm382, %v383, %v384
  %v386 = vrot.slane %v19, 2
  %v387 = vsel %vm382, %v384, %v386
  %v388 = vrot.slane %v20, 2
  %v389 = vrot.slane %v21, 2
  %v390 = vsel %vm382, %v388, %v389
  %v391 = vrot.slane %v22, 2
  %v392 = vsel %vm382, %v389, %v391
  %v393 = vrot.slane %v23, 2
  %v394 = vrot.slane %v24, 2
  %v395 = vsel %vm382, %v393, %v394
  %v396 = vrot.slane %v25, 2
  %v397 = vsel %vm382, %v394, %v396
  %v398 = vrot.slane %v26, 2
  %v399 = vrot.slane %v27, 2
  %v400 = vsel %vm382, %v398, %v399
  %v401 = vrot.slane %v28, 2
  %v402 = vsel %vm382, %v399, %v401
  %v403 = vrot.slane %v29, 2
  %v404 = vrot.slane %v30, 2
  %v405 = vsel %vm382, %v403, %v404
  %v406 = vrot.slane %v31, 2
  %v407 = vsel %vm382, %v404, %v406
  %v408 = vrot.slane %v32, 2
  %v409 = vrot.slane %v33, 2
  %v410 = vsel %vm382, %v408, %v409
  %v411 = vrot.slane %v34, 2
  %v412 = vsel %vm382, %v409, %v411
  %v413 = vrot.slane %v35, 2
  %v414 = vrot.slane %v36, 2
  %v415 = vsel %vm382, %v413, %v414
  %v416 = vrot.slane %v37, 2
  %v417 = vsel %vm382, %v414, %v416
  %v418 = vrot.slane %v38, 2
  %v419 = vrot.slane %v39, 2
  %v420 = vsel %vm382, %v418, %v419
  %v421 = vrot.slane %v40, 2
  %v422 = vsel %vm382, %v419, %v421
  %v423 = vrot.slane %v41, 2
  %v424 = vrot.slane %v42, 2
  %v425 = vsel %vm382, %v423, %v424
  %v426 = vrot.slane %v43, 2
  %v427 = vsel %vm382, %v424, %v426
  %v428 = vrot.slane %v44, 2
  %v429 = vrot.slane %v45, 2
  %v430 = vsel %vm382, %v428, %v429
  %v431 = vrot.slane %v46, 2
  %v432 = vsel %vm382, %v429, %v431
  %v433 = vrot.slane %v47, 2
  %v434 = vrot.slane %v48, 2
  %v435 = vsel %vm382, %v433, %v434
  %v436 = vrot.slane %v49, 2
  %v437 = vsel %vm382, %v434, %v436
  %v438 = vrot.slane %v50, 2
  %v439 = vrot.slane %v51, 2
  %v440 = vsel %vm382, %v438, %v439
  %v441 = vrot.slane %v52, 2
  %v442 = vsel %vm382, %v439, %v441
  %v443 = vrot.slane %v53, 2
  %v444 = vrot.slane %v54, 2
  %v445 = vsel %vm382, %v443, %v444
  %v446 = vrot.slane %v55, 2
  %v447 = vsel %vm382, %v444, %v446
  %v448 = vrot.slane %v56, 2
  %v449 = vrot.slane %v57, 2
  %v450 = vsel %vm382, %v448, %v449
  %v451 = vrot.slane %v58, 2
  %v452 = vsel %vm382, %v449, %v451
  %v453 = vrot.slane %v59, 2
  %v454 = vrot.slane %v60, 2
  %v455 = vsel %vm382, %v453, %v454
  %v456 = vrot.slane %v61, 2
  %v457 = vsel %vm382, %v454, %v456
  %v458 = vrot.slane %v62, 2
  %v459 = vrot.slane %v63, 2
  %v460 = vsel %vm382, %v458, %v459
  %v461 = vrot.slane %v64, 2
  %v462 = vsel %vm382, %v459, %v461
  %v463 = vrot.slane %v71, 2
  %v464 = vrot.slane %v72, 2
  %v465 = vsel %vm382, %v463, %v464
  %v466 = vrot.slane %v73, 2
  %v467 = vsel %vm382, %v464, %v466
  %v468 = vrot.slane %v74, 2
  %v469 = vrot.slane %v75, 2
  %v470 = vsel %vm382, %v468, %v469
  %v471 = vrot.slane %v76, 2
  %v472 = vsel %vm382, %v469, %v471
  %v473 = vrot.slane %v77, 2
  %v474 = vrot.slane %v78, 2
  %v475 = vsel %vm382, %v473, %v474
  %v476 = vrot.slane %v79, 2
  %v477 = vsel %vm382, %v474, %v476
  %v478 = vrot.slane %v80, 2
  %v479 = vrot.slane %v81, 2
  %v480 = vsel %vm382, %v478, %v479
  %v481 = vrot.slane %v82, 2
  %v482 = vsel %vm382, %v479, %v481
  %v483 = vrot.slane %v83, 2
  %v484 = vrot.slane %v84, 2
  %v485 = vsel %vm382, %v483, %v484
  %v486 = vrot.slane %v85, 2
  %v487 = vsel %vm382, %v484, %v486
  %v488 = vrot.slane %v86, 2
  %v489 = vrot.slane %v87, 2
  %v490 = vsel %vm382, %v488, %v489
  %v491 = vrot.slane %v88, 2
  %v492 = vsel %vm382, %v489, %v491
  %v493 = vrot.slane %v89, 2
  %v494 = vrot.slane %v90, 2
  %v495 = vsel %vm382, %v493, %v494
  %v496 = vrot.slane %v91, 2
  %v497 = vsel %vm382, %v494, %v496
  %v498 = vrot.slane %v92, 2
  %v499 = vrot.slane %v93, 2
  %v500 = vsel %vm382, %v498, %v499
  %v501 = vrot.slane %v94, 2
  %v502 = vsel %vm382, %v499, %v501
  %v503 = vrot.slane %v95, 2
  %v504 = vrot.slane %v96, 2
  %v505 = vsel %vm382, %v503, %v504
  %v506 = vrot.slane %v97, 2
  %v507 = vsel %vm382, %v504, %v506
  %v508 = vrot.slane %v98, 2
  %v509 = vrot.slane %v99, 2
  %v510 = vsel %vm382, %v508, %v509
  %v511 = vrot.slane %v100, 2
  %v512 = vsel %vm382, %v509, %v511
  %v513 = vrot.slane %v101, 2
  %v514 = vrot.slane %v102, 2
  %v515 = vsel %vm382, %v513, %v514
  %v516 = vrot.slane %v103, 2
  %v517 = vsel %vm382, %v514, %v516
  %v518 = vrot.slane %v104, 2
  %v519 = vrot.slane %v105, 2
  %v520 = vsel %vm382, %v518, %v519
  %v521 = vrot.slane %v106, 2
  %v522 = vsel %vm382, %v519, %v521
  %v523 = vrot.slane %v107, 2
  %v524 = vrot.slane %v108, 2
  %v525 = vsel %vm382, %v523, %v524
  %v526 = vrot.slane %v109, 2
  %v527 = vsel %vm382, %v524, %v526
  %v528 = vrot.slane %v110, 2
  %v529 = vrot.slane %v111, 2
  %v530 = vsel %vm382, %v528, %v529
  %v531 = vrot.slane %v112, 2
  %v532 = vsel %vm382, %v529, %v531
  %v533 = vrot.slane %v113, 2
  %v534 = vrot.slane %v114, 2
  %v535 = vsel %vm382, %v533, %v534
  %v536 = vrot.slane %v115, 2
  %v537 = vsel %vm382, %v534, %v536
  %v538 = vrot.slane %v116, 2
  %v539 = vrot.slane %v117, 2
  %v540 = vsel %vm382, %v538, %v539
  %v541 = vrot.slane %v118, 2
  %v542 = vsel %vm382, %v539, %v541
  %v549 = vrot.slane %v65, 1
  %v550 = vrot.slane %v66, 1
  %v551 = vsel %vm221, %v549, %v550
  %v552 = vrot.slane %v67, 1
  %v553 = vsel %vm221, %v550, %v552
  %v554 = vrot.slane %v119, 1
  %v555 = vrot.slane %v120, 1
  %v556 = vsel %vm221, %v554, %v555
  %v557 = vrot.slane %v121, 1
  %v558 = vsel %vm221, %v555, %v557
  %v559 = vrot.slane %v65, 2
  %v560 = vrot.slane %v66, 2
  %v561 = vsel %vm382, %v559, %v560
  %v562 = vrot.slane %v67, 2
  %v563 = vsel %vm382, %v560, %v562
  %v564 = vrot.slane %v119, 2
  %v565 = vrot.slane %v120, 2
  %v566 = vsel %vm382, %v564, %v565
  %v567 = vrot.slane %v121, 2
  %v568 = vsel %vm382, %v565, %v567
  %v575 = vrot.slane %v68, 1
  %v576 = vrot.slane %v69, 1
  %v577 = vsel %vm221, %v575, %v576
  %v578 = vrot.slane %v70, 1
  %v579 = vsel %vm221, %v576, %v578
  %v580 = vrot.slane %v122, 1
  %v581 = vrot.slane %v123, 1
  %v582 = vsel %vm221, %v580, %v581
  %v583 = vrot.slane %v124, 1
  %v584 = vsel %vm221, %v581, %v583
  %v585 = vrot.slane %v68, 2
  %v586 = vrot.slane %v69, 2
  %v587 = vsel %vm382, %v585, %v586
  %v588 = vrot.slane %v70, 2
  %v589 = vsel %vm382, %v586, %v588
  %v590 = vrot.slane %v122, 2
  %v591 = vrot.slane %v123, 2
  %v592 = vsel %vm382, %v590, %v591
  %v593 = vrot.slane %v124, 2
  %v594 = vsel %vm382, %v591, %v593
  %595 = vrot.lane.b32.xlu0 %v224, 4
  %v596 = vpop.permute.xlu0 %595
  %597 = vrot.lane.b32.xlu0 %v226, 4
  %v598 = vpop.permute.xlu0 %597
  %599 = vrot.lane.b32.xlu0 %v229, 4
  %v600 = vpop.permute.xlu0 %599
  %601 = vrot.lane.b32.xlu0 %v231, 4
  %v602 = vpop.permute.xlu0 %601
  %603 = vrot.lane.b32.xlu0 %v234, 4
  %v604 = vpop.permute.xlu0 %603
  %605 = vrot.lane.b32.xlu0 %v236, 4
  %v606 = vpop.permute.xlu0 %605
  %607 = vrot.lane.b32.xlu0 %v239, 4
  %v608 = vpop.permute.xlu0 %607
  %609 = vrot.lane.b32.xlu0 %v241, 4
  %v610 = vpop.permute.xlu0 %609
  %611 = vrot.lane.b32.xlu0 %v244, 4
  %v612 = vpop.permute.xlu0 %611
  %613 = vrot.lane.b32.xlu0 %v246, 4
  %v614 = vpop.permute.xlu0 %613
  %615 = vrot.lane.b32.xlu0 %v249, 4
  %v616 = vpop.permute.xlu0 %615
  %617 = vrot.lane.b32.xlu0 %v251, 4
  %v618 = vpop.permute.xlu0 %617
  %619 = vrot.lane.b32.xlu0 %v254, 4
  %v620 = vpop.permute.xlu0 %619
  %621 = vrot.lane.b32.xlu0 %v256, 4
  %v622 = vpop.permute.xlu0 %621
  %623 = vrot.lane.b32.xlu0 %v259, 4
  %v624 = vpop.permute.xlu0 %623
  %625 = vrot.lane.b32.xlu0 %v261, 4
  %v626 = vpop.permute.xlu0 %625
  %627 = vrot.lane.b32.xlu0 %v264, 4
  %v628 = vpop.permute.xlu0 %627
  %629 = vrot.lane.b32.xlu0 %v266, 4
  %v630 = vpop.permute.xlu0 %629
  %631 = vrot.lane.b32.xlu0 %v269, 4
  %v632 = vpop.permute.xlu0 %631
  %633 = vrot.lane.b32.xlu0 %v271, 4
  %v634 = vpop.permute.xlu0 %633
  %635 = vrot.lane.b32.xlu0 %v274, 4
  %v636 = vpop.permute.xlu0 %635
  %637 = vrot.lane.b32.xlu0 %v276, 4
  %v638 = vpop.permute.xlu0 %637
  %639 = vrot.lane.b32.xlu0 %v279, 4
  %v640 = vpop.permute.xlu0 %639
  %641 = vrot.lane.b32.xlu0 %v281, 4
  %v642 = vpop.permute.xlu0 %641
  %643 = vrot.lane.b32.xlu0 %v284, 4
  %v644 = vpop.permute.xlu0 %643
  %645 = vrot.lane.b32.xlu0 %v286, 4
  %v646 = vpop.permute.xlu0 %645
  %647 = vrot.lane.b32.xlu0 %v289, 4
  %v648 = vpop.permute.xlu0 %647
  %649 = vrot.lane.b32.xlu0 %v291, 4
  %v650 = vpop.permute.xlu0 %649
  %651 = vrot.lane.b32.xlu0 %v294, 4
  %v652 = vpop.permute.xlu0 %651
  %653 = vrot.lane.b32.xlu0 %v296, 4
  %v654 = vpop.permute.xlu0 %653
  %655 = vrot.lane.b32.xlu0 %v299, 4
  %v656 = vpop.permute.xlu0 %655
  %657 = vrot.lane.b32.xlu0 %v301, 4
  %v658 = vpop.permute.xlu0 %657
  %659 = vrot.lane.b32.xlu0 %v304, 4
  %v660 = vpop.permute.xlu0 %659
  %661 = vrot.lane.b32.xlu0 %v306, 4
  %v662 = vpop.permute.xlu0 %661
  %663 = vrot.lane.b32.xlu0 %v309, 4
  %v664 = vpop.permute.xlu0 %663
  %665 = vrot.lane.b32.xlu0 %v311, 4
  %v666 = vpop.permute.xlu0 %665
  %667 = vrot.lane.b32.xlu0 %v314, 4
  %v668 = vpop.permute.xlu0 %667
  %669 = vrot.lane.b32.xlu0 %v316, 4
  %v670 = vpop.permute.xlu0 %669
  %671 = vrot.lane.b32.xlu0 %v319, 4
  %v672 = vpop.permute.xlu0 %671
  %673 = vrot.lane.b32.xlu0 %v321, 4
  %v674 = vpop.permute.xlu0 %673
  %675 = vrot.lane.b32.xlu0 %v324, 4
  %v676 = vpop.permute.xlu0 %675
  %677 = vrot.lane.b32.xlu0 %v326, 4
  %v678 = vpop.permute.xlu0 %677
  %679 = vrot.lane.b32.xlu0 %v329, 4
  %v680 = vpop.permute.xlu0 %679
  %681 = vrot.lane.b32.xlu0 %v331, 4
  %v682 = vpop.permute.xlu0 %681
  %683 = vrot.lane.b32.xlu0 %v334, 4
  %v684 = vpop.permute.xlu0 %683
  %685 = vrot.lane.b32.xlu0 %v336, 4
  %v686 = vpop.permute.xlu0 %685
  %687 = vrot.lane.b32.xlu0 %v339, 4
  %v688 = vpop.permute.xlu0 %687
  %689 = vrot.lane.b32.xlu0 %v341, 4
  %v690 = vpop.permute.xlu0 %689
  %691 = vrot.lane.b32.xlu0 %v344, 4
  %v692 = vpop.permute.xlu0 %691
  %693 = vrot.lane.b32.xlu0 %v346, 4
  %v694 = vpop.permute.xlu0 %693
  %695 = vrot.lane.b32.xlu0 %v349, 4
  %v696 = vpop.permute.xlu0 %695
  %697 = vrot.lane.b32.xlu0 %v351, 4
  %v698 = vpop.permute.xlu0 %697
  %699 = vrot.lane.b32.xlu0 %v354, 4
  %v700 = vpop.permute.xlu0 %699
  %701 = vrot.lane.b32.xlu0 %v356, 4
  %v702 = vpop.permute.xlu0 %701
  %703 = vrot.lane.b32.xlu0 %v359, 4
  %v704 = vpop.permute.xlu0 %703
  %705 = vrot.lane.b32.xlu0 %v361, 4
  %v706 = vpop.permute.xlu0 %705
  %707 = vrot.lane.b32.xlu0 %v364, 4
  %v708 = vpop.permute.xlu0 %707
  %709 = vrot.lane.b32.xlu0 %v366, 4
  %v710 = vpop.permute.xlu0 %709
  %711 = vrot.lane.b32.xlu0 %v369, 4
  %v712 = vpop.permute.xlu0 %711
  %713 = vrot.lane.b32.xlu0 %v371, 4
  %v714 = vpop.permute.xlu0 %713
  %715 = vrot.lane.b32.xlu0 %v374, 4
  %v716 = vpop.permute.xlu0 %715
  %717 = vrot.lane.b32.xlu0 %v376, 4
  %v718 = vpop.permute.xlu0 %717
  %719 = vrot.lane.b32.xlu0 %v379, 4
  %v720 = vpop.permute.xlu0 %719
  %721 = vrot.lane.b32.xlu0 %v381, 4
  %v722 = vpop.permute.xlu0 %721
  %787 = vrot.lane.b32.xlu0 %v385, 8
  %v788 = vpop.permute.xlu0 %787
  %789 = vrot.lane.b32.xlu0 %v387, 8
  %v790 = vpop.permute.xlu0 %789
  %791 = vrot.lane.b32.xlu0 %v390, 8
  %v792 = vpop.permute.xlu0 %791
  %793 = vrot.lane.b32.xlu0 %v392, 8
  %v794 = vpop.permute.xlu0 %793
  %795 = vrot.lane.b32.xlu0 %v395, 8
  %v796 = vpop.permute.xlu0 %795
  %797 = vrot.lane.b32.xlu0 %v397, 8
  %v798 = vpop.permute.xlu0 %797
  %799 = vrot.lane.b32.xlu0 %v400, 8
  %v800 = vpop.permute.xlu0 %799
  %801 = vrot.lane.b32.xlu0 %v402, 8
  %v802 = vpop.permute.xlu0 %801
  %803 = vrot.lane.b32.xlu0 %v405, 8
  %v804 = vpop.permute.xlu0 %803
  %805 = vrot.lane.b32.xlu0 %v407, 8
  %v806 = vpop.permute.xlu0 %805
  %807 = vrot.lane.b32.xlu0 %v410, 8
  %v808 = vpop.permute.xlu0 %807
  %809 = vrot.lane.b32.xlu0 %v412, 8
  %v810 = vpop.permute.xlu0 %809
  %811 = vrot.lane.b32.xlu0 %v415, 8
  %v812 = vpop.permute.xlu0 %811
  %813 = vrot.lane.b32.xlu0 %v417, 8
  %v814 = vpop.permute.xlu0 %813
  %815 = vrot.lane.b32.xlu0 %v420, 8
  %v816 = vpop.permute.xlu0 %815
  %817 = vrot.lane.b32.xlu0 %v422, 8
  %v818 = vpop.permute.xlu0 %817
  %819 = vrot.lane.b32.xlu0 %v425, 8
  %v820 = vpop.permute.xlu0 %819
  %821 = vrot.lane.b32.xlu0 %v427, 8
  %v822 = vpop.permute.xlu0 %821
  %823 = vrot.lane.b32.xlu0 %v430, 8
  %v824 = vpop.permute.xlu0 %823
  %825 = vrot.lane.b32.xlu0 %v432, 8
  %v826 = vpop.permute.xlu0 %825
  %827 = vrot.lane.b32.xlu0 %v435, 8
  %v828 = vpop.permute.xlu0 %827
  %829 = vrot.lane.b32.xlu0 %v437, 8
  %v830 = vpop.permute.xlu0 %829
  %831 = vrot.lane.b32.xlu0 %v440, 8
  %v832 = vpop.permute.xlu0 %831
  %833 = vrot.lane.b32.xlu0 %v442, 8
  %v834 = vpop.permute.xlu0 %833
  %835 = vrot.lane.b32.xlu0 %v445, 8
  %v836 = vpop.permute.xlu0 %835
  %837 = vrot.lane.b32.xlu0 %v447, 8
  %v838 = vpop.permute.xlu0 %837
  %839 = vrot.lane.b32.xlu0 %v450, 8
  %v840 = vpop.permute.xlu0 %839
  %841 = vrot.lane.b32.xlu0 %v452, 8
  %v842 = vpop.permute.xlu0 %841
  %843 = vrot.lane.b32.xlu0 %v455, 8
  %v844 = vpop.permute.xlu0 %843
  %845 = vrot.lane.b32.xlu0 %v457, 8
  %v846 = vpop.permute.xlu0 %845
  %847 = vrot.lane.b32.xlu0 %v460, 8
  %v848 = vpop.permute.xlu0 %847
  %849 = vrot.lane.b32.xlu0 %v462, 8
  %v850 = vpop.permute.xlu0 %849
  %851 = vrot.lane.b32.xlu0 %v465, 8
  %v852 = vpop.permute.xlu0 %851
  %853 = vrot.lane.b32.xlu0 %v467, 8
  %v854 = vpop.permute.xlu0 %853
  %855 = vrot.lane.b32.xlu0 %v470, 8
  %v856 = vpop.permute.xlu0 %855
  %857 = vrot.lane.b32.xlu0 %v472, 8
  %v858 = vpop.permute.xlu0 %857
  %859 = vrot.lane.b32.xlu0 %v475, 8
  %v860 = vpop.permute.xlu0 %859
  %861 = vrot.lane.b32.xlu0 %v477, 8
  %v862 = vpop.permute.xlu0 %861
  %863 = vrot.lane.b32.xlu0 %v480, 8
  %v864 = vpop.permute.xlu0 %863
  %865 = vrot.lane.b32.xlu0 %v482, 8
  %v866 = vpop.permute.xlu0 %865
  %867 = vrot.lane.b32.xlu0 %v485, 8
  %v868 = vpop.permute.xlu0 %867
  %869 = vrot.lane.b32.xlu0 %v487, 8
  %v870 = vpop.permute.xlu0 %869
  %871 = vrot.lane.b32.xlu0 %v490, 8
  %v872 = vpop.permute.xlu0 %871
  %873 = vrot.lane.b32.xlu0 %v492, 8
  %v874 = vpop.permute.xlu0 %873
  %875 = vrot.lane.b32.xlu0 %v495, 8
  %v876 = vpop.permute.xlu0 %875
  %877 = vrot.lane.b32.xlu0 %v497, 8
  %v878 = vpop.permute.xlu0 %877
  %879 = vrot.lane.b32.xlu0 %v500, 8
  %v880 = vpop.permute.xlu0 %879
  %881 = vrot.lane.b32.xlu0 %v502, 8
  %v882 = vpop.permute.xlu0 %881
  %883 = vrot.lane.b32.xlu0 %v505, 8
  %v884 = vpop.permute.xlu0 %883
  %885 = vrot.lane.b32.xlu0 %v507, 8
  %v886 = vpop.permute.xlu0 %885
  %887 = vrot.lane.b32.xlu0 %v510, 8
  %v888 = vpop.permute.xlu0 %887
  %889 = vrot.lane.b32.xlu0 %v512, 8
  %v890 = vpop.permute.xlu0 %889
  %891 = vrot.lane.b32.xlu0 %v515, 8
  %v892 = vpop.permute.xlu0 %891
  %893 = vrot.lane.b32.xlu0 %v517, 8
  %v894 = vpop.permute.xlu0 %893
  %895 = vrot.lane.b32.xlu0 %v520, 8
  %v896 = vpop.permute.xlu0 %895
  %897 = vrot.lane.b32.xlu0 %v522, 8
  %v898 = vpop.permute.xlu0 %897
  %899 = vrot.lane.b32.xlu0 %v525, 8
  %v900 = vpop.permute.xlu0 %899
  %901 = vrot.lane.b32.xlu0 %v527, 8
  %v902 = vpop.permute.xlu0 %901
  %903 = vrot.lane.b32.xlu0 %v530, 8
  %v904 = vpop.permute.xlu0 %903
  %905 = vrot.lane.b32.xlu0 %v532, 8
  %v906 = vpop.permute.xlu0 %905
  %907 = vrot.lane.b32.xlu0 %v535, 8
  %v908 = vpop.permute.xlu0 %907
  %909 = vrot.lane.b32.xlu0 %v537, 8
  %v910 = vpop.permute.xlu0 %909
  %911 = vrot.lane.b32.xlu0 %v540, 8
  %v912 = vpop.permute.xlu0 %911
  %913 = vrot.lane.b32.xlu0 %v542, 8
  %v914 = vpop.permute.xlu0 %913
  %979 = vrot.lane.b32.xlu0 %v20, 12
  %v980 = vpop.permute.xlu0 %979
  %981 = vrot.lane.b32.xlu0 %v21, 12
  %v982 = vpop.permute.xlu0 %981
  %983 = vrot.lane.b32.xlu0 %v23, 12
  %v984 = vpop.permute.xlu0 %983
  %985 = vrot.lane.b32.xlu0 %v24, 12
  %v986 = vpop.permute.xlu0 %985
  %987 = vrot.lane.b32.xlu0 %v26, 12
  %v988 = vpop.permute.xlu0 %987
  %989 = vrot.lane.b32.xlu0 %v27, 12
  %v990 = vpop.permute.xlu0 %989
  %991 = vrot.lane.b32.xlu0 %v29, 12
  %v992 = vpop.permute.xlu0 %991
  %993 = vrot.lane.b32.xlu0 %v30, 12
  %v994 = vpop.permute.xlu0 %993
  %995 = vrot.lane.b32.xlu0 %v32, 12
  %v996 = vpop.permute.xlu0 %995
  %997 = vrot.lane.b32.xlu0 %v33, 12
  %v998 = vpop.permute.xlu0 %997
  %999 = vrot.lane.b32.xlu0 %v35, 12
  %v1000 = vpop.permute.xlu0 %999
  %1001 = vrot.lane.b32.xlu0 %v36, 12
  %v1002 = vpop.permute.xlu0 %1001
  %1003 = vrot.lane.b32.xlu0 %v38, 12
  %v1004 = vpop.permute.xlu0 %1003
  %1005 = vrot.lane.b32.xlu0 %v39, 12
  %v1006 = vpop.permute.xlu0 %1005
  %1007 = vrot.lane.b32.xlu0 %v41, 12
  %v1008 = vpop.permute.xlu0 %1007
  %1009 = vrot.lane.b32.xlu0 %v42, 12
  %v1010 = vpop.permute.xlu0 %1009
  %1011 = vrot.lane.b32.xlu0 %v44, 12
  %v1012 = vpop.permute.xlu0 %1011
  %1013 = vrot.lane.b32.xlu0 %v45, 12
  %v1014 = vpop.permute.xlu0 %1013
  %1015 = vrot.lane.b32.xlu0 %v47, 12
  %v1016 = vpop.permute.xlu0 %1015
  %1017 = vrot.lane.b32.xlu0 %v48, 12
  %v1018 = vpop.permute.xlu0 %1017
  %1019 = vrot.lane.b32.xlu0 %v50, 12
  %v1020 = vpop.permute.xlu0 %1019
  %1021 = vrot.lane.b32.xlu0 %v51, 12
  %v1022 = vpop.permute.xlu0 %1021
  %1023 = vrot.lane.b32.xlu0 %v53, 12
  %v1024 = vpop.permute.xlu0 %1023
  %1025 = vrot.lane.b32.xlu0 %v54, 12
  %v1026 = vpop.permute.xlu0 %1025
  %1027 = vrot.lane.b32.xlu0 %v56, 12
  %v1028 = vpop.permute.xlu0 %1027
  %1029 = vrot.lane.b32.xlu0 %v57, 12
  %v1030 = vpop.permute.xlu0 %1029
  %1031 = vrot.lane.b32.xlu0 %v59, 12
  %v1032 = vpop.permute.xlu0 %1031
  %1033 = vrot.lane.b32.xlu0 %v60, 12
  %v1034 = vpop.permute.xlu0 %1033
  %1035 = vrot.lane.b32.xlu0 %v62, 12
  %v1036 = vpop.permute.xlu0 %1035
  %1037 = vrot.lane.b32.xlu0 %v63, 12
  %v1038 = vpop.permute.xlu0 %1037
  %1039 = vrot.lane.b32.xlu0 %v65, 12
  %v1040 = vpop.permute.xlu0 %1039
  %1041 = vrot.lane.b32.xlu0 %v66, 12
  %v1042 = vpop.permute.xlu0 %1041
  %1043 = vrot.lane.b32.xlu0 %v74, 12
  %v1044 = vpop.permute.xlu0 %1043
  %1045 = vrot.lane.b32.xlu0 %v75, 12
  %v1046 = vpop.permute.xlu0 %1045
  %1047 = vrot.lane.b32.xlu0 %v77, 12
  %v1048 = vpop.permute.xlu0 %1047
  %1049 = vrot.lane.b32.xlu0 %v78, 12
  %v1050 = vpop.permute.xlu0 %1049
  %1051 = vrot.lane.b32.xlu0 %v80, 12
  %v1052 = vpop.permute.xlu0 %1051
  %1053 = vrot.lane.b32.xlu0 %v81, 12
  %v1054 = vpop.permute.xlu0 %1053
  %1055 = vrot.lane.b32.xlu0 %v83, 12
  %v1056 = vpop.permute.xlu0 %1055
  %1057 = vrot.lane.b32.xlu0 %v84, 12
  %v1058 = vpop.permute.xlu0 %1057
  %1059 = vrot.lane.b32.xlu0 %v86, 12
  %v1060 = vpop.permute.xlu0 %1059
  %1061 = vrot.lane.b32.xlu0 %v87, 12
  %v1062 = vpop.permute.xlu0 %1061
  %1063 = vrot.lane.b32.xlu0 %v89, 12
  %v1064 = vpop.permute.xlu0 %1063
  %1065 = vrot.lane.b32.xlu0 %v90, 12
  %v1066 = vpop.permute.xlu0 %1065
  %1067 = vrot.lane.b32.xlu0 %v92, 12
  %v1068 = vpop.permute.xlu0 %1067
  %1069 = vrot.lane.b32.xlu0 %v93, 12
  %v1070 = vpop.permute.xlu0 %1069
  %1071 = vrot.lane.b32.xlu0 %v95, 12
  %v1072 = vpop.permute.xlu0 %1071
  %1073 = vrot.lane.b32.xlu0 %v96, 12
  %v1074 = vpop.permute.xlu0 %1073
  %1075 = vrot.lane.b32.xlu0 %v98, 12
  %v1076 = vpop.permute.xlu0 %1075
  %1077 = vrot.lane.b32.xlu0 %v99, 12
  %v1078 = vpop.permute.xlu0 %1077
  %1079 = vrot.lane.b32.xlu0 %v101, 12
  %v1080 = vpop.permute.xlu0 %1079
  %1081 = vrot.lane.b32.xlu0 %v102, 12
  %v1082 = vpop.permute.xlu0 %1081
  %1083 = vrot.lane.b32.xlu0 %v104, 12
  %v1084 = vpop.permute.xlu0 %1083
  %1085 = vrot.lane.b32.xlu0 %v105, 12
  %v1086 = vpop.permute.xlu0 %1085
  %1087 = vrot.lane.b32.xlu0 %v107, 12
  %v1088 = vpop.permute.xlu0 %1087
  %1089 = vrot.lane.b32.xlu0 %v108, 12
  %v1090 = vpop.permute.xlu0 %1089
  %1091 = vrot.lane.b32.xlu0 %v110, 12
  %v1092 = vpop.permute.xlu0 %1091
  %1093 = vrot.lane.b32.xlu0 %v111, 12
  %v1094 = vpop.permute.xlu0 %1093
  %1095 = vrot.lane.b32.xlu0 %v113, 12
  %v1096 = vpop.permute.xlu0 %1095
  %1097 = vrot.lane.b32.xlu0 %v114, 12
  %v1098 = vpop.permute.xlu0 %1097
  %1099 = vrot.lane.b32.xlu0 %v116, 12
  %v1100 = vpop.permute.xlu0 %1099
  %1101 = vrot.lane.b32.xlu0 %v117, 12
  %v1102 = vpop.permute.xlu0 %1101
  %1103 = vrot.lane.b32.xlu0 %v119, 12
  %v1104 = vpop.permute.xlu0 %1103
  %1105 = vrot.lane.b32.xlu0 %v120, 12
  %v1106 = vpop.permute.xlu0 %1105
  %1171 = vrot.lane.b32.xlu0 %v229, 16
  %v1172 = vpop.permute.xlu0 %1171
  %1173 = vrot.lane.b32.xlu0 %v231, 16
  %v1174 = vpop.permute.xlu0 %1173
  %1175 = vrot.lane.b32.xlu0 %v234, 16
  %v1176 = vpop.permute.xlu0 %1175
  %1177 = vrot.lane.b32.xlu0 %v236, 16
  %v1178 = vpop.permute.xlu0 %1177
  %1179 = vrot.lane.b32.xlu0 %v239, 16
  %v1180 = vpop.permute.xlu0 %1179
  %1181 = vrot.lane.b32.xlu0 %v241, 16
  %v1182 = vpop.permute.xlu0 %1181
  %1183 = vrot.lane.b32.xlu0 %v244, 16
  %v1184 = vpop.permute.xlu0 %1183
  %1185 = vrot.lane.b32.xlu0 %v246, 16
  %v1186 = vpop.permute.xlu0 %1185
  %1187 = vrot.lane.b32.xlu0 %v249, 16
  %v1188 = vpop.permute.xlu0 %1187
  %1189 = vrot.lane.b32.xlu0 %v251, 16
  %v1190 = vpop.permute.xlu0 %1189
  %1191 = vrot.lane.b32.xlu0 %v254, 16
  %v1192 = vpop.permute.xlu0 %1191
  %1193 = vrot.lane.b32.xlu0 %v256, 16
  %v1194 = vpop.permute.xlu0 %1193
  %1195 = vrot.lane.b32.xlu0 %v259, 16
  %v1196 = vpop.permute.xlu0 %1195
  %1197 = vrot.lane.b32.xlu0 %v261, 16
  %v1198 = vpop.permute.xlu0 %1197
  %1199 = vrot.lane.b32.xlu0 %v264, 16
  %v1200 = vpop.permute.xlu0 %1199
  %1201 = vrot.lane.b32.xlu0 %v266, 16
  %v1202 = vpop.permute.xlu0 %1201
  %1203 = vrot.lane.b32.xlu0 %v269, 16
  %v1204 = vpop.permute.xlu0 %1203
  %1205 = vrot.lane.b32.xlu0 %v271, 16
  %v1206 = vpop.permute.xlu0 %1205
  %1207 = vrot.lane.b32.xlu0 %v274, 16
  %v1208 = vpop.permute.xlu0 %1207
  %1209 = vrot.lane.b32.xlu0 %v276, 16
  %v1210 = vpop.permute.xlu0 %1209
  %1211 = vrot.lane.b32.xlu0 %v279, 16
  %v1212 = vpop.permute.xlu0 %1211
  %1213 = vrot.lane.b32.xlu0 %v281, 16
  %v1214 = vpop.permute.xlu0 %1213
  %1215 = vrot.lane.b32.xlu0 %v284, 16
  %v1216 = vpop.permute.xlu0 %1215
  %1217 = vrot.lane.b32.xlu0 %v286, 16
  %v1218 = vpop.permute.xlu0 %1217
  %1219 = vrot.lane.b32.xlu0 %v289, 16
  %v1220 = vpop.permute.xlu0 %1219
  %1221 = vrot.lane.b32.xlu0 %v291, 16
  %v1222 = vpop.permute.xlu0 %1221
  %1223 = vrot.lane.b32.xlu0 %v294, 16
  %v1224 = vpop.permute.xlu0 %1223
  %1225 = vrot.lane.b32.xlu0 %v296, 16
  %v1226 = vpop.permute.xlu0 %1225
  %1227 = vrot.lane.b32.xlu0 %v299, 16
  %v1228 = vpop.permute.xlu0 %1227
  %1229 = vrot.lane.b32.xlu0 %v301, 16
  %v1230 = vpop.permute.xlu0 %1229
  %1231 = vrot.lane.b32.xlu0 %v551, 16
  %v1232 = vpop.permute.xlu0 %1231
  %1233 = vrot.lane.b32.xlu0 %v553, 16
  %v1234 = vpop.permute.xlu0 %1233
  %1235 = vrot.lane.b32.xlu0 %v309, 16
  %v1236 = vpop.permute.xlu0 %1235
  %1237 = vrot.lane.b32.xlu0 %v311, 16
  %v1238 = vpop.permute.xlu0 %1237
  %1239 = vrot.lane.b32.xlu0 %v314, 16
  %v1240 = vpop.permute.xlu0 %1239
  %1241 = vrot.lane.b32.xlu0 %v316, 16
  %v1242 = vpop.permute.xlu0 %1241
  %1243 = vrot.lane.b32.xlu0 %v319, 16
  %v1244 = vpop.permute.xlu0 %1243
  %1245 = vrot.lane.b32.xlu0 %v321, 16
  %v1246 = vpop.permute.xlu0 %1245
  %1247 = vrot.lane.b32.xlu0 %v324, 16
  %v1248 = vpop.permute.xlu0 %1247
  %1249 = vrot.lane.b32.xlu0 %v326, 16
  %v1250 = vpop.permute.xlu0 %1249
  %1251 = vrot.lane.b32.xlu0 %v329, 16
  %v1252 = vpop.permute.xlu0 %1251
  %1253 = vrot.lane.b32.xlu0 %v331, 16
  %v1254 = vpop.permute.xlu0 %1253
  %1255 = vrot.lane.b32.xlu0 %v334, 16
  %v1256 = vpop.permute.xlu0 %1255
  %1257 = vrot.lane.b32.xlu0 %v336, 16
  %v1258 = vpop.permute.xlu0 %1257
  %1259 = vrot.lane.b32.xlu0 %v339, 16
  %v1260 = vpop.permute.xlu0 %1259
  %1261 = vrot.lane.b32.xlu0 %v341, 16
  %v1262 = vpop.permute.xlu0 %1261
  %1263 = vrot.lane.b32.xlu0 %v344, 16
  %v1264 = vpop.permute.xlu0 %1263
  %1265 = vrot.lane.b32.xlu0 %v346, 16
  %v1266 = vpop.permute.xlu0 %1265
  %1267 = vrot.lane.b32.xlu0 %v349, 16
  %v1268 = vpop.permute.xlu0 %1267
  %1269 = vrot.lane.b32.xlu0 %v351, 16
  %v1270 = vpop.permute.xlu0 %1269
  %1271 = vrot.lane.b32.xlu0 %v354, 16
  %v1272 = vpop.permute.xlu0 %1271
  %1273 = vrot.lane.b32.xlu0 %v356, 16
  %v1274 = vpop.permute.xlu0 %1273
  %1275 = vrot.lane.b32.xlu0 %v359, 16
  %v1276 = vpop.permute.xlu0 %1275
  %1277 = vrot.lane.b32.xlu0 %v361, 16
  %v1278 = vpop.permute.xlu0 %1277
  %1279 = vrot.lane.b32.xlu0 %v364, 16
  %v1280 = vpop.permute.xlu0 %1279
  %1281 = vrot.lane.b32.xlu0 %v366, 16
  %v1282 = vpop.permute.xlu0 %1281
  %1283 = vrot.lane.b32.xlu0 %v369, 16
  %v1284 = vpop.permute.xlu0 %1283
  %1285 = vrot.lane.b32.xlu0 %v371, 16
  %v1286 = vpop.permute.xlu0 %1285
  %1287 = vrot.lane.b32.xlu0 %v374, 16
  %v1288 = vpop.permute.xlu0 %1287
  %1289 = vrot.lane.b32.xlu0 %v376, 16
  %v1290 = vpop.permute.xlu0 %1289
  %1291 = vrot.lane.b32.xlu0 %v379, 16
  %v1292 = vpop.permute.xlu0 %1291
  %1293 = vrot.lane.b32.xlu0 %v381, 16
  %v1294 = vpop.permute.xlu0 %1293
  %1295 = vrot.lane.b32.xlu0 %v556, 16
  %v1296 = vpop.permute.xlu0 %1295
  %1297 = vrot.lane.b32.xlu0 %v558, 16
  %v1298 = vpop.permute.xlu0 %1297
  %1363 = vrot.lane.b32.xlu0 %v390, 20
  %v1364 = vpop.permute.xlu0 %1363
  %1365 = vrot.lane.b32.xlu0 %v392, 20
  %v1366 = vpop.permute.xlu0 %1365
  %1367 = vrot.lane.b32.xlu0 %v395, 20
  %v1368 = vpop.permute.xlu0 %1367
  %1369 = vrot.lane.b32.xlu0 %v397, 20
  %v1370 = vpop.permute.xlu0 %1369
  %1371 = vrot.lane.b32.xlu0 %v400, 20
  %v1372 = vpop.permute.xlu0 %1371
  %1373 = vrot.lane.b32.xlu0 %v402, 20
  %v1374 = vpop.permute.xlu0 %1373
  %1375 = vrot.lane.b32.xlu0 %v405, 20
  %v1376 = vpop.permute.xlu0 %1375
  %1377 = vrot.lane.b32.xlu0 %v407, 20
  %v1378 = vpop.permute.xlu0 %1377
  %1379 = vrot.lane.b32.xlu0 %v410, 20
  %v1380 = vpop.permute.xlu0 %1379
  %1381 = vrot.lane.b32.xlu0 %v412, 20
  %v1382 = vpop.permute.xlu0 %1381
  %1383 = vrot.lane.b32.xlu0 %v415, 20
  %v1384 = vpop.permute.xlu0 %1383
  %1385 = vrot.lane.b32.xlu0 %v417, 20
  %v1386 = vpop.permute.xlu0 %1385
  %1387 = vrot.lane.b32.xlu0 %v420, 20
  %v1388 = vpop.permute.xlu0 %1387
  %1389 = vrot.lane.b32.xlu0 %v422, 20
  %v1390 = vpop.permute.xlu0 %1389
  %1391 = vrot.lane.b32.xlu0 %v425, 20
  %v1392 = vpop.permute.xlu0 %1391
  %1393 = vrot.lane.b32.xlu0 %v427, 20
  %v1394 = vpop.permute.xlu0 %1393
  %1395 = vrot.lane.b32.xlu0 %v430, 20
  %v1396 = vpop.permute.xlu0 %1395
  %1397 = vrot.lane.b32.xlu0 %v432, 20
  %v1398 = vpop.permute.xlu0 %1397
  %1399 = vrot.lane.b32.xlu0 %v435, 20
  %v1400 = vpop.permute.xlu0 %1399
  %1401 = vrot.lane.b32.xlu0 %v437, 20
  %v1402 = vpop.permute.xlu0 %1401
  %1403 = vrot.lane.b32.xlu0 %v440, 20
  %v1404 = vpop.permute.xlu0 %1403
  %1405 = vrot.lane.b32.xlu0 %v442, 20
  %v1406 = vpop.permute.xlu0 %1405
  %1407 = vrot.lane.b32.xlu0 %v445, 20
  %v1408 = vpop.permute.xlu0 %1407
  %1409 = vrot.lane.b32.xlu0 %v447, 20
  %v1410 = vpop.permute.xlu0 %1409
  %1411 = vrot.lane.b32.xlu0 %v450, 20
  %v1412 = vpop.permute.xlu0 %1411
  %1413 = vrot.lane.b32.xlu0 %v452, 20
  %v1414 = vpop.permute.xlu0 %1413
  %1415 = vrot.lane.b32.xlu0 %v455, 20
  %v1416 = vpop.permute.xlu0 %1415
  %1417 = vrot.lane.b32.xlu0 %v457, 20
  %v1418 = vpop.permute.xlu0 %1417
  %1419 = vrot.lane.b32.xlu0 %v460, 20
  %v1420 = vpop.permute.xlu0 %1419
  %1421 = vrot.lane.b32.xlu0 %v462, 20
  %v1422 = vpop.permute.xlu0 %1421
  %1423 = vrot.lane.b32.xlu0 %v561, 20
  %v1424 = vpop.permute.xlu0 %1423
  %1425 = vrot.lane.b32.xlu0 %v563, 20
  %v1426 = vpop.permute.xlu0 %1425
  %1427 = vrot.lane.b32.xlu0 %v470, 20
  %v1428 = vpop.permute.xlu0 %1427
  %1429 = vrot.lane.b32.xlu0 %v472, 20
  %v1430 = vpop.permute.xlu0 %1429
  %1431 = vrot.lane.b32.xlu0 %v475, 20
  %v1432 = vpop.permute.xlu0 %1431
  %1433 = vrot.lane.b32.xlu0 %v477, 20
  %v1434 = vpop.permute.xlu0 %1433
  %1435 = vrot.lane.b32.xlu0 %v480, 20
  %v1436 = vpop.permute.xlu0 %1435
  %1437 = vrot.lane.b32.xlu0 %v482, 20
  %v1438 = vpop.permute.xlu0 %1437
  %1439 = vrot.lane.b32.xlu0 %v485, 20
  %v1440 = vpop.permute.xlu0 %1439
  %1441 = vrot.lane.b32.xlu0 %v487, 20
  %v1442 = vpop.permute.xlu0 %1441
  %1443 = vrot.lane.b32.xlu0 %v490, 20
  %v1444 = vpop.permute.xlu0 %1443
  %1445 = vrot.lane.b32.xlu0 %v492, 20
  %v1446 = vpop.permute.xlu0 %1445
  %1447 = vrot.lane.b32.xlu0 %v495, 20
  %v1448 = vpop.permute.xlu0 %1447
  %1449 = vrot.lane.b32.xlu0 %v497, 20
  %v1450 = vpop.permute.xlu0 %1449
  %1451 = vrot.lane.b32.xlu0 %v500, 20
  %v1452 = vpop.permute.xlu0 %1451
  %1453 = vrot.lane.b32.xlu0 %v502, 20
  %v1454 = vpop.permute.xlu0 %1453
  %1455 = vrot.lane.b32.xlu0 %v505, 20
  %v1456 = vpop.permute.xlu0 %1455
  %1457 = vrot.lane.b32.xlu0 %v507, 20
  %v1458 = vpop.permute.xlu0 %1457
  %1459 = vrot.lane.b32.xlu0 %v510, 20
  %v1460 = vpop.permute.xlu0 %1459
  %1461 = vrot.lane.b32.xlu0 %v512, 20
  %v1462 = vpop.permute.xlu0 %1461
  %1463 = vrot.lane.b32.xlu0 %v515, 20
  %v1464 = vpop.permute.xlu0 %1463
  %1465 = vrot.lane.b32.xlu0 %v517, 20
  %v1466 = vpop.permute.xlu0 %1465
  %1467 = vrot.lane.b32.xlu0 %v520, 20
  %v1468 = vpop.permute.xlu0 %1467
  %1469 = vrot.lane.b32.xlu0 %v522, 20
  %v1470 = vpop.permute.xlu0 %1469
  %1471 = vrot.lane.b32.xlu0 %v525, 20
  %v1472 = vpop.permute.xlu0 %1471
  %1473 = vrot.lane.b32.xlu0 %v527, 20
  %v1474 = vpop.permute.xlu0 %1473
  %1475 = vrot.lane.b32.xlu0 %v530, 20
  %v1476 = vpop.permute.xlu0 %1475
  %1477 = vrot.lane.b32.xlu0 %v532, 20
  %v1478 = vpop.permute.xlu0 %1477
  %1479 = vrot.lane.b32.xlu0 %v535, 20
  %v1480 = vpop.permute.xlu0 %1479
  %1481 = vrot.lane.b32.xlu0 %v537, 20
  %v1482 = vpop.permute.xlu0 %1481
  %1483 = vrot.lane.b32.xlu0 %v540, 20
  %v1484 = vpop.permute.xlu0 %1483
  %1485 = vrot.lane.b32.xlu0 %v542, 20
  %v1486 = vpop.permute.xlu0 %1485
  %1487 = vrot.lane.b32.xlu0 %v566, 20
  %v1488 = vpop.permute.xlu0 %1487
  %1489 = vrot.lane.b32.xlu0 %v568, 20
  %v1490 = vpop.permute.xlu0 %1489
  %1555 = vrot.lane.b32.xlu0 %v23, 24
  %v1556 = vpop.permute.xlu0 %1555
  %1557 = vrot.lane.b32.xlu0 %v24, 24
  %v1558 = vpop.permute.xlu0 %1557
  %1559 = vrot.lane.b32.xlu0 %v26, 24
  %v1560 = vpop.permute.xlu0 %1559
  %1561 = vrot.lane.b32.xlu0 %v27, 24
  %v1562 = vpop.permute.xlu0 %1561
  %1563 = vrot.lane.b32.xlu0 %v29, 24
  %v1564 = vpop.permute.xlu0 %1563
  %1565 = vrot.lane.b32.xlu0 %v30, 24
  %v1566 = vpop.permute.xlu0 %1565
  %1567 = vrot.lane.b32.xlu0 %v32, 24
  %v1568 = vpop.permute.xlu0 %1567
  %1569 = vrot.lane.b32.xlu0 %v33, 24
  %v1570 = vpop.permute.xlu0 %1569
  %1571 = vrot.lane.b32.xlu0 %v35, 24
  %v1572 = vpop.permute.xlu0 %1571
  %1573 = vrot.lane.b32.xlu0 %v36, 24
  %v1574 = vpop.permute.xlu0 %1573
  %1575 = vrot.lane.b32.xlu0 %v38, 24
  %v1576 = vpop.permute.xlu0 %1575
  %1577 = vrot.lane.b32.xlu0 %v39, 24
  %v1578 = vpop.permute.xlu0 %1577
  %1579 = vrot.lane.b32.xlu0 %v41, 24
  %v1580 = vpop.permute.xlu0 %1579
  %1581 = vrot.lane.b32.xlu0 %v42, 24
  %v1582 = vpop.permute.xlu0 %1581
  %1583 = vrot.lane.b32.xlu0 %v44, 24
  %v1584 = vpop.permute.xlu0 %1583
  %1585 = vrot.lane.b32.xlu0 %v45, 24
  %v1586 = vpop.permute.xlu0 %1585
  %1587 = vrot.lane.b32.xlu0 %v47, 24
  %v1588 = vpop.permute.xlu0 %1587
  %1589 = vrot.lane.b32.xlu0 %v48, 24
  %v1590 = vpop.permute.xlu0 %1589
  %1591 = vrot.lane.b32.xlu0 %v50, 24
  %v1592 = vpop.permute.xlu0 %1591
  %1593 = vrot.lane.b32.xlu0 %v51, 24
  %v1594 = vpop.permute.xlu0 %1593
  %1595 = vrot.lane.b32.xlu0 %v53, 24
  %v1596 = vpop.permute.xlu0 %1595
  %1597 = vrot.lane.b32.xlu0 %v54, 24
  %v1598 = vpop.permute.xlu0 %1597
  %1599 = vrot.lane.b32.xlu0 %v56, 24
  %v1600 = vpop.permute.xlu0 %1599
  %1601 = vrot.lane.b32.xlu0 %v57, 24
  %v1602 = vpop.permute.xlu0 %1601
  %1603 = vrot.lane.b32.xlu0 %v59, 24
  %v1604 = vpop.permute.xlu0 %1603
  %1605 = vrot.lane.b32.xlu0 %v60, 24
  %v1606 = vpop.permute.xlu0 %1605
  %1607 = vrot.lane.b32.xlu0 %v62, 24
  %v1608 = vpop.permute.xlu0 %1607
  %1609 = vrot.lane.b32.xlu0 %v63, 24
  %v1610 = vpop.permute.xlu0 %1609
  %1611 = vrot.lane.b32.xlu0 %v65, 24
  %v1612 = vpop.permute.xlu0 %1611
  %1613 = vrot.lane.b32.xlu0 %v66, 24
  %v1614 = vpop.permute.xlu0 %1613
  %1615 = vrot.lane.b32.xlu0 %v68, 24
  %v1616 = vpop.permute.xlu0 %1615
  %1617 = vrot.lane.b32.xlu0 %v69, 24
  %v1618 = vpop.permute.xlu0 %1617
  %1619 = vrot.lane.b32.xlu0 %v77, 24
  %v1620 = vpop.permute.xlu0 %1619
  %1621 = vrot.lane.b32.xlu0 %v78, 24
  %v1622 = vpop.permute.xlu0 %1621
  %1623 = vrot.lane.b32.xlu0 %v80, 24
  %v1624 = vpop.permute.xlu0 %1623
  %1625 = vrot.lane.b32.xlu0 %v81, 24
  %v1626 = vpop.permute.xlu0 %1625
  %1627 = vrot.lane.b32.xlu0 %v83, 24
  %v1628 = vpop.permute.xlu0 %1627
  %1629 = vrot.lane.b32.xlu0 %v84, 24
  %v1630 = vpop.permute.xlu0 %1629
  %1631 = vrot.lane.b32.xlu0 %v86, 24
  %v1632 = vpop.permute.xlu0 %1631
  %1633 = vrot.lane.b32.xlu0 %v87, 24
  %v1634 = vpop.permute.xlu0 %1633
  %1635 = vrot.lane.b32.xlu0 %v89, 24
  %v1636 = vpop.permute.xlu0 %1635
  %1637 = vrot.lane.b32.xlu0 %v90, 24
  %v1638 = vpop.permute.xlu0 %1637
  %1639 = vrot.lane.b32.xlu0 %v92, 24
  %v1640 = vpop.permute.xlu0 %1639
  %1641 = vrot.lane.b32.xlu0 %v93, 24
  %v1642 = vpop.permute.xlu0 %1641
  %1643 = vrot.lane.b32.xlu0 %v95, 24
  %v1644 = vpop.permute.xlu0 %1643
  %1645 = vrot.lane.b32.xlu0 %v96, 24
  %v1646 = vpop.permute.xlu0 %1645
  %1647 = vrot.lane.b32.xlu0 %v98, 24
  %v1648 = vpop.permute.xlu0 %1647
  %1649 = vrot.lane.b32.xlu0 %v99, 24
  %v1650 = vpop.permute.xlu0 %1649
  %1651 = vrot.lane.b32.xlu0 %v101, 24
  %v1652 = vpop.permute.xlu0 %1651
  %1653 = vrot.lane.b32.xlu0 %v102, 24
  %v1654 = vpop.permute.xlu0 %1653
  %1655 = vrot.lane.b32.xlu0 %v104, 24
  %v1656 = vpop.permute.xlu0 %1655
  %1657 = vrot.lane.b32.xlu0 %v105, 24
  %v1658 = vpop.permute.xlu0 %1657
  %1659 = vrot.lane.b32.xlu0 %v107, 24
  %v1660 = vpop.permute.xlu0 %1659
  %1661 = vrot.lane.b32.xlu0 %v108, 24
  %v1662 = vpop.permute.xlu0 %1661
  %1663 = vrot.lane.b32.xlu0 %v110, 24
  %v1664 = vpop.permute.xlu0 %1663
  %1665 = vrot.lane.b32.xlu0 %v111, 24
  %v1666 = vpop.permute.xlu0 %1665
  %1667 = vrot.lane.b32.xlu0 %v113, 24
  %v1668 = vpop.permute.xlu0 %1667
  %1669 = vrot.lane.b32.xlu0 %v114, 24
  %v1670 = vpop.permute.xlu0 %1669
  %1671 = vrot.lane.b32.xlu0 %v116, 24
  %v1672 = vpop.permute.xlu0 %1671
  %1673 = vrot.lane.b32.xlu0 %v117, 24
  %v1674 = vpop.permute.xlu0 %1673
  %1675 = vrot.lane.b32.xlu0 %v119, 24
  %v1676 = vpop.permute.xlu0 %1675
  %1677 = vrot.lane.b32.xlu0 %v120, 24
  %v1678 = vpop.permute.xlu0 %1677
  %1679 = vrot.lane.b32.xlu0 %v122, 24
  %v1680 = vpop.permute.xlu0 %1679
  %1681 = vrot.lane.b32.xlu0 %v123, 24
  %v1682 = vpop.permute.xlu0 %1681
  %1747 = vrot.lane.b32.xlu0 %v234, 28
  %v1748 = vpop.permute.xlu0 %1747
  %1749 = vrot.lane.b32.xlu0 %v236, 28
  %v1750 = vpop.permute.xlu0 %1749
  %1751 = vrot.lane.b32.xlu0 %v239, 28
  %v1752 = vpop.permute.xlu0 %1751
  %1753 = vrot.lane.b32.xlu0 %v241, 28
  %v1754 = vpop.permute.xlu0 %1753
  %1755 = vrot.lane.b32.xlu0 %v244, 28
  %v1756 = vpop.permute.xlu0 %1755
  %1757 = vrot.lane.b32.xlu0 %v246, 28
  %v1758 = vpop.permute.xlu0 %1757
  %1759 = vrot.lane.b32.xlu0 %v249, 28
  %v1760 = vpop.permute.xlu0 %1759
  %1761 = vrot.lane.b32.xlu0 %v251, 28
  %v1762 = vpop.permute.xlu0 %1761
  %1763 = vrot.lane.b32.xlu0 %v254, 28
  %v1764 = vpop.permute.xlu0 %1763
  %1765 = vrot.lane.b32.xlu0 %v256, 28
  %v1766 = vpop.permute.xlu0 %1765
  %1767 = vrot.lane.b32.xlu0 %v259, 28
  %v1768 = vpop.permute.xlu0 %1767
  %1769 = vrot.lane.b32.xlu0 %v261, 28
  %v1770 = vpop.permute.xlu0 %1769
  %1771 = vrot.lane.b32.xlu0 %v264, 28
  %v1772 = vpop.permute.xlu0 %1771
  %1773 = vrot.lane.b32.xlu0 %v266, 28
  %v1774 = vpop.permute.xlu0 %1773
  %1775 = vrot.lane.b32.xlu0 %v269, 28
  %v1776 = vpop.permute.xlu0 %1775
  %1777 = vrot.lane.b32.xlu0 %v271, 28
  %v1778 = vpop.permute.xlu0 %1777
  %1779 = vrot.lane.b32.xlu0 %v274, 28
  %v1780 = vpop.permute.xlu0 %1779
  %1781 = vrot.lane.b32.xlu0 %v276, 28
  %v1782 = vpop.permute.xlu0 %1781
  %1783 = vrot.lane.b32.xlu0 %v279, 28
  %v1784 = vpop.permute.xlu0 %1783
  %1785 = vrot.lane.b32.xlu0 %v281, 28
  %v1786 = vpop.permute.xlu0 %1785
  %1787 = vrot.lane.b32.xlu0 %v284, 28
  %v1788 = vpop.permute.xlu0 %1787
  %1789 = vrot.lane.b32.xlu0 %v286, 28
  %v1790 = vpop.permute.xlu0 %1789
  %1791 = vrot.lane.b32.xlu0 %v289, 28
  %v1792 = vpop.permute.xlu0 %1791
  %1793 = vrot.lane.b32.xlu0 %v291, 28
  %v1794 = vpop.permute.xlu0 %1793
  %1795 = vrot.lane.b32.xlu0 %v294, 28
  %v1796 = vpop.permute.xlu0 %1795
  %1797 = vrot.lane.b32.xlu0 %v296, 28
  %v1798 = vpop.permute.xlu0 %1797
  %1799 = vrot.lane.b32.xlu0 %v299, 28
  %v1800 = vpop.permute.xlu0 %1799
  %1801 = vrot.lane.b32.xlu0 %v301, 28
  %v1802 = vpop.permute.xlu0 %1801
  %1803 = vrot.lane.b32.xlu0 %v551, 28
  %v1804 = vpop.permute.xlu0 %1803
  %1805 = vrot.lane.b32.xlu0 %v553, 28
  %v1806 = vpop.permute.xlu0 %1805
  %1807 = vrot.lane.b32.xlu0 %v577, 28
  %v1808 = vpop.permute.xlu0 %1807
  %1809 = vrot.lane.b32.xlu0 %v579, 28
  %v1810 = vpop.permute.xlu0 %1809
  %1811 = vrot.lane.b32.xlu0 %v314, 28
  %v1812 = vpop.permute.xlu0 %1811
  %1813 = vrot.lane.b32.xlu0 %v316, 28
  %v1814 = vpop.permute.xlu0 %1813
  %1815 = vrot.lane.b32.xlu0 %v319, 28
  %v1816 = vpop.permute.xlu0 %1815
  %1817 = vrot.lane.b32.xlu0 %v321, 28
  %v1818 = vpop.permute.xlu0 %1817
  %1819 = vrot.lane.b32.xlu0 %v324, 28
  %v1820 = vpop.permute.xlu0 %1819
  %1821 = vrot.lane.b32.xlu0 %v326, 28
  %v1822 = vpop.permute.xlu0 %1821
  %1823 = vrot.lane.b32.xlu0 %v329, 28
  %v1824 = vpop.permute.xlu0 %1823
  %1825 = vrot.lane.b32.xlu0 %v331, 28
  %v1826 = vpop.permute.xlu0 %1825
  %1827 = vrot.lane.b32.xlu0 %v334, 28
  %v1828 = vpop.permute.xlu0 %1827
  %1829 = vrot.lane.b32.xlu0 %v336, 28
  %v1830 = vpop.permute.xlu0 %1829
  %1831 = vrot.lane.b32.xlu0 %v339, 28
  %v1832 = vpop.permute.xlu0 %1831
  %1833 = vrot.lane.b32.xlu0 %v341, 28
  %v1834 = vpop.permute.xlu0 %1833
  %1835 = vrot.lane.b32.xlu0 %v344, 28
  %v1836 = vpop.permute.xlu0 %1835
  %1837 = vrot.lane.b32.xlu0 %v346, 28
  %v1838 = vpop.permute.xlu0 %1837
  %1839 = vrot.lane.b32.xlu0 %v349, 28
  %v1840 = vpop.permute.xlu0 %1839
  %1841 = vrot.lane.b32.xlu0 %v351, 28
  %v1842 = vpop.permute.xlu0 %1841
  %1843 = vrot.lane.b32.xlu0 %v354, 28
  %v1844 = vpop.permute.xlu0 %1843
  %1845 = vrot.lane.b32.xlu0 %v356, 28
  %v1846 = vpop.permute.xlu0 %1845
  %1847 = vrot.lane.b32.xlu0 %v359, 28
  %v1848 = vpop.permute.xlu0 %1847
  %1849 = vrot.lane.b32.xlu0 %v361, 28
  %v1850 = vpop.permute.xlu0 %1849
  %1851 = vrot.lane.b32.xlu0 %v364, 28
  %v1852 = vpop.permute.xlu0 %1851
  %1853 = vrot.lane.b32.xlu0 %v366, 28
  %v1854 = vpop.permute.xlu0 %1853
  %1855 = vrot.lane.b32.xlu0 %v369, 28
  %v1856 = vpop.permute.xlu0 %1855
  %1857 = vrot.lane.b32.xlu0 %v371, 28
  %v1858 = vpop.permute.xlu0 %1857
  %1859 = vrot.lane.b32.xlu0 %v374, 28
  %v1860 = vpop.permute.xlu0 %1859
  %1861 = vrot.lane.b32.xlu0 %v376, 28
  %v1862 = vpop.permute.xlu0 %1861
  %1863 = vrot.lane.b32.xlu0 %v379, 28
  %v1864 = vpop.permute.xlu0 %1863
  %1865 = vrot.lane.b32.xlu0 %v381, 28
  %v1866 = vpop.permute.xlu0 %1865
  %1867 = vrot.lane.b32.xlu0 %v556, 28
  %v1868 = vpop.permute.xlu0 %1867
  %1869 = vrot.lane.b32.xlu0 %v558, 28
  %v1870 = vpop.permute.xlu0 %1869
  %1871 = vrot.lane.b32.xlu0 %v582, 28
  %v1872 = vpop.permute.xlu0 %1871
  %1873 = vrot.lane.b32.xlu0 %v584, 28
  %v1874 = vpop.permute.xlu0 %1873
  %1939 = vrot.lane.b32.xlu0 %v395, 32
  %v1940 = vpop.permute.xlu0 %1939
  %1941 = vrot.lane.b32.xlu0 %v397, 32
  %v1942 = vpop.permute.xlu0 %1941
  %1943 = vrot.lane.b32.xlu0 %v400, 32
  %v1944 = vpop.permute.xlu0 %1943
  %1945 = vrot.lane.b32.xlu0 %v402, 32
  %v1946 = vpop.permute.xlu0 %1945
  %1947 = vrot.lane.b32.xlu0 %v405, 32
  %v1948 = vpop.permute.xlu0 %1947
  %1949 = vrot.lane.b32.xlu0 %v407, 32
  %v1950 = vpop.permute.xlu0 %1949
  %1951 = vrot.lane.b32.xlu0 %v410, 32
  %v1952 = vpop.permute.xlu0 %1951
  %1953 = vrot.lane.b32.xlu0 %v412, 32
  %v1954 = vpop.permute.xlu0 %1953
  %1955 = vrot.lane.b32.xlu0 %v415, 32
  %v1956 = vpop.permute.xlu0 %1955
  %1957 = vrot.lane.b32.xlu0 %v417, 32
  %v1958 = vpop.permute.xlu0 %1957
  %1959 = vrot.lane.b32.xlu0 %v420, 32
  %v1960 = vpop.permute.xlu0 %1959
  %1961 = vrot.lane.b32.xlu0 %v422, 32
  %v1962 = vpop.permute.xlu0 %1961
  %1963 = vrot.lane.b32.xlu0 %v425, 32
  %v1964 = vpop.permute.xlu0 %1963
  %1965 = vrot.lane.b32.xlu0 %v427, 32
  %v1966 = vpop.permute.xlu0 %1965
  %1967 = vrot.lane.b32.xlu0 %v430, 32
  %v1968 = vpop.permute.xlu0 %1967
  %1969 = vrot.lane.b32.xlu0 %v432, 32
  %v1970 = vpop.permute.xlu0 %1969
  %1971 = vrot.lane.b32.xlu0 %v435, 32
  %v1972 = vpop.permute.xlu0 %1971
  %1973 = vrot.lane.b32.xlu0 %v437, 32
  %v1974 = vpop.permute.xlu0 %1973
  %1975 = vrot.lane.b32.xlu0 %v440, 32
  %v1976 = vpop.permute.xlu0 %1975
  %1977 = vrot.lane.b32.xlu0 %v442, 32
  %v1978 = vpop.permute.xlu0 %1977
  %1979 = vrot.lane.b32.xlu0 %v445, 32
  %v1980 = vpop.permute.xlu0 %1979
  %1981 = vrot.lane.b32.xlu0 %v447, 32
  %v1982 = vpop.permute.xlu0 %1981
  %1983 = vrot.lane.b32.xlu0 %v450, 32
  %v1984 = vpop.permute.xlu0 %1983
  %1985 = vrot.lane.b32.xlu0 %v452, 32
  %v1986 = vpop.permute.xlu0 %1985
  %1987 = vrot.lane.b32.xlu0 %v455, 32
  %v1988 = vpop.permute.xlu0 %1987
  %1989 = vrot.lane.b32.xlu0 %v457, 32
  %v1990 = vpop.permute.xlu0 %1989
  %1991 = vrot.lane.b32.xlu0 %v460, 32
  %v1992 = vpop.permute.xlu0 %1991
  %1993 = vrot.lane.b32.xlu0 %v462, 32
  %v1994 = vpop.permute.xlu0 %1993
  %1995 = vrot.lane.b32.xlu0 %v561, 32
  %v1996 = vpop.permute.xlu0 %1995
  %1997 = vrot.lane.b32.xlu0 %v563, 32
  %v1998 = vpop.permute.xlu0 %1997
  %1999 = vrot.lane.b32.xlu0 %v587, 32
  %v2000 = vpop.permute.xlu0 %1999
  %2001 = vrot.lane.b32.xlu0 %v589, 32
  %v2002 = vpop.permute.xlu0 %2001
  %2003 = vrot.lane.b32.xlu0 %v475, 32
  %v2004 = vpop.permute.xlu0 %2003
  %2005 = vrot.lane.b32.xlu0 %v477, 32
  %v2006 = vpop.permute.xlu0 %2005
  %2007 = vrot.lane.b32.xlu0 %v480, 32
  %v2008 = vpop.permute.xlu0 %2007
  %2009 = vrot.lane.b32.xlu0 %v482, 32
  %v2010 = vpop.permute.xlu0 %2009
  %2011 = vrot.lane.b32.xlu0 %v485, 32
  %v2012 = vpop.permute.xlu0 %2011
  %2013 = vrot.lane.b32.xlu0 %v487, 32
  %v2014 = vpop.permute.xlu0 %2013
  %2015 = vrot.lane.b32.xlu0 %v490, 32
  %v2016 = vpop.permute.xlu0 %2015
  %2017 = vrot.lane.b32.xlu0 %v492, 32
  %v2018 = vpop.permute.xlu0 %2017
  %2019 = vrot.lane.b32.xlu0 %v495, 32
  %v2020 = vpop.permute.xlu0 %2019
  %2021 = vrot.lane.b32.xlu0 %v497, 32
  %v2022 = vpop.permute.xlu0 %2021
  %2023 = vrot.lane.b32.xlu0 %v500, 32
  %v2024 = vpop.permute.xlu0 %2023
  %2025 = vrot.lane.b32.xlu0 %v502, 32
  %v2026 = vpop.permute.xlu0 %2025
  %2027 = vrot.lane.b32.xlu0 %v505, 32
  %v2028 = vpop.permute.xlu0 %2027
  %2029 = vrot.lane.b32.xlu0 %v507, 32
  %v2030 = vpop.permute.xlu0 %2029
  %2031 = vrot.lane.b32.xlu0 %v510, 32
  %v2032 = vpop.permute.xlu0 %2031
  %2033 = vrot.lane.b32.xlu0 %v512, 32
  %v2034 = vpop.permute.xlu0 %2033
  %2035 = vrot.lane.b32.xlu0 %v515, 32
  %v2036 = vpop.permute.xlu0 %2035
  %2037 = vrot.lane.b32.xlu0 %v517, 32
  %v2038 = vpop.permute.xlu0 %2037
  %2039 = vrot.lane.b32.xlu0 %v520, 32
  %v2040 = vpop.permute.xlu0 %2039
  %2041 = vrot.lane.b32.xlu0 %v522, 32
  %v2042 = vpop.permute.xlu0 %2041
  %2043 = vrot.lane.b32.xlu0 %v525, 32
  %v2044 = vpop.permute.xlu0 %2043
  %2045 = vrot.lane.b32.xlu0 %v527, 32
  %v2046 = vpop.permute.xlu0 %2045
  %2047 = vrot.lane.b32.xlu0 %v530, 32
  %v2048 = vpop.permute.xlu0 %2047
  %2049 = vrot.lane.b32.xlu0 %v532, 32
  %v2050 = vpop.permute.xlu0 %2049
  %2051 = vrot.lane.b32.xlu0 %v535, 32
  %v2052 = vpop.permute.xlu0 %2051
  %2053 = vrot.lane.b32.xlu0 %v537, 32
  %v2054 = vpop.permute.xlu0 %2053
  %2055 = vrot.lane.b32.xlu0 %v540, 32
  %v2056 = vpop.permute.xlu0 %2055
  %2057 = vrot.lane.b32.xlu0 %v542, 32
  %v2058 = vpop.permute.xlu0 %2057
  %2059 = vrot.lane.b32.xlu0 %v566, 32
  %v2060 = vpop.permute.xlu0 %2059
  %2061 = vrot.lane.b32.xlu0 %v568, 32
  %v2062 = vpop.permute.xlu0 %2061
  %2063 = vrot.lane.b32.xlu0 %v592, 32
  %v2064 = vpop.permute.xlu0 %2063
  %2065 = vrot.lane.b32.xlu0 %v594, 32
  %v2066 = vpop.permute.xlu0 %2065
  %vm2131 = vcmask 31744
  %v2132 = vsel %vm2131, %v17, %v596
  %v2133 = vsel %vm2131, %v18, %v598
  %v2134 = vsel %vm2131, %v20, %v600
  %v2135 = vsel %vm2131, %v21, %v602
  %v2136 = vsel %vm2131, %v23, %v604
  %v2137 = vsel %vm2131, %v24, %v606
  %v2138 = vsel %vm2131, %v26, %v608
  %v2139 = vsel %vm2131, %v27, %v610
  %v2140 = vsel %vm2131, %v29, %v612
  %v2141 = vsel %vm2131, %v30, %v614
  %v2142 = vsel %vm2131, %v32, %v616
  %v2143 = vsel %vm2131, %v33, %v618
  %v2144 = vsel %vm2131, %v35, %v620
  %v2145 = vsel %vm2131, %v36, %v622
  %v2146 = vsel %vm2131, %v38, %v624
  %v2147 = vsel %vm2131, %v39, %v626
  %v2148 = vsel %vm2131, %v41, %v628
  %v2149 = vsel %vm2131, %v42, %v630
  %v2150 = vsel %vm2131, %v44, %v632
  %v2151 = vsel %vm2131, %v45, %v634
  %v2152 = vsel %vm2131, %v47, %v636
  %v2153 = vsel %vm2131, %v48, %v638
  %v2154 = vsel %vm2131, %v50, %v640
  %v2155 = vsel %vm2131, %v51, %v642
  %v2156 = vsel %vm2131, %v53, %v644
  %v2157 = vsel %vm2131, %v54, %v646
  %v2158 = vsel %vm2131, %v56, %v648
  %v2159 = vsel %vm2131, %v57, %v650
  %v2160 = vsel %vm2131, %v59, %v652
  %v2161 = vsel %vm2131, %v60, %v654
  %v2162 = vsel %vm2131, %v62, %v656
  %v2163 = vsel %vm2131, %v63, %v658
  %v2164 = vsel %vm2131, %v71, %v660
  %v2165 = vsel %vm2131, %v72, %v662
  %v2166 = vsel %vm2131, %v74, %v664
  %v2167 = vsel %vm2131, %v75, %v666
  %v2168 = vsel %vm2131, %v77, %v668
  %v2169 = vsel %vm2131, %v78, %v670
  %v2170 = vsel %vm2131, %v80, %v672
  %v2171 = vsel %vm2131, %v81, %v674
  %v2172 = vsel %vm2131, %v83, %v676
  %v2173 = vsel %vm2131, %v84, %v678
  %v2174 = vsel %vm2131, %v86, %v680
  %v2175 = vsel %vm2131, %v87, %v682
  %v2176 = vsel %vm2131, %v89, %v684
  %v2177 = vsel %vm2131, %v90, %v686
  %v2178 = vsel %vm2131, %v92, %v688
  %v2179 = vsel %vm2131, %v93, %v690
  %v2180 = vsel %vm2131, %v95, %v692
  %v2181 = vsel %vm2131, %v96, %v694
  %v2182 = vsel %vm2131, %v98, %v696
  %v2183 = vsel %vm2131, %v99, %v698
  %v2184 = vsel %vm2131, %v101, %v700
  %v2185 = vsel %vm2131, %v102, %v702
  %v2186 = vsel %vm2131, %v104, %v704
  %v2187 = vsel %vm2131, %v105, %v706
  %v2188 = vsel %vm2131, %v107, %v708
  %v2189 = vsel %vm2131, %v108, %v710
  %v2190 = vsel %vm2131, %v110, %v712
  %v2191 = vsel %vm2131, %v111, %v714
  %v2192 = vsel %vm2131, %v113, %v716
  %v2193 = vsel %vm2131, %v114, %v718
  %v2194 = vsel %vm2131, %v116, %v720
  %v2195 = vsel %vm2131, %v117, %v722
  %vm2196 = vcmask 64512
  %v2197 = vsel %vm2196, %v2132, %v788
  %v2198 = vsel %vm2196, %v2133, %v790
  %v2199 = vsel %vm2196, %v2134, %v792
  %v2200 = vsel %vm2196, %v2135, %v794
  %v2201 = vsel %vm2196, %v2136, %v796
  %v2202 = vsel %vm2196, %v2137, %v798
  %v2203 = vsel %vm2196, %v2138, %v800
  %v2204 = vsel %vm2196, %v2139, %v802
  %v2205 = vsel %vm2196, %v2140, %v804
  %v2206 = vsel %vm2196, %v2141, %v806
  %v2207 = vsel %vm2196, %v2142, %v808
  %v2208 = vsel %vm2196, %v2143, %v810
  %v2209 = vsel %vm2196, %v2144, %v812
  %v2210 = vsel %vm2196, %v2145, %v814
  %v2211 = vsel %vm2196, %v2146, %v816
  %v2212 = vsel %vm2196, %v2147, %v818
  %v2213 = vsel %vm2196, %v2148, %v820
  %v2214 = vsel %vm2196, %v2149, %v822
  %v2215 = vsel %vm2196, %v2150, %v824
  %v2216 = vsel %vm2196, %v2151, %v826
  %v2217 = vsel %vm2196, %v2152, %v828
  %v2218 = vsel %vm2196, %v2153, %v830
  %v2219 = vsel %vm2196, %v2154, %v832
  %v2220 = vsel %vm2196, %v2155, %v834
  %v2221 = vsel %vm2196, %v2156, %v836
  %v2222 = vsel %vm2196, %v2157, %v838
  %v2223 = vsel %vm2196, %v2158, %v840
  %v2224 = vsel %vm2196, %v2159, %v842
  %v2225 = vsel %vm2196, %v2160, %v844
  %v2226 = vsel %vm2196, %v2161, %v846
  %v2227 = vsel %vm2196, %v2162, %v848
  %v2228 = vsel %vm2196, %v2163, %v850
  %v2229 = vsel %vm2196, %v2164, %v852
  %v2230 = vsel %vm2196, %v2165, %v854
  %v2231 = vsel %vm2196, %v2166, %v856
  %v2232 = vsel %vm2196, %v2167, %v858
  %v2233 = vsel %vm2196, %v2168, %v860
  %v2234 = vsel %vm2196, %v2169, %v862
  %v2235 = vsel %vm2196, %v2170, %v864
  %v2236 = vsel %vm2196, %v2171, %v866
  %v2237 = vsel %vm2196, %v2172, %v868
  %v2238 = vsel %vm2196, %v2173, %v870
  %v2239 = vsel %vm2196, %v2174, %v872
  %v2240 = vsel %vm2196, %v2175, %v874
  %v2241 = vsel %vm2196, %v2176, %v876
  %v2242 = vsel %vm2196, %v2177, %v878
  %v2243 = vsel %vm2196, %v2178, %v880
  %v2244 = vsel %vm2196, %v2179, %v882
  %v2245 = vsel %vm2196, %v2180, %v884
  %v2246 = vsel %vm2196, %v2181, %v886
  %v2247 = vsel %vm2196, %v2182, %v888
  %v2248 = vsel %vm2196, %v2183, %v890
  %v2249 = vsel %vm2196, %v2184, %v892
  %v2250 = vsel %vm2196, %v2185, %v894
  %v2251 = vsel %vm2196, %v2186, %v896
  %v2252 = vsel %vm2196, %v2187, %v898
  %v2253 = vsel %vm2196, %v2188, %v900
  %v2254 = vsel %vm2196, %v2189, %v902
  %v2255 = vsel %vm2196, %v2190, %v904
  %v2256 = vsel %vm2196, %v2191, %v906
  %v2257 = vsel %vm2196, %v2192, %v908
  %v2258 = vsel %vm2196, %v2193, %v910
  %v2259 = vsel %vm2196, %v2194, %v912
  %v2260 = vsel %vm2196, %v2195, %v914
  %vm2261 = vcmask 97280
  %v2262 = vsel %vm2261, %v2197, %v980
  %v2263 = vsel %vm2261, %v2198, %v982
  %v2264 = vsel %vm2261, %v2199, %v984
  %v2265 = vsel %vm2261, %v2200, %v986
  %v2266 = vsel %vm2261, %v2201, %v988
  %v2267 = vsel %vm2261, %v2202, %v990
  %v2268 = vsel %vm2261, %v2203, %v992
  %v2269 = vsel %vm2261, %v2204, %v994
  %v2270 = vsel %vm2261, %v2205, %v996
  %v2271 = vsel %vm2261, %v2206, %v998
  %v2272 = vsel %vm2261, %v2207, %v1000
  %v2273 = vsel %vm2261, %v2208, %v1002
  %v2274 = vsel %vm2261, %v2209, %v1004
  %v2275 = vsel %vm2261, %v2210, %v1006
  %v2276 = vsel %vm2261, %v2211, %v1008
  %v2277 = vsel %vm2261, %v2212, %v1010
  %v2278 = vsel %vm2261, %v2213, %v1012
  %v2279 = vsel %vm2261, %v2214, %v1014
  %v2280 = vsel %vm2261, %v2215, %v1016
  %v2281 = vsel %vm2261, %v2216, %v1018
  %v2282 = vsel %vm2261, %v2217, %v1020
  %v2283 = vsel %vm2261, %v2218, %v1022
  %v2284 = vsel %vm2261, %v2219, %v1024
  %v2285 = vsel %vm2261, %v2220, %v1026
  %v2286 = vsel %vm2261, %v2221, %v1028
  %v2287 = vsel %vm2261, %v2222, %v1030
  %v2288 = vsel %vm2261, %v2223, %v1032
  %v2289 = vsel %vm2261, %v2224, %v1034
  %v2290 = vsel %vm2261, %v2225, %v1036
  %v2291 = vsel %vm2261, %v2226, %v1038
  %v2292 = vsel %vm2261, %v2227, %v1040
  %v2293 = vsel %vm2261, %v2228, %v1042
  %v2294 = vsel %vm2261, %v2229, %v1044
  %v2295 = vsel %vm2261, %v2230, %v1046
  %v2296 = vsel %vm2261, %v2231, %v1048
  %v2297 = vsel %vm2261, %v2232, %v1050
  %v2298 = vsel %vm2261, %v2233, %v1052
  %v2299 = vsel %vm2261, %v2234, %v1054
  %v2300 = vsel %vm2261, %v2235, %v1056
  %v2301 = vsel %vm2261, %v2236, %v1058
  %v2302 = vsel %vm2261, %v2237, %v1060
  %v2303 = vsel %vm2261, %v2238, %v1062
  %v2304 = vsel %vm2261, %v2239, %v1064
  %v2305 = vsel %vm2261, %v2240, %v1066
  %v2306 = vsel %vm2261, %v2241, %v1068
  %v2307 = vsel %vm2261, %v2242, %v1070
  %v2308 = vsel %vm2261, %v2243, %v1072
  %v2309 = vsel %vm2261, %v2244, %v1074
  %v2310 = vsel %vm2261, %v2245, %v1076
  %v2311 = vsel %vm2261, %v2246, %v1078
  %v2312 = vsel %vm2261, %v2247, %v1080
  %v2313 = vsel %vm2261, %v2248, %v1082
  %v2314 = vsel %vm2261, %v2249, %v1084
  %v2315 = vsel %vm2261, %v2250, %v1086
  %v2316 = vsel %vm2261, %v2251, %v1088
  %v2317 = vsel %vm2261, %v2252, %v1090
  %v2318 = vsel %vm2261, %v2253, %v1092
  %v2319 = vsel %vm2261, %v2254, %v1094
  %v2320 = vsel %vm2261, %v2255, %v1096
  %v2321 = vsel %vm2261, %v2256, %v1098
  %v2322 = vsel %vm2261, %v2257, %v1100
  %v2323 = vsel %vm2261, %v2258, %v1102
  %v2324 = vsel %vm2261, %v2259, %v1104
  %v2325 = vsel %vm2261, %v2260, %v1106
  %vm2326 = vcmask 130048
  %v2327 = vsel %vm2326, %v2262, %v1172
  %v2328 = vsel %vm2326, %v2263, %v1174
  %v2329 = vsel %vm2326, %v2264, %v1176
  %v2330 = vsel %vm2326, %v2265, %v1178
  %v2331 = vsel %vm2326, %v2266, %v1180
  %v2332 = vsel %vm2326, %v2267, %v1182
  %v2333 = vsel %vm2326, %v2268, %v1184
  %v2334 = vsel %vm2326, %v2269, %v1186
  %v2335 = vsel %vm2326, %v2270, %v1188
  %v2336 = vsel %vm2326, %v2271, %v1190
  %v2337 = vsel %vm2326, %v2272, %v1192
  %v2338 = vsel %vm2326, %v2273, %v1194
  %v2339 = vsel %vm2326, %v2274, %v1196
  %v2340 = vsel %vm2326, %v2275, %v1198
  %v2341 = vsel %vm2326, %v2276, %v1200
  %v2342 = vsel %vm2326, %v2277, %v1202
  %v2343 = vsel %vm2326, %v2278, %v1204
  %v2344 = vsel %vm2326, %v2279, %v1206
  %v2345 = vsel %vm2326, %v2280, %v1208
  %v2346 = vsel %vm2326, %v2281, %v1210
  %v2347 = vsel %vm2326, %v2282, %v1212
  %v2348 = vsel %vm2326, %v2283, %v1214
  %v2349 = vsel %vm2326, %v2284, %v1216
  %v2350 = vsel %vm2326, %v2285, %v1218
  %v2351 = vsel %vm2326, %v2286, %v1220
  %v2352 = vsel %vm2326, %v2287, %v1222
  %v2353 = vsel %vm2326, %v2288, %v1224
  %v2354 = vsel %vm2326, %v2289, %v1226
  %v2355 = vsel %vm2326, %v2290, %v1228
  %v2356 = vsel %vm2326, %v2291, %v1230
  %v2357 = vsel %vm2326, %v2292, %v1232
  %v2358 = vsel %vm2326, %v2293, %v1234
  %v2359 = vsel %vm2326, %v2294, %v1236
  %v2360 = vsel %vm2326, %v2295, %v1238
  %v2361 = vsel %vm2326, %v2296, %v1240
  %v2362 = vsel %vm2326, %v2297, %v1242
  %v2363 = vsel %vm2326, %v2298, %v1244
  %v2364 = vsel %vm2326, %v2299, %v1246
  %v2365 = vsel %vm2326, %v2300, %v1248
  %v2366 = vsel %vm2326, %v2301, %v1250
  %v2367 = vsel %vm2326, %v2302, %v1252
  %v2368 = vsel %vm2326, %v2303, %v1254
  %v2369 = vsel %vm2326, %v2304, %v1256
  %v2370 = vsel %vm2326, %v2305, %v1258
  %v2371 = vsel %vm2326, %v2306, %v1260
  %v2372 = vsel %vm2326, %v2307, %v1262
  %v2373 = vsel %vm2326, %v2308, %v1264
  %v2374 = vsel %vm2326, %v2309, %v1266
  %v2375 = vsel %vm2326, %v2310, %v1268
  %v2376 = vsel %vm2326, %v2311, %v1270
  %v2377 = vsel %vm2326, %v2312, %v1272
  %v2378 = vsel %vm2326, %v2313, %v1274
  %v2379 = vsel %vm2326, %v2314, %v1276
  %v2380 = vsel %vm2326, %v2315, %v1278
  %v2381 = vsel %vm2326, %v2316, %v1280
  %v2382 = vsel %vm2326, %v2317, %v1282
  %v2383 = vsel %vm2326, %v2318, %v1284
  %v2384 = vsel %vm2326, %v2319, %v1286
  %v2385 = vsel %vm2326, %v2320, %v1288
  %v2386 = vsel %vm2326, %v2321, %v1290
  %v2387 = vsel %vm2326, %v2322, %v1292
  %v2388 = vsel %vm2326, %v2323, %v1294
  %v2389 = vsel %vm2326, %v2324, %v1296
  %v2390 = vsel %vm2326, %v2325, %v1298
  %vm2391 = vcmask 162816
  %v2392 = vsel %vm2391, %v2327, %v1364
  %v2393 = vsel %vm2391, %v2328, %v1366
  %v2394 = vsel %vm2391, %v2329, %v1368
  %v2395 = vsel %vm2391, %v2330, %v1370
  %v2396 = vsel %vm2391, %v2331, %v1372
  %v2397 = vsel %vm2391, %v2332, %v1374
  %v2398 = vsel %vm2391, %v2333, %v1376
  %v2399 = vsel %vm2391, %v2334, %v1378
  %v2400 = vsel %vm2391, %v2335, %v1380
  %v2401 = vsel %vm2391, %v2336, %v1382
  %v2402 = vsel %vm2391, %v2337, %v1384
  %v2403 = vsel %vm2391, %v2338, %v1386
  %v2404 = vsel %vm2391, %v2339, %v1388
  %v2405 = vsel %vm2391, %v2340, %v1390
  %v2406 = vsel %vm2391, %v2341, %v1392
  %v2407 = vsel %vm2391, %v2342, %v1394
  %v2408 = vsel %vm2391, %v2343, %v1396
  %v2409 = vsel %vm2391, %v2344, %v1398
  %v2410 = vsel %vm2391, %v2345, %v1400
  %v2411 = vsel %vm2391, %v2346, %v1402
  %v2412 = vsel %vm2391, %v2347, %v1404
  %v2413 = vsel %vm2391, %v2348, %v1406
  %v2414 = vsel %vm2391, %v2349, %v1408
  %v2415 = vsel %vm2391, %v2350, %v1410
  %v2416 = vsel %vm2391, %v2351, %v1412
  %v2417 = vsel %vm2391, %v2352, %v1414
  %v2418 = vsel %vm2391, %v2353, %v1416
  %v2419 = vsel %vm2391, %v2354, %v1418
  %v2420 = vsel %vm2391, %v2355, %v1420
  %v2421 = vsel %vm2391, %v2356, %v1422
  %v2422 = vsel %vm2391, %v2357, %v1424
  %v2423 = vsel %vm2391, %v2358, %v1426
  %v2424 = vsel %vm2391, %v2359, %v1428
  %v2425 = vsel %vm2391, %v2360, %v1430
  %v2426 = vsel %vm2391, %v2361, %v1432
  %v2427 = vsel %vm2391, %v2362, %v1434
  %v2428 = vsel %vm2391, %v2363, %v1436
  %v2429 = vsel %vm2391, %v2364, %v1438
  %v2430 = vsel %vm2391, %v2365, %v1440
  %v2431 = vsel %vm2391, %v2366, %v1442
  %v2432 = vsel %vm2391, %v2367, %v1444
  %v2433 = vsel %vm2391, %v2368, %v1446
  %v2434 = vsel %vm2391, %v2369, %v1448
  %v2435 = vsel %vm2391, %v2370, %v1450
  %v2436 = vsel %vm2391, %v2371, %v1452
  %v2437 = vsel %vm2391, %v2372, %v1454
  %v2438 = vsel %vm2391, %v2373, %v1456
  %v2439 = vsel %vm2391, %v2374, %v1458
  %v2440 = vsel %vm2391, %v2375, %v1460
  %v2441 = vsel %vm2391, %v2376, %v1462
  %v2442 = vsel %vm2391, %v2377, %v1464
  %v2443 = vsel %vm2391, %v2378, %v1466
  %v2444 = vsel %vm2391, %v2379, %v1468
  %v2445 = vsel %vm2391, %v2380, %v1470
  %v2446 = vsel %vm2391, %v2381, %v1472
  %v2447 = vsel %vm2391, %v2382, %v1474
  %v2448 = vsel %vm2391, %v2383, %v1476
  %v2449 = vsel %vm2391, %v2384, %v1478
  %v2450 = vsel %vm2391, %v2385, %v1480
  %v2451 = vsel %vm2391, %v2386, %v1482
  %v2452 = vsel %vm2391, %v2387, %v1484
  %v2453 = vsel %vm2391, %v2388, %v1486
  %v2454 = vsel %vm2391, %v2389, %v1488
  %v2455 = vsel %vm2391, %v2390, %v1490
  %vm2456 = vcmask 195584
  %v2457 = vsel %vm2456, %v2392, %v1556
  %v2458 = vsel %vm2456, %v2393, %v1558
  %v2459 = vsel %vm2456, %v2394, %v1560
  %v2460 = vsel %vm2456, %v2395, %v1562
  %v2461 = vsel %vm2456, %v2396, %v1564
  %v2462 = vsel %vm2456, %v2397, %v1566
  %v2463 = vsel %vm2456, %v2398, %v1568
  %v2464 = vsel %vm2456, %v2399, %v1570
  %v2465 = vsel %vm2456, %v2400, %v1572
  %v2466 = vsel %vm2456, %v2401, %v1574
  %v2467 = vsel %vm2456, %v2402, %v1576
  %v2468 = vsel %vm2456, %v2403, %v1578
  %v2469 = vsel %vm2456, %v2404, %v1580
  %v2470 = vsel %vm2456, %v2405, %v1582
  %v2471 = vsel %vm2456, %v2406, %v1584
  %v2472 = vsel %vm2456, %v2407, %v1586
  %v2473 = vsel %vm2456, %v2408, %v1588
  %v2474 = vsel %vm2456, %v2409, %v1590
  %v2475 = vsel %vm2456, %v2410, %v1592
  %v2476 = vsel %vm2456, %v2411, %v1594
  %v2477 = vsel %vm2456, %v2412, %v1596
  %v2478 = vsel %vm2456, %v2413, %v1598
  %v2479 = vsel %vm2456, %v2414, %v1600
  %v2480 = vsel %vm2456, %v2415, %v1602
  %v2481 = vsel %vm2456, %v2416, %v1604
  %v2482 = vsel %vm2456, %v2417, %v1606
  %v2483 = vsel %vm2456, %v2418, %v1608
  %v2484 = vsel %vm2456, %v2419, %v1610
  %v2485 = vsel %vm2456, %v2420, %v1612
  %v2486 = vsel %vm2456, %v2421, %v1614
  %v2487 = vsel %vm2456, %v2422, %v1616
  %v2488 = vsel %vm2456, %v2423, %v1618
  %v2489 = vsel %vm2456, %v2424, %v1620
  %v2490 = vsel %vm2456, %v2425, %v1622
  %v2491 = vsel %vm2456, %v2426, %v1624
  %v2492 = vsel %vm2456, %v2427, %v1626
  %v2493 = vsel %vm2456, %v2428, %v1628
  %v2494 = vsel %vm2456, %v2429, %v1630
  %v2495 = vsel %vm2456, %v2430, %v1632
  %v2496 = vsel %vm2456, %v2431, %v1634
  %v2497 = vsel %vm2456, %v2432, %v1636
  %v2498 = vsel %vm2456, %v2433, %v1638
  %v2499 = vsel %vm2456, %v2434, %v1640
  %v2500 = vsel %vm2456, %v2435, %v1642
  %v2501 = vsel %vm2456, %v2436, %v1644
  %v2502 = vsel %vm2456, %v2437, %v1646
  %v2503 = vsel %vm2456, %v2438, %v1648
  %v2504 = vsel %vm2456, %v2439, %v1650
  %v2505 = vsel %vm2456, %v2440, %v1652
  %v2506 = vsel %vm2456, %v2441, %v1654
  %v2507 = vsel %vm2456, %v2442, %v1656
  %v2508 = vsel %vm2456, %v2443, %v1658
  %v2509 = vsel %vm2456, %v2444, %v1660
  %v2510 = vsel %vm2456, %v2445, %v1662
  %v2511 = vsel %vm2456, %v2446, %v1664
  %v2512 = vsel %vm2456, %v2447, %v1666
  %v2513 = vsel %vm2456, %v2448, %v1668
  %v2514 = vsel %vm2456, %v2449, %v1670
  %v2515 = vsel %vm2456, %v2450, %v1672
  %v2516 = vsel %vm2456, %v2451, %v1674
  %v2517 = vsel %vm2456, %v2452, %v1676
  %v2518 = vsel %vm2456, %v2453, %v1678
  %v2519 = vsel %vm2456, %v2454, %v1680
  %v2520 = vsel %vm2456, %v2455, %v1682
  %vm2521 = vcmask 228352
  %v2522 = vsel %vm2521, %v2457, %v1748
  %v2523 = vsel %vm2521, %v2458, %v1750
  %v2524 = vsel %vm2521, %v2459, %v1752
  %v2525 = vsel %vm2521, %v2460, %v1754
  %v2526 = vsel %vm2521, %v2461, %v1756
  %v2527 = vsel %vm2521, %v2462, %v1758
  %v2528 = vsel %vm2521, %v2463, %v1760
  %v2529 = vsel %vm2521, %v2464, %v1762
  %v2530 = vsel %vm2521, %v2465, %v1764
  %v2531 = vsel %vm2521, %v2466, %v1766
  %v2532 = vsel %vm2521, %v2467, %v1768
  %v2533 = vsel %vm2521, %v2468, %v1770
  %v2534 = vsel %vm2521, %v2469, %v1772
  %v2535 = vsel %vm2521, %v2470, %v1774
  %v2536 = vsel %vm2521, %v2471, %v1776
  %v2537 = vsel %vm2521, %v2472, %v1778
  %v2538 = vsel %vm2521, %v2473, %v1780
  %v2539 = vsel %vm2521, %v2474, %v1782
  %v2540 = vsel %vm2521, %v2475, %v1784
  %v2541 = vsel %vm2521, %v2476, %v1786
  %v2542 = vsel %vm2521, %v2477, %v1788
  %v2543 = vsel %vm2521, %v2478, %v1790
  %v2544 = vsel %vm2521, %v2479, %v1792
  %v2545 = vsel %vm2521, %v2480, %v1794
  %v2546 = vsel %vm2521, %v2481, %v1796
  %v2547 = vsel %vm2521, %v2482, %v1798
  %v2548 = vsel %vm2521, %v2483, %v1800
  %v2549 = vsel %vm2521, %v2484, %v1802
  %v2550 = vsel %vm2521, %v2485, %v1804
  %v2551 = vsel %vm2521, %v2486, %v1806
  %v2552 = vsel %vm2521, %v2487, %v1808
  %v2553 = vsel %vm2521, %v2488, %v1810
  %v2554 = vsel %vm2521, %v2489, %v1812
  %v2555 = vsel %vm2521, %v2490, %v1814
  %v2556 = vsel %vm2521, %v2491, %v1816
  %v2557 = vsel %vm2521, %v2492, %v1818
  %v2558 = vsel %vm2521, %v2493, %v1820
  %v2559 = vsel %vm2521, %v2494, %v1822
  %v2560 = vsel %vm2521, %v2495, %v1824
  %v2561 = vsel %vm2521, %v2496, %v1826
  %v2562 = vsel %vm2521, %v2497, %v1828
  %v2563 = vsel %vm2521, %v2498, %v1830
  %v2564 = vsel %vm2521, %v2499, %v1832
  %v2565 = vsel %vm2521, %v2500, %v1834
  %v2566 = vsel %vm2521, %v2501, %v1836
  %v2567 = vsel %vm2521, %v2502, %v1838
  %v2568 = vsel %vm2521, %v2503, %v1840
  %v2569 = vsel %vm2521, %v2504, %v1842
  %v2570 = vsel %vm2521, %v2505, %v1844
  %v2571 = vsel %vm2521, %v2506, %v1846
  %v2572 = vsel %vm2521, %v2507, %v1848
  %v2573 = vsel %vm2521, %v2508, %v1850
  %v2574 = vsel %vm2521, %v2509, %v1852
  %v2575 = vsel %vm2521, %v2510, %v1854
  %v2576 = vsel %vm2521, %v2511, %v1856
  %v2577 = vsel %vm2521, %v2512, %v1858
  %v2578 = vsel %vm2521, %v2513, %v1860
  %v2579 = vsel %vm2521, %v2514, %v1862
  %v2580 = vsel %vm2521, %v2515, %v1864
  %v2581 = vsel %vm2521, %v2516, %v1866
  %v2582 = vsel %vm2521, %v2517, %v1868
  %v2583 = vsel %vm2521, %v2518, %v1870
  %v2584 = vsel %vm2521, %v2519, %v1872
  %v2585 = vsel %vm2521, %v2520, %v1874
  %vm2586 = vcmask 261120
  %v2587 = vsel %vm2586, %v2522, %v1940
  %v2588 = vsel %vm2586, %v2523, %v1942
  %v2589 = vsel %vm2586, %v2524, %v1944
  %v2590 = vsel %vm2586, %v2525, %v1946
  %v2591 = vsel %vm2586, %v2526, %v1948
  %v2592 = vsel %vm2586, %v2527, %v1950
  %v2593 = vsel %vm2586, %v2528, %v1952
  %v2594 = vsel %vm2586, %v2529, %v1954
  %v2595 = vsel %vm2586, %v2530, %v1956
  %v2596 = vsel %vm2586, %v2531, %v1958
  %v2597 = vsel %vm2586, %v2532, %v1960
  %v2598 = vsel %vm2586, %v2533, %v1962
  %v2599 = vsel %vm2586, %v2534, %v1964
  %v2600 = vsel %vm2586, %v2535, %v1966
  %v2601 = vsel %vm2586, %v2536, %v1968
  %v2602 = vsel %vm2586, %v2537, %v1970
  %v2603 = vsel %vm2586, %v2538, %v1972
  %v2604 = vsel %vm2586, %v2539, %v1974
  %v2605 = vsel %vm2586, %v2540, %v1976
  %v2606 = vsel %vm2586, %v2541, %v1978
  %v2607 = vsel %vm2586, %v2542, %v1980
  %v2608 = vsel %vm2586, %v2543, %v1982
  %v2609 = vsel %vm2586, %v2544, %v1984
  %v2610 = vsel %vm2586, %v2545, %v1986
  %v2611 = vsel %vm2586, %v2546, %v1988
  %v2612 = vsel %vm2586, %v2547, %v1990
  %v2613 = vsel %vm2586, %v2548, %v1992
  %v2614 = vsel %vm2586, %v2549, %v1994
  %v2615 = vsel %vm2586, %v2550, %v1996
  %v2616 = vsel %vm2586, %v2551, %v1998
  %v2617 = vsel %vm2586, %v2552, %v2000
  %v2618 = vsel %vm2586, %v2553, %v2002
  %v2619 = vsel %vm2586, %v2554, %v2004
  %v2620 = vsel %vm2586, %v2555, %v2006
  %v2621 = vsel %vm2586, %v2556, %v2008
  %v2622 = vsel %vm2586, %v2557, %v2010
  %v2623 = vsel %vm2586, %v2558, %v2012
  %v2624 = vsel %vm2586, %v2559, %v2014
  %v2625 = vsel %vm2586, %v2560, %v2016
  %v2626 = vsel %vm2586, %v2561, %v2018
  %v2627 = vsel %vm2586, %v2562, %v2020
  %v2628 = vsel %vm2586, %v2563, %v2022
  %v2629 = vsel %vm2586, %v2564, %v2024
  %v2630 = vsel %vm2586, %v2565, %v2026
  %v2631 = vsel %vm2586, %v2566, %v2028
  %v2632 = vsel %vm2586, %v2567, %v2030
  %v2633 = vsel %vm2586, %v2568, %v2032
  %v2634 = vsel %vm2586, %v2569, %v2034
  %v2635 = vsel %vm2586, %v2570, %v2036
  %v2636 = vsel %vm2586, %v2571, %v2038
  %v2637 = vsel %vm2586, %v2572, %v2040
  %v2638 = vsel %vm2586, %v2573, %v2042
  %v2639 = vsel %vm2586, %v2574, %v2044
  %v2640 = vsel %vm2586, %v2575, %v2046
  %v2641 = vsel %vm2586, %v2576, %v2048
  %v2642 = vsel %vm2586, %v2577, %v2050
  %v2643 = vsel %vm2586, %v2578, %v2052
  %v2644 = vsel %vm2586, %v2579, %v2054
  %v2645 = vsel %vm2586, %v2580, %v2056
  %v2646 = vsel %vm2586, %v2581, %v2058
  %v2647 = vsel %vm2586, %v2582, %v2060
  %v2648 = vsel %vm2586, %v2583, %v2062
  %v2649 = vsel %vm2586, %v2584, %v2064
  %v2650 = vsel %vm2586, %v2585, %v2066
  %v2651 = vld [vmem:[%s1] sm:$0xff]
  %v2652 = vld [vmem:[%s1 + $0x8] sm:$0xff]
  %v2653 = vld [vmem:[%s1 + $0x10] sm:$0xff]
  %v2654 = vld [vmem:[%s1 + $0x18] sm:$0xff]
  %v2655 = vld [vmem:[%s1 + $0x20] sm:$0xf]
  %vm2656 = vcmask 293888
  %v2658 = vsel %vm2656, %v2587, 0
  %v2661 = vsel %vm2656, %v2588, 0
  %v2664 = vsel %vm2656, %v2589, 0
  %v2667 = vsel %vm2656, %v2590, 0
  %v2670 = vsel %vm2656, %v2591, 0
  %v2673 = vsel %vm2656, %v2592, 0
  %v2676 = vsel %vm2656, %v2593, 0
  %v2679 = vsel %vm2656, %v2594, 0
  %v2682 = vsel %vm2656, %v2595, 0
  %v2685 = vsel %vm2656, %v2596, 0
  %v2688 = vsel %vm2656, %v2597, 0
  %v2691 = vsel %vm2656, %v2598, 0
  %v2694 = vsel %vm2656, %v2599, 0
  %v2697 = vsel %vm2656, %v2600, 0
  %v2700 = vsel %vm2656, %v2601, 0
  %v2703 = vsel %vm2656, %v2602, 0
  %v2706 = vsel %vm2656, %v2603, 0
  %v2709 = vsel %vm2656, %v2604, 0
  %v2712 = vsel %vm2656, %v2605, 0
  %v2715 = vsel %vm2656, %v2606, 0
  %v2718 = vsel %vm2656, %v2607, 0
  %v2721 = vsel %vm2656, %v2608, 0
  %v2724 = vsel %vm2656, %v2609, 0
  %v2727 = vsel %vm2656, %v2610, 0
  %v2730 = vsel %vm2656, %v2611, 0
  %v2733 = vsel %vm2656, %v2612, 0
  %v2736 = vsel %vm2656, %v2613, 0
  %v2739 = vsel %vm2656, %v2614, 0
  %v2742 = vsel %vm2656, %v2615, 0
  %v2745 = vsel %vm2656, %v2616, 0
  %v2748 = vsel %vm2656, %v2617, 0
  %v2751 = vsel %vm2656, %v2618, 0
  %v2754 = vsel %vm2656, %v2619, 0
  %v2757 = vsel %vm2656, %v2620, 0
  %v2760 = vsel %vm2656, %v2621, 0
  %v2763 = vsel %vm2656, %v2622, 0
  %v2766 = vsel %vm2656, %v2623, 0
  %v2769 = vsel %vm2656, %v2624, 0
  %v2772 = vsel %vm2656, %v2625, 0
  %v2775 = vsel %vm2656, %v2626, 0
  %v2778 = vsel %vm2656, %v2627, 0
  %v2781 = vsel %vm2656, %v2628, 0
  %v2784 = vsel %vm2656, %v2629, 0
  %v2787 = vsel %vm2656, %v2630, 0
  %v2790 = vsel %vm2656, %v2631, 0
  %v2793 = vsel %vm2656, %v2632, 0
  %v2796 = vsel %vm2656, %v2633, 0
  %v2799 = vsel %vm2656, %v2634, 0
  %v2802 = vsel %vm2656, %v2635, 0
  %v2805 = vsel %vm2656, %v2636, 0
  %v2808 = vsel %vm2656, %v2637, 0
  %v2811 = vsel %vm2656, %v2638, 0
  %v2814 = vsel %vm2656, %v2639, 0
  %v2817 = vsel %vm2656, %v2640, 0
  %v2820 = vsel %vm2656, %v2641, 0
  %v2823 = vsel %vm2656, %v2642, 0
  %v2826 = vsel %vm2656, %v2643, 0
  %v2829 = vsel %vm2656, %v2644, 0
  %v2832 = vsel %vm2656, %v2645, 0
  %v2835 = vsel %vm2656, %v2646, 0
  %v2838 = vsel %vm2656, %v2647, 0
  %v2841 = vsel %vm2656, %v2648, 0
  %v2844 = vsel %vm2656, %v2649, 0
  %v2847 = vsel %vm2656, %v2650, 0
  %vm2849 = vcmask 1043456
  %v2851 = vsel %vm2849, %v2655, 0
  %2853 = vmatpush.msra.mxu0 0.0
  %2854 = vmatpush.msra.mxu0 0.0
  %2855 = vmatpush.msra.mxu0 0.0
  %2856 = vmatpush.msra.mxu0 0.0
  %2857 = vmatpush.msra.mxu0 0.0
  %2858 = vmatpush.msra.mxu0 0.0
  %2859 = vmatpush.msra.mxu0 0.0
  %2860 = vmatpush.msra.mxu0 0.0
  %2861 = vmatpush.msra.mxu0 0.0
  %2862 = vmatpush.msra.mxu0 0.0
  %2863 = vmatpush.msra.mxu0 0.0
  %2864 = vmatpush.msra.mxu0 %v2851
  %2865 = vmatpush.msra.mxu0 %v2654
  %2866 = vmatpush.msra.mxu0 %v2653
  %2867 = vmatpush.msra.mxu0 %v2652
  %2868 = vmatpush.msra.mxu0 %v2651
  %2869 = vmatmul.f32.gmra.mxu0 %v2658
  %v2870 = vpop.f32.mrf.mxu0
  %v2871 = vadd.f32 0.0, %v2870
  %2872 = vmatmul.f32.gmra.mxu0 %v2661
  %v2873 = vpop.f32.mrf.mxu0
  %v2874 = vadd.f32 0.0, %v2873
  %2875 = vmatmul.f32.gmra.mxu0 %v2664
  %v2876 = vpop.f32.mrf.mxu0
  %v2877 = vadd.f32 0.0, %v2876
  %2878 = vmatmul.f32.gmra.mxu0 %v2667
  %v2879 = vpop.f32.mrf.mxu0
  %v2880 = vadd.f32 0.0, %v2879
  %2881 = vmatmul.f32.gmra.mxu0 %v2670
  %v2882 = vpop.f32.mrf.mxu0
  %v2883 = vadd.f32 0.0, %v2882
  %2884 = vmatmul.f32.gmra.mxu0 %v2673
  %v2885 = vpop.f32.mrf.mxu0
  %v2886 = vadd.f32 0.0, %v2885
  %2887 = vmatmul.f32.gmra.mxu0 %v2676
  %v2888 = vpop.f32.mrf.mxu0
  %v2889 = vadd.f32 0.0, %v2888
  %2890 = vmatmul.f32.gmra.mxu0 %v2679
  %v2891 = vpop.f32.mrf.mxu0
  %v2892 = vadd.f32 0.0, %v2891
  %2893 = vmatmul.f32.gmra.mxu0 %v2682
  %v2894 = vpop.f32.mrf.mxu0
  %v2895 = vadd.f32 0.0, %v2894
  %2896 = vmatmul.f32.gmra.mxu0 %v2685
  %v2897 = vpop.f32.mrf.mxu0
  %v2898 = vadd.f32 0.0, %v2897
  %2899 = vmatmul.f32.gmra.mxu0 %v2688
  %v2900 = vpop.f32.mrf.mxu0
  %v2901 = vadd.f32 0.0, %v2900
  %2902 = vmatmul.f32.gmra.mxu0 %v2691
  %v2903 = vpop.f32.mrf.mxu0
  %v2904 = vadd.f32 0.0, %v2903
  %2905 = vmatmul.f32.gmra.mxu0 %v2694
  %v2906 = vpop.f32.mrf.mxu0
  %v2907 = vadd.f32 0.0, %v2906
  %2908 = vmatmul.f32.gmra.mxu0 %v2697
  %v2909 = vpop.f32.mrf.mxu0
  %v2910 = vadd.f32 0.0, %v2909
  %2911 = vmatmul.f32.gmra.mxu0 %v2700
  %v2912 = vpop.f32.mrf.mxu0
  %v2913 = vadd.f32 0.0, %v2912
  %2914 = vmatmul.f32.gmra.mxu0 %v2703
  %v2915 = vpop.f32.mrf.mxu0
  %v2916 = vadd.f32 0.0, %v2915
  %2917 = vmatmul.f32.gmra.mxu0 %v2706
  %v2918 = vpop.f32.mrf.mxu0
  %v2919 = vadd.f32 0.0, %v2918
  %2920 = vmatmul.f32.gmra.mxu0 %v2709
  %v2921 = vpop.f32.mrf.mxu0
  %v2922 = vadd.f32 0.0, %v2921
  %2923 = vmatmul.f32.gmra.mxu0 %v2712
  %v2924 = vpop.f32.mrf.mxu0
  %v2925 = vadd.f32 0.0, %v2924
  %2926 = vmatmul.f32.gmra.mxu0 %v2715
  %v2927 = vpop.f32.mrf.mxu0
  %v2928 = vadd.f32 0.0, %v2927
  %2929 = vmatmul.f32.gmra.mxu0 %v2718
  %v2930 = vpop.f32.mrf.mxu0
  %v2931 = vadd.f32 0.0, %v2930
  %2932 = vmatmul.f32.gmra.mxu0 %v2721
  %v2933 = vpop.f32.mrf.mxu0
  %v2934 = vadd.f32 0.0, %v2933
  %2935 = vmatmul.f32.gmra.mxu0 %v2724
  %v2936 = vpop.f32.mrf.mxu0
  %v2937 = vadd.f32 0.0, %v2936
  %2938 = vmatmul.f32.gmra.mxu0 %v2727
  %v2939 = vpop.f32.mrf.mxu0
  %v2940 = vadd.f32 0.0, %v2939
  %2941 = vmatmul.f32.gmra.mxu0 %v2730
  %v2942 = vpop.f32.mrf.mxu0
  %v2943 = vadd.f32 0.0, %v2942
  %2944 = vmatmul.f32.gmra.mxu0 %v2733
  %v2945 = vpop.f32.mrf.mxu0
  %v2946 = vadd.f32 0.0, %v2945
  %2947 = vmatmul.f32.gmra.mxu0 %v2736
  %v2948 = vpop.f32.mrf.mxu0
  %v2949 = vadd.f32 0.0, %v2948
  %2950 = vmatmul.f32.gmra.mxu0 %v2739
  %v2951 = vpop.f32.mrf.mxu0
  %v2952 = vadd.f32 0.0, %v2951
  %2953 = vmatmul.f32.gmra.mxu0 %v2742
  %v2954 = vpop.f32.mrf.mxu0
  %v2955 = vadd.f32 0.0, %v2954
  %2956 = vmatmul.f32.gmra.mxu0 %v2745
  %v2957 = vpop.f32.mrf.mxu0
  %v2958 = vadd.f32 0.0, %v2957
  %2959 = vmatmul.f32.gmra.mxu0 %v2748
  %v2960 = vpop.f32.mrf.mxu0
  %v2961 = vadd.f32 0.0, %v2960
  %2962 = vmatmul.f32.gmra.mxu0 %v2751
  %v2963 = vpop.f32.mrf.mxu0
  %v2964 = vadd.f32 0.0, %v2963
  %2965 = vmatmul.f32.gmra.mxu0 %v2754
  %v2966 = vpop.f32.mrf.mxu0
  %v2967 = vadd.f32 0.0, %v2966
  %2968 = vmatmul.f32.gmra.mxu0 %v2757
  %v2969 = vpop.f32.mrf.mxu0
  %v2970 = vadd.f32 0.0, %v2969
  %2971 = vmatmul.f32.gmra.mxu0 %v2760
  %v2972 = vpop.f32.mrf.mxu0
  %v2973 = vadd.f32 0.0, %v2972
  %2974 = vmatmul.f32.gmra.mxu0 %v2763
  %v2975 = vpop.f32.mrf.mxu0
  %v2976 = vadd.f32 0.0, %v2975
  %2977 = vmatmul.f32.gmra.mxu0 %v2766
  %v2978 = vpop.f32.mrf.mxu0
  %v2979 = vadd.f32 0.0, %v2978
  %2980 = vmatmul.f32.gmra.mxu0 %v2769
  %v2981 = vpop.f32.mrf.mxu0
  %v2982 = vadd.f32 0.0, %v2981
  %2983 = vmatmul.f32.gmra.mxu0 %v2772
  %v2984 = vpop.f32.mrf.mxu0
  %v2985 = vadd.f32 0.0, %v2984
  %2986 = vmatmul.f32.gmra.mxu0 %v2775
  %v2987 = vpop.f32.mrf.mxu0
  %v2988 = vadd.f32 0.0, %v2987
  %2989 = vmatmul.f32.gmra.mxu0 %v2778
  %v2990 = vpop.f32.mrf.mxu0
  %v2991 = vadd.f32 0.0, %v2990
  %2992 = vmatmul.f32.gmra.mxu0 %v2781
  %v2993 = vpop.f32.mrf.mxu0
  %v2994 = vadd.f32 0.0, %v2993
  %2995 = vmatmul.f32.gmra.mxu0 %v2784
  %v2996 = vpop.f32.mrf.mxu0
  %v2997 = vadd.f32 0.0, %v2996
  %2998 = vmatmul.f32.gmra.mxu0 %v2787
  %v2999 = vpop.f32.mrf.mxu0
  %v3000 = vadd.f32 0.0, %v2999
  %3001 = vmatmul.f32.gmra.mxu0 %v2790
  %v3002 = vpop.f32.mrf.mxu0
  %v3003 = vadd.f32 0.0, %v3002
  %3004 = vmatmul.f32.gmra.mxu0 %v2793
  %v3005 = vpop.f32.mrf.mxu0
  %v3006 = vadd.f32 0.0, %v3005
  %3007 = vmatmul.f32.gmra.mxu0 %v2796
  %v3008 = vpop.f32.mrf.mxu0
  %v3009 = vadd.f32 0.0, %v3008
  %3010 = vmatmul.f32.gmra.mxu0 %v2799
  %v3011 = vpop.f32.mrf.mxu0
  %v3012 = vadd.f32 0.0, %v3011
  %3013 = vmatmul.f32.gmra.mxu0 %v2802
  %v3014 = vpop.f32.mrf.mxu0
  %v3015 = vadd.f32 0.0, %v3014
  %3016 = vmatmul.f32.gmra.mxu0 %v2805
  %v3017 = vpop.f32.mrf.mxu0
  %v3018 = vadd.f32 0.0, %v3017
  %3019 = vmatmul.f32.gmra.mxu0 %v2808
  %v3020 = vpop.f32.mrf.mxu0
  %v3021 = vadd.f32 0.0, %v3020
  %3022 = vmatmul.f32.gmra.mxu0 %v2811
  %v3023 = vpop.f32.mrf.mxu0
  %v3024 = vadd.f32 0.0, %v3023
  %3025 = vmatmul.f32.gmra.mxu0 %v2814
  %v3026 = vpop.f32.mrf.mxu0
  %v3027 = vadd.f32 0.0, %v3026
  %3028 = vmatmul.f32.gmra.mxu0 %v2817
  %v3029 = vpop.f32.mrf.mxu0
  %v3030 = vadd.f32 0.0, %v3029
  %3031 = vmatmul.f32.gmra.mxu0 %v2820
  %v3032 = vpop.f32.mrf.mxu0
  %v3033 = vadd.f32 0.0, %v3032
  %3034 = vmatmul.f32.gmra.mxu0 %v2823
  %v3035 = vpop.f32.mrf.mxu0
  %v3036 = vadd.f32 0.0, %v3035
  %3037 = vmatmul.f32.gmra.mxu0 %v2826
  %v3038 = vpop.f32.mrf.mxu0
  %v3039 = vadd.f32 0.0, %v3038
  %3040 = vmatmul.f32.gmra.mxu0 %v2829
  %v3041 = vpop.f32.mrf.mxu0
  %v3042 = vadd.f32 0.0, %v3041
  %3043 = vmatmul.f32.gmra.mxu0 %v2832
  %v3044 = vpop.f32.mrf.mxu0
  %v3045 = vadd.f32 0.0, %v3044
  %3046 = vmatmul.f32.gmra.mxu0 %v2835
  %v3047 = vpop.f32.mrf.mxu0
  %v3048 = vadd.f32 0.0, %v3047
  %3049 = vmatmul.f32.gmra.mxu0 %v2838
  %v3050 = vpop.f32.mrf.mxu0
  %v3051 = vadd.f32 0.0, %v3050
  %3052 = vmatmul.f32.gmra.mxu0 %v2841
  %v3053 = vpop.f32.mrf.mxu0
  %v3054 = vadd.f32 0.0, %v3053
  %3055 = vmatmul.f32.gmra.mxu0 %v2844
  %v3056 = vpop.f32.mrf.mxu0
  %v3057 = vadd.f32 0.0, %v3056
  %3058 = vmatmul.f32.gmra.mxu0 %v2847
  %v3059 = vpop.f32.mrf.mxu0
  %v3060 = vadd.f32 0.0, %v3059
  %3061 = vdwg.mxu0
  %v3062 = vsel %vm2196, %v2871, 0.0
  %v3063 = vsel %vm2196, %v2874, 0.0
  %v3064 = vadd.f32 %v3062, %v3063
  %v3065 = vsel %vm2196, %v2877, 0.0
  %v3066 = vadd.f32 %v3064, %v3065
  %v3067 = vsel %vm2196, %v2880, 0.0
  %v3068 = vadd.f32 %v3066, %v3067
  %v3069 = vsel %vm2196, %v2883, 0.0
  %v3070 = vadd.f32 %v3068, %v3069
  %v3071 = vsel %vm2196, %v2886, 0.0
  %v3072 = vadd.f32 %v3070, %v3071
  %v3073 = vsel %vm2196, %v2889, 0.0
  %v3074 = vadd.f32 %v3072, %v3073
  %v3075 = vsel %vm2196, %v2892, 0.0
  %v3076 = vadd.f32 %v3074, %v3075
  %v3077 = vsel %vm2196, %v2895, 0.0
  %v3078 = vadd.f32 %v3076, %v3077
  %v3079 = vsel %vm2196, %v2898, 0.0
  %v3080 = vadd.f32 %v3078, %v3079
  %v3081 = vsel %vm2196, %v2901, 0.0
  %v3082 = vadd.f32 %v3080, %v3081
  %v3083 = vsel %vm2196, %v2904, 0.0
  %v3084 = vadd.f32 %v3082, %v3083
  %v3085 = vsel %vm2196, %v2907, 0.0
  %v3086 = vadd.f32 %v3084, %v3085
  %v3087 = vsel %vm2196, %v2910, 0.0
  %v3088 = vadd.f32 %v3086, %v3087
  %v3089 = vsel %vm2196, %v2913, 0.0
  %v3090 = vadd.f32 %v3088, %v3089
  %v3091 = vsel %vm2196, %v2916, 0.0
  %v3092 = vadd.f32 %v3090, %v3091
  %v3093 = vsel %vm2196, %v2919, 0.0
  %v3094 = vadd.f32 %v3092, %v3093
  %v3095 = vsel %vm2196, %v2922, 0.0
  %v3096 = vadd.f32 %v3094, %v3095
  %v3097 = vsel %vm2196, %v2925, 0.0
  %v3098 = vadd.f32 %v3096, %v3097
  %v3099 = vsel %vm2196, %v2928, 0.0
  %v3100 = vadd.f32 %v3098, %v3099
  %v3101 = vsel %vm2196, %v2931, 0.0
  %v3102 = vadd.f32 %v3100, %v3101
  %v3103 = vsel %vm2196, %v2934, 0.0
  %v3104 = vadd.f32 %v3102, %v3103
  %v3105 = vsel %vm2196, %v2937, 0.0
  %v3106 = vadd.f32 %v3104, %v3105
  %v3107 = vsel %vm2196, %v2940, 0.0
  %v3108 = vadd.f32 %v3106, %v3107
  %v3109 = vsel %vm2196, %v2943, 0.0
  %v3110 = vadd.f32 %v3108, %v3109
  %v3111 = vsel %vm2196, %v2946, 0.0
  %v3112 = vadd.f32 %v3110, %v3111
  %v3113 = vsel %vm2196, %v2949, 0.0
  %v3114 = vadd.f32 %v3112, %v3113
  %v3115 = vsel %vm2196, %v2952, 0.0
  %v3116 = vadd.f32 %v3114, %v3115
  %v3117 = vsel %vm2196, %v2955, 0.0
  %v3118 = vadd.f32 %v3116, %v3117
  %v3119 = vsel %vm2196, %v2958, 0.0
  %v3120 = vadd.f32 %v3118, %v3119
  %v3121 = vsel %vm2196, %v2961, 0.0
  %v3122 = vadd.f32 %v3120, %v3121
  %v3123 = vsel %vm2196, %v2964, 0.0
  %v3124 = vadd.f32 %v3122, %v3123
  %v3125 = vsel %vm2196, %v2967, 0.0
  %v3126 = vadd.f32 %v3124, %v3125
  %v3127 = vsel %vm2196, %v2970, 0.0
  %v3128 = vadd.f32 %v3126, %v3127
  %v3129 = vsel %vm2196, %v2973, 0.0
  %v3130 = vadd.f32 %v3128, %v3129
  %v3131 = vsel %vm2196, %v2976, 0.0
  %v3132 = vadd.f32 %v3130, %v3131
  %v3133 = vsel %vm2196, %v2979, 0.0
  %v3134 = vadd.f32 %v3132, %v3133
  %v3135 = vsel %vm2196, %v2982, 0.0
  %v3136 = vadd.f32 %v3134, %v3135
  %v3137 = vsel %vm2196, %v2985, 0.0
  %v3138 = vadd.f32 %v3136, %v3137
  %v3139 = vsel %vm2196, %v2988, 0.0
  %v3140 = vadd.f32 %v3138, %v3139
  %v3141 = vsel %vm2196, %v2991, 0.0
  %v3142 = vadd.f32 %v3140, %v3141
  %v3143 = vsel %vm2196, %v2994, 0.0
  %v3144 = vadd.f32 %v3142, %v3143
  %v3145 = vsel %vm2196, %v2997, 0.0
  %v3146 = vadd.f32 %v3144, %v3145
  %v3147 = vsel %vm2196, %v3000, 0.0
  %v3148 = vadd.f32 %v3146, %v3147
  %v3149 = vsel %vm2196, %v3003, 0.0
  %v3150 = vadd.f32 %v3148, %v3149
  %v3151 = vsel %vm2196, %v3006, 0.0
  %v3152 = vadd.f32 %v3150, %v3151
  %v3153 = vsel %vm2196, %v3009, 0.0
  %v3154 = vadd.f32 %v3152, %v3153
  %v3155 = vsel %vm2196, %v3012, 0.0
  %v3156 = vadd.f32 %v3154, %v3155
  %v3157 = vsel %vm2196, %v3015, 0.0
  %v3158 = vadd.f32 %v3156, %v3157
  %v3159 = vsel %vm2196, %v3018, 0.0
  %v3160 = vadd.f32 %v3158, %v3159
  %v3161 = vsel %vm2196, %v3021, 0.0
  %v3162 = vadd.f32 %v3160, %v3161
  %v3163 = vsel %vm2196, %v3024, 0.0
  %v3164 = vadd.f32 %v3162, %v3163
  %v3165 = vsel %vm2196, %v3027, 0.0
  %v3166 = vadd.f32 %v3164, %v3165
  %v3167 = vsel %vm2196, %v3030, 0.0
  %v3168 = vadd.f32 %v3166, %v3167
  %v3169 = vsel %vm2196, %v3033, 0.0
  %v3170 = vadd.f32 %v3168, %v3169
  %v3171 = vsel %vm2196, %v3036, 0.0
  %v3172 = vadd.f32 %v3170, %v3171
  %v3173 = vsel %vm2196, %v3039, 0.0
  %v3174 = vadd.f32 %v3172, %v3173
  %v3175 = vsel %vm2196, %v3042, 0.0
  %v3176 = vadd.f32 %v3174, %v3175
  %v3177 = vsel %vm2196, %v3045, 0.0
  %v3178 = vadd.f32 %v3176, %v3177
  %v3179 = vsel %vm2196, %v3048, 0.0
  %v3180 = vadd.f32 %v3178, %v3179
  %v3181 = vsel %vm2196, %v3051, 0.0
  %v3182 = vadd.f32 %v3180, %v3181
  %v3183 = vsel %vm2196, %v3054, 0.0
  %v3184 = vadd.f32 %v3182, %v3183
  %v3185 = vsel %vm2196, %v3057, 0.0
  %v3186 = vadd.f32 %v3184, %v3185
  %v3187 = vsel %vm2196, %v3060, 0.0
  %v3188 = vadd.f32 %v3186, %v3187
  %v3189 = vrot.slane %v3188, 4
  %v3190 = vadd.f32 %v3188, %v3189
  %v3191 = vrot.slane %v3190, 2
  %v3192 = vadd.f32 %v3190, %v3191
  %v3193 = vrot.slane %v3192, 1
  %v3194 = vadd.f32 %v3192, %v3193
  %v3195 = vmul.f32 %v3194, 0.001953125
  %v3196 = vmul.f32 %v2871, %v2871
  %v3197 = vmul.f32 %v2874, %v2874
  %v3198 = vmul.f32 %v2877, %v2877
  %v3199 = vmul.f32 %v2880, %v2880
  %v3200 = vmul.f32 %v2883, %v2883
  %v3201 = vmul.f32 %v2886, %v2886
  %v3202 = vmul.f32 %v2889, %v2889
  %v3203 = vmul.f32 %v2892, %v2892
  %v3204 = vmul.f32 %v2895, %v2895
  %v3205 = vmul.f32 %v2898, %v2898
  %v3206 = vmul.f32 %v2901, %v2901
  %v3207 = vmul.f32 %v2904, %v2904
  %v3208 = vmul.f32 %v2907, %v2907
  %v3209 = vmul.f32 %v2910, %v2910
  %v3210 = vmul.f32 %v2913, %v2913
  %v3211 = vmul.f32 %v2916, %v2916
  %v3212 = vmul.f32 %v2919, %v2919
  %v3213 = vmul.f32 %v2922, %v2922
  %v3214 = vmul.f32 %v2925, %v2925
  %v3215 = vmul.f32 %v2928, %v2928
  %v3216 = vmul.f32 %v2931, %v2931
  %v3217 = vmul.f32 %v2934, %v2934
  %v3218 = vmul.f32 %v2937, %v2937
  %v3219 = vmul.f32 %v2940, %v2940
  %v3220 = vmul.f32 %v2943, %v2943
  %v3221 = vmul.f32 %v2946, %v2946
  %v3222 = vmul.f32 %v2949, %v2949
  %v3223 = vmul.f32 %v2952, %v2952
  %v3224 = vmul.f32 %v2955, %v2955
  %v3225 = vmul.f32 %v2958, %v2958
  %v3226 = vmul.f32 %v2961, %v2961
  %v3227 = vmul.f32 %v2964, %v2964
  %v3228 = vmul.f32 %v2967, %v2967
  %v3229 = vmul.f32 %v2970, %v2970
  %v3230 = vmul.f32 %v2973, %v2973
  %v3231 = vmul.f32 %v2976, %v2976
  %v3232 = vmul.f32 %v2979, %v2979
  %v3233 = vmul.f32 %v2982, %v2982
  %v3234 = vmul.f32 %v2985, %v2985
  %v3235 = vmul.f32 %v2988, %v2988
  %v3236 = vmul.f32 %v2991, %v2991
  %v3237 = vmul.f32 %v2994, %v2994
  %v3238 = vmul.f32 %v2997, %v2997
  %v3239 = vmul.f32 %v3000, %v3000
  %v3240 = vmul.f32 %v3003, %v3003
  %v3241 = vmul.f32 %v3006, %v3006
  %v3242 = vmul.f32 %v3009, %v3009
  %v3243 = vmul.f32 %v3012, %v3012
  %v3244 = vmul.f32 %v3015, %v3015
  %v3245 = vmul.f32 %v3018, %v3018
  %v3246 = vmul.f32 %v3021, %v3021
  %v3247 = vmul.f32 %v3024, %v3024
  %v3248 = vmul.f32 %v3027, %v3027
  %v3249 = vmul.f32 %v3030, %v3030
  %v3250 = vmul.f32 %v3033, %v3033
  %v3251 = vmul.f32 %v3036, %v3036
  %v3252 = vmul.f32 %v3039, %v3039
  %v3253 = vmul.f32 %v3042, %v3042
  %v3254 = vmul.f32 %v3045, %v3045
  %v3255 = vmul.f32 %v3048, %v3048
  %v3256 = vmul.f32 %v3051, %v3051
  %v3257 = vmul.f32 %v3054, %v3054
  %v3258 = vmul.f32 %v3057, %v3057
  %v3259 = vmul.f32 %v3060, %v3060
  %v3260 = vsel %vm2196, %v3196, 0.0
  %v3261 = vsel %vm2196, %v3197, 0.0
  %v3262 = vadd.f32 %v3260, %v3261
  %v3263 = vsel %vm2196, %v3198, 0.0
  %v3264 = vadd.f32 %v3262, %v3263
  %v3265 = vsel %vm2196, %v3199, 0.0
  %v3266 = vadd.f32 %v3264, %v3265
  %v3267 = vsel %vm2196, %v3200, 0.0
  %v3268 = vadd.f32 %v3266, %v3267
  %v3269 = vsel %vm2196, %v3201, 0.0
  %v3270 = vadd.f32 %v3268, %v3269
  %v3271 = vsel %vm2196, %v3202, 0.0
  %v3272 = vadd.f32 %v3270, %v3271
  %v3273 = vsel %vm2196, %v3203, 0.0
  %v3274 = vadd.f32 %v3272, %v3273
  %v3275 = vsel %vm2196, %v3204, 0.0
  %v3276 = vadd.f32 %v3274, %v3275
  %v3277 = vsel %vm2196, %v3205, 0.0
  %v3278 = vadd.f32 %v3276, %v3277
  %v3279 = vsel %vm2196, %v3206, 0.0
  %v3280 = vadd.f32 %v3278, %v3279
  %v3281 = vsel %vm2196, %v3207, 0.0
  %v3282 = vadd.f32 %v3280, %v3281
  %v3283 = vsel %vm2196, %v3208, 0.0
  %v3284 = vadd.f32 %v3282, %v3283
  %v3285 = vsel %vm2196, %v3209, 0.0
  %v3286 = vadd.f32 %v3284, %v3285
  %v3287 = vsel %vm2196, %v3210, 0.0
  %v3288 = vadd.f32 %v3286, %v3287
  %v3289 = vsel %vm2196, %v3211, 0.0
  %v3290 = vadd.f32 %v3288, %v3289
  %v3291 = vsel %vm2196, %v3212, 0.0
  %v3292 = vadd.f32 %v3290, %v3291
  %v3293 = vsel %vm2196, %v3213, 0.0
  %v3294 = vadd.f32 %v3292, %v3293
  %v3295 = vsel %vm2196, %v3214, 0.0
  %v3296 = vadd.f32 %v3294, %v3295
  %v3297 = vsel %vm2196, %v3215, 0.0
  %v3298 = vadd.f32 %v3296, %v3297
  %v3299 = vsel %vm2196, %v3216, 0.0
  %v3300 = vadd.f32 %v3298, %v3299
  %v3301 = vsel %vm2196, %v3217, 0.0
  %v3302 = vadd.f32 %v3300, %v3301
  %v3303 = vsel %vm2196, %v3218, 0.0
  %v3304 = vadd.f32 %v3302, %v3303
  %v3305 = vsel %vm2196, %v3219, 0.0
  %v3306 = vadd.f32 %v3304, %v3305
  %v3307 = vsel %vm2196, %v3220, 0.0
  %v3308 = vadd.f32 %v3306, %v3307
  %v3309 = vsel %vm2196, %v3221, 0.0
  %v3310 = vadd.f32 %v3308, %v3309
  %v3311 = vsel %vm2196, %v3222, 0.0
  %v3312 = vadd.f32 %v3310, %v3311
  %v3313 = vsel %vm2196, %v3223, 0.0
  %v3314 = vadd.f32 %v3312, %v3313
  %v3315 = vsel %vm2196, %v3224, 0.0
  %v3316 = vadd.f32 %v3314, %v3315
  %v3317 = vsel %vm2196, %v3225, 0.0
  %v3318 = vadd.f32 %v3316, %v3317
  %v3319 = vsel %vm2196, %v3226, 0.0
  %v3320 = vadd.f32 %v3318, %v3319
  %v3321 = vsel %vm2196, %v3227, 0.0
  %v3322 = vadd.f32 %v3320, %v3321
  %v3323 = vsel %vm2196, %v3228, 0.0
  %v3324 = vadd.f32 %v3322, %v3323
  %v3325 = vsel %vm2196, %v3229, 0.0
  %v3326 = vadd.f32 %v3324, %v3325
  %v3327 = vsel %vm2196, %v3230, 0.0
  %v3328 = vadd.f32 %v3326, %v3327
  %v3329 = vsel %vm2196, %v3231, 0.0
  %v3330 = vadd.f32 %v3328, %v3329
  %v3331 = vsel %vm2196, %v3232, 0.0
  %v3332 = vadd.f32 %v3330, %v3331
  %v3333 = vsel %vm2196, %v3233, 0.0
  %v3334 = vadd.f32 %v3332, %v3333
  %v3335 = vsel %vm2196, %v3234, 0.0
  %v3336 = vadd.f32 %v3334, %v3335
  %v3337 = vsel %vm2196, %v3235, 0.0
  %v3338 = vadd.f32 %v3336, %v3337
  %v3339 = vsel %vm2196, %v3236, 0.0
  %v3340 = vadd.f32 %v3338, %v3339
  %v3341 = vsel %vm2196, %v3237, 0.0
  %v3342 = vadd.f32 %v3340, %v3341
  %v3343 = vsel %vm2196, %v3238, 0.0
  %v3344 = vadd.f32 %v3342, %v3343
  %v3345 = vsel %vm2196, %v3239, 0.0
  %v3346 = vadd.f32 %v3344, %v3345
  %v3347 = vsel %vm2196, %v3240, 0.0
  %v3348 = vadd.f32 %v3346, %v3347
  %v3349 = vsel %vm2196, %v3241, 0.0
  %v3350 = vadd.f32 %v3348, %v3349
  %v3351 = vsel %vm2196, %v3242, 0.0
  %v3352 = vadd.f32 %v3350, %v3351
  %v3353 = vsel %vm2196, %v3243, 0.0
  %v3354 = vadd.f32 %v3352, %v3353
  %v3355 = vsel %vm2196, %v3244, 0.0
  %v3356 = vadd.f32 %v3354, %v3355
  %v3357 = vsel %vm2196, %v3245, 0.0
  %v3358 = vadd.f32 %v3356, %v3357
  %v3359 = vsel %vm2196, %v3246, 0.0
  %v3360 = vadd.f32 %v3358, %v3359
  %v3361 = vsel %vm2196, %v3247, 0.0
  %v3362 = vadd.f32 %v3360, %v3361
  %v3363 = vsel %vm2196, %v3248, 0.0
  %v3364 = vadd.f32 %v3362, %v3363
  %v3365 = vsel %vm2196, %v3249, 0.0
  %v3366 = vadd.f32 %v3364, %v3365
  %v3367 = vsel %vm2196, %v3250, 0.0
  %v3368 = vadd.f32 %v3366, %v3367
  %v3369 = vsel %vm2196, %v3251, 0.0
  %v3370 = vadd.f32 %v3368, %v3369
  %v3371 = vsel %vm2196, %v3252, 0.0
  %v3372 = vadd.f32 %v3370, %v3371
  %v3373 = vsel %vm2196, %v3253, 0.0
  %v3374 = vadd.f32 %v3372, %v3373
  %v3375 = vsel %vm2196, %v3254, 0.0
  %v3376 = vadd.f32 %v3374, %v3375
  %v3377 = vsel %vm2196, %v3255, 0.0
  %v3378 = vadd.f32 %v3376, %v3377
  %v3379 = vsel %vm2196, %v3256, 0.0
  %v3380 = vadd.f32 %v3378, %v3379
  %v3381 = vsel %vm2196, %v3257, 0.0
  %v3382 = vadd.f32 %v3380, %v3381
  %v3383 = vsel %vm2196, %v3258, 0.0
  %v3384 = vadd.f32 %v3382, %v3383
  %v3385 = vsel %vm2196, %v3259, 0.0
  %v3386 = vadd.f32 %v3384, %v3385
  %v3387 = vrot.slane %v3386, 4
  %v3388 = vadd.f32 %v3386, %v3387
  %v3389 = vrot.slane %v3388, 2
  %v3390 = vadd.f32 %v3388, %v3389
  %v3391 = vrot.slane %v3390, 1
  %v3392 = vadd.f32 %v3390, %v3391
  %v3393 = vmul.f32 %v3392, 0.001953125
  %v3394 = vmul.f32 %v3195, %v3195
  %v3395 = vsub.f32 %v3393, %v3394
  %v3396 = vld [vmem:[%s2] sm:$0x1]
  %v3397 = vadd.f32 %v3395, 1e-05
  %v3398 = vrsqrt.pop %v3397
  %v3399 = vmul.f32 %v3398, %v3397
  %v3400 = vmul.f32 %v3399, %v3398
  %v3401 = vmul.f32 0.5, %v3400
  %v3402 = vsub.f32 1.5, %v3401
  %v3403 = vmul.f32 %v3398, %v3402
  %vm3404 = vweird.f32 %v3397
  %vm3405 = vweird.f32 %v3398
  %vm3406 = vmor %vm3404, %vm3405
  %v3407 = vsel %vm3406, %v3398, %v3403
  %v3408 = vmul.f32 %v3396, %v3407
  %v3409 = vld [vmem:[%s3] sm:$0x1]
  %v3410 = vmul.f32 %v3195, %v3408
  %v3411 = vsub.f32 %v3409, %v3410
  %v3413 = vperm.slane %v3408, 0
  %v3415 = vmul.f32 %v2871, %v3413
  %v3416 = vmul.f32 %v2874, %v3413
  %v3417 = vmul.f32 %v2877, %v3413
  %v3418 = vmul.f32 %v2880, %v3413
  %v3419 = vmul.f32 %v2883, %v3413
  %v3420 = vmul.f32 %v2886, %v3413
  %v3421 = vmul.f32 %v2889, %v3413
  %v3422 = vmul.f32 %v2892, %v3413
  %v3423 = vmul.f32 %v2895, %v3413
  %v3424 = vmul.f32 %v2898, %v3413
  %v3425 = vmul.f32 %v2901, %v3413
  %v3426 = vmul.f32 %v2904, %v3413
  %v3427 = vmul.f32 %v2907, %v3413
  %v3428 = vmul.f32 %v2910, %v3413
  %v3429 = vmul.f32 %v2913, %v3413
  %v3430 = vmul.f32 %v2916, %v3413
  %v3431 = vmul.f32 %v2919, %v3413
  %v3432 = vmul.f32 %v2922, %v3413
  %v3433 = vmul.f32 %v2925, %v3413
  %v3434 = vmul.f32 %v2928, %v3413
  %v3435 = vmul.f32 %v2931, %v3413
  %v3436 = vmul.f32 %v2934, %v3413
  %v3437 = vmul.f32 %v2937, %v3413
  %v3438 = vmul.f32 %v2940, %v3413
  %v3439 = vmul.f32 %v2943, %v3413
  %v3440 = vmul.f32 %v2946, %v3413
  %v3441 = vmul.f32 %v2949, %v3413
  %v3442 = vmul.f32 %v2952, %v3413
  %v3443 = vmul.f32 %v2955, %v3413
  %v3444 = vmul.f32 %v2958, %v3413
  %v3445 = vmul.f32 %v2961, %v3413
  %v3446 = vmul.f32 %v2964, %v3413
  %v3447 = vmul.f32 %v2967, %v3413
  %v3448 = vmul.f32 %v2970, %v3413
  %v3449 = vmul.f32 %v2973, %v3413
  %v3450 = vmul.f32 %v2976, %v3413
  %v3451 = vmul.f32 %v2979, %v3413
  %v3452 = vmul.f32 %v2982, %v3413
  %v3453 = vmul.f32 %v2985, %v3413
  %v3454 = vmul.f32 %v2988, %v3413
  %v3455 = vmul.f32 %v2991, %v3413
  %v3456 = vmul.f32 %v2994, %v3413
  %v3457 = vmul.f32 %v2997, %v3413
  %v3458 = vmul.f32 %v3000, %v3413
  %v3459 = vmul.f32 %v3003, %v3413
  %v3460 = vmul.f32 %v3006, %v3413
  %v3461 = vmul.f32 %v3009, %v3413
  %v3462 = vmul.f32 %v3012, %v3413
  %v3463 = vmul.f32 %v3015, %v3413
  %v3464 = vmul.f32 %v3018, %v3413
  %v3465 = vmul.f32 %v3021, %v3413
  %v3466 = vmul.f32 %v3024, %v3413
  %v3467 = vmul.f32 %v3027, %v3413
  %v3468 = vmul.f32 %v3030, %v3413
  %v3469 = vmul.f32 %v3033, %v3413
  %v3470 = vmul.f32 %v3036, %v3413
  %v3471 = vmul.f32 %v3039, %v3413
  %v3472 = vmul.f32 %v3042, %v3413
  %v3473 = vmul.f32 %v3045, %v3413
  %v3474 = vmul.f32 %v3048, %v3413
  %v3475 = vmul.f32 %v3051, %v3413
  %v3476 = vmul.f32 %v3054, %v3413
  %v3477 = vmul.f32 %v3057, %v3413
  %v3478 = vmul.f32 %v3060, %v3413
  %v3480 = vperm.slane %v3411, 0
  %v3482 = vadd.f32 %v3415, %v3480
  %v3483 = vadd.f32 %v3416, %v3480
  %v3484 = vadd.f32 %v3417, %v3480
  %v3485 = vadd.f32 %v3418, %v3480
  %v3486 = vadd.f32 %v3419, %v3480
  %v3487 = vadd.f32 %v3420, %v3480
  %v3488 = vadd.f32 %v3421, %v3480
  %v3489 = vadd.f32 %v3422, %v3480
  %v3490 = vadd.f32 %v3423, %v3480
  %v3491 = vadd.f32 %v3424, %v3480
  %v3492 = vadd.f32 %v3425, %v3480
  %v3493 = vadd.f32 %v3426, %v3480
  %v3494 = vadd.f32 %v3427, %v3480
  %v3495 = vadd.f32 %v3428, %v3480
  %v3496 = vadd.f32 %v3429, %v3480
  %v3497 = vadd.f32 %v3430, %v3480
  %v3498 = vadd.f32 %v3431, %v3480
  %v3499 = vadd.f32 %v3432, %v3480
  %v3500 = vadd.f32 %v3433, %v3480
  %v3501 = vadd.f32 %v3434, %v3480
  %v3502 = vadd.f32 %v3435, %v3480
  %v3503 = vadd.f32 %v3436, %v3480
  %v3504 = vadd.f32 %v3437, %v3480
  %v3505 = vadd.f32 %v3438, %v3480
  %v3506 = vadd.f32 %v3439, %v3480
  %v3507 = vadd.f32 %v3440, %v3480
  %v3508 = vadd.f32 %v3441, %v3480
  %v3509 = vadd.f32 %v3442, %v3480
  %v3510 = vadd.f32 %v3443, %v3480
  %v3511 = vadd.f32 %v3444, %v3480
  %v3512 = vadd.f32 %v3445, %v3480
  %v3513 = vadd.f32 %v3446, %v3480
  %v3514 = vadd.f32 %v3447, %v3480
  %v3515 = vadd.f32 %v3448, %v3480
  %v3516 = vadd.f32 %v3449, %v3480
  %v3517 = vadd.f32 %v3450, %v3480
  %v3518 = vadd.f32 %v3451, %v3480
  %v3519 = vadd.f32 %v3452, %v3480
  %v3520 = vadd.f32 %v3453, %v3480
  %v3521 = vadd.f32 %v3454, %v3480
  %v3522 = vadd.f32 %v3455, %v3480
  %v3523 = vadd.f32 %v3456, %v3480
  %v3524 = vadd.f32 %v3457, %v3480
  %v3525 = vadd.f32 %v3458, %v3480
  %v3526 = vadd.f32 %v3459, %v3480
  %v3527 = vadd.f32 %v3460, %v3480
  %v3528 = vadd.f32 %v3461, %v3480
  %v3529 = vadd.f32 %v3462, %v3480
  %v3530 = vadd.f32 %v3463, %v3480
  %v3531 = vadd.f32 %v3464, %v3480
  %v3532 = vadd.f32 %v3465, %v3480
  %v3533 = vadd.f32 %v3466, %v3480
  %v3534 = vadd.f32 %v3467, %v3480
  %v3535 = vadd.f32 %v3468, %v3480
  %v3536 = vadd.f32 %v3469, %v3480
  %v3537 = vadd.f32 %v3470, %v3480
  %v3538 = vadd.f32 %v3471, %v3480
  %v3539 = vadd.f32 %v3472, %v3480
  %v3540 = vadd.f32 %v3473, %v3480
  %v3541 = vadd.f32 %v3474, %v3480
  %v3542 = vadd.f32 %v3475, %v3480
  %v3543 = vadd.f32 %v3476, %v3480
  %v3544 = vadd.f32 %v3477, %v3480
  %v3545 = vadd.f32 %v3478, %v3480
  %vm3546 = vcmp.gt.f32.partialorder %v3482, 0.0
  %vm3547 = vcmp.gt.f32.partialorder %v3483, 0.0
  %vm3548 = vcmp.gt.f32.partialorder %v3484, 0.0
  %vm3549 = vcmp.gt.f32.partialorder %v3485, 0.0
  %vm3550 = vcmp.gt.f32.partialorder %v3486, 0.0
  %vm3551 = vcmp.gt.f32.partialorder %v3487, 0.0
  %vm3552 = vcmp.gt.f32.partialorder %v3488, 0.0
  %vm3553 = vcmp.gt.f32.partialorder %v3489, 0.0
  %vm3554 = vcmp.gt.f32.partialorder %v3490, 0.0
  %vm3555 = vcmp.gt.f32.partialorder %v3491, 0.0
  %vm3556 = vcmp.gt.f32.partialorder %v3492, 0.0
  %vm3557 = vcmp.gt.f32.partialorder %v3493, 0.0
  %vm3558 = vcmp.gt.f32.partialorder %v3494, 0.0
  %vm3559 = vcmp.gt.f32.partialorder %v3495, 0.0
  %vm3560 = vcmp.gt.f32.partialorder %v3496, 0.0
  %vm3561 = vcmp.gt.f32.partialorder %v3497, 0.0
  %vm3562 = vcmp.gt.f32.partialorder %v3498, 0.0
  %vm3563 = vcmp.gt.f32.partialorder %v3499, 0.0
  %vm3564 = vcmp.gt.f32.partialorder %v3500, 0.0
  %vm3565 = vcmp.gt.f32.partialorder %v3501, 0.0
  %vm3566 = vcmp.gt.f32.partialorder %v3502, 0.0
  %vm3567 = vcmp.gt.f32.partialorder %v3503, 0.0
  %vm3568 = vcmp.gt.f32.partialorder %v3504, 0.0
  %vm3569 = vcmp.gt.f32.partialorder %v3505, 0.0
  %vm3570 = vcmp.gt.f32.partialorder %v3506, 0.0
  %vm3571 = vcmp.gt.f32.partialorder %v3507, 0.0
  %vm3572 = vcmp.gt.f32.partialorder %v3508, 0.0
  %vm3573 = vcmp.gt.f32.partialorder %v3509, 0.0
  %vm3574 = vcmp.gt.f32.partialorder %v3510, 0.0
  %vm3575 = vcmp.gt.f32.partialorder %v3511, 0.0
  %vm3576 = vcmp.gt.f32.partialorder %v3512, 0.0
  %vm3577 = vcmp.gt.f32.partialorder %v3513, 0.0
  %vm3578 = vcmp.gt.f32.partialorder %v3514, 0.0
  %vm3579 = vcmp.gt.f32.partialorder %v3515, 0.0
  %vm3580 = vcmp.gt.f32.partialorder %v3516, 0.0
  %vm3581 = vcmp.gt.f32.partialorder %v3517, 0.0
  %vm3582 = vcmp.gt.f32.partialorder %v3518, 0.0
  %vm3583 = vcmp.gt.f32.partialorder %v3519, 0.0
  %vm3584 = vcmp.gt.f32.partialorder %v3520, 0.0
  %vm3585 = vcmp.gt.f32.partialorder %v3521, 0.0
  %vm3586 = vcmp.gt.f32.partialorder %v3522, 0.0
  %vm3587 = vcmp.gt.f32.partialorder %v3523, 0.0
  %vm3588 = vcmp.gt.f32.partialorder %v3524, 0.0
  %vm3589 = vcmp.gt.f32.partialorder %v3525, 0.0
  %vm3590 = vcmp.gt.f32.partialorder %v3526, 0.0
  %vm3591 = vcmp.gt.f32.partialorder %v3527, 0.0
  %vm3592 = vcmp.gt.f32.partialorder %v3528, 0.0
  %vm3593 = vcmp.gt.f32.partialorder %v3529, 0.0
  %vm3594 = vcmp.gt.f32.partialorder %v3530, 0.0
  %vm3595 = vcmp.gt.f32.partialorder %v3531, 0.0
  %vm3596 = vcmp.gt.f32.partialorder %v3532, 0.0
  %vm3597 = vcmp.gt.f32.partialorder %v3533, 0.0
  %vm3598 = vcmp.gt.f32.partialorder %v3534, 0.0
  %vm3599 = vcmp.gt.f32.partialorder %v3535, 0.0
  %vm3600 = vcmp.gt.f32.partialorder %v3536, 0.0
  %vm3601 = vcmp.gt.f32.partialorder %v3537, 0.0
  %vm3602 = vcmp.gt.f32.partialorder %v3538, 0.0
  %vm3603 = vcmp.gt.f32.partialorder %v3539, 0.0
  %vm3604 = vcmp.gt.f32.partialorder %v3540, 0.0
  %vm3605 = vcmp.gt.f32.partialorder %v3541, 0.0
  %vm3606 = vcmp.gt.f32.partialorder %v3542, 0.0
  %vm3607 = vcmp.gt.f32.partialorder %v3543, 0.0
  %vm3608 = vcmp.gt.f32.partialorder %v3544, 0.0
  %vm3609 = vcmp.gt.f32.partialorder %v3545, 0.0
  %v3610 = vmul.f32 %v3482, 0.01
  %v3611 = vmul.f32 %v3483, 0.01
  %v3612 = vmul.f32 %v3484, 0.01
  %v3613 = vmul.f32 %v3485, 0.01
  %v3614 = vmul.f32 %v3486, 0.01
  %v3615 = vmul.f32 %v3487, 0.01
  %v3616 = vmul.f32 %v3488, 0.01
  %v3617 = vmul.f32 %v3489, 0.01
  %v3618 = vmul.f32 %v3490, 0.01
  %v3619 = vmul.f32 %v3491, 0.01
  %v3620 = vmul.f32 %v3492, 0.01
  %v3621 = vmul.f32 %v3493, 0.01
  %v3622 = vmul.f32 %v3494, 0.01
  %v3623 = vmul.f32 %v3495, 0.01
  %v3624 = vmul.f32 %v3496, 0.01
  %v3625 = vmul.f32 %v3497, 0.01
  %v3626 = vmul.f32 %v3498, 0.01
  %v3627 = vmul.f32 %v3499, 0.01
  %v3628 = vmul.f32 %v3500, 0.01
  %v3629 = vmul.f32 %v3501, 0.01
  %v3630 = vmul.f32 %v3502, 0.01
  %v3631 = vmul.f32 %v3503, 0.01
  %v3632 = vmul.f32 %v3504, 0.01
  %v3633 = vmul.f32 %v3505, 0.01
  %v3634 = vmul.f32 %v3506, 0.01
  %v3635 = vmul.f32 %v3507, 0.01
  %v3636 = vmul.f32 %v3508, 0.01
  %v3637 = vmul.f32 %v3509, 0.01
  %v3638 = vmul.f32 %v3510, 0.01
  %v3639 = vmul.f32 %v3511, 0.01
  %v3640 = vmul.f32 %v3512, 0.01
  %v3641 = vmul.f32 %v3513, 0.01
  %v3642 = vmul.f32 %v3514, 0.01
  %v3643 = vmul.f32 %v3515, 0.01
  %v3644 = vmul.f32 %v3516, 0.01
  %v3645 = vmul.f32 %v3517, 0.01
  %v3646 = vmul.f32 %v3518, 0.01
  %v3647 = vmul.f32 %v3519, 0.01
  %v3648 = vmul.f32 %v3520, 0.01
  %v3649 = vmul.f32 %v3521, 0.01
  %v3650 = vmul.f32 %v3522, 0.01
  %v3651 = vmul.f32 %v3523, 0.01
  %v3652 = vmul.f32 %v3524, 0.01
  %v3653 = vmul.f32 %v3525, 0.01
  %v3654 = vmul.f32 %v3526, 0.01
  %v3655 = vmul.f32 %v3527, 0.01
  %v3656 = vmul.f32 %v3528, 0.01
  %v3657 = vmul.f32 %v3529, 0.01
  %v3658 = vmul.f32 %v3530, 0.01
  %v3659 = vmul.f32 %v3531, 0.01
  %v3660 = vmul.f32 %v3532, 0.01
  %v3661 = vmul.f32 %v3533, 0.01
  %v3662 = vmul.f32 %v3534, 0.01
  %v3663 = vmul.f32 %v3535, 0.01
  %v3664 = vmul.f32 %v3536, 0.01
  %v3665 = vmul.f32 %v3537, 0.01
  %v3666 = vmul.f32 %v3538, 0.01
  %v3667 = vmul.f32 %v3539, 0.01
  %v3668 = vmul.f32 %v3540, 0.01
  %v3669 = vmul.f32 %v3541, 0.01
  %v3670 = vmul.f32 %v3542, 0.01
  %v3671 = vmul.f32 %v3543, 0.01
  %v3672 = vmul.f32 %v3544, 0.01
  %v3673 = vmul.f32 %v3545, 0.01
  %v3674 = vsel %vm3546, %v3482, %v3610
  %v3675 = vsel %vm3547, %v3483, %v3611
  %v3676 = vsel %vm3548, %v3484, %v3612
  %v3677 = vsel %vm3549, %v3485, %v3613
  %v3678 = vsel %vm3550, %v3486, %v3614
  %v3679 = vsel %vm3551, %v3487, %v3615
  %v3680 = vsel %vm3552, %v3488, %v3616
  %v3681 = vsel %vm3553, %v3489, %v3617
  %v3682 = vsel %vm3554, %v3490, %v3618
  %v3683 = vsel %vm3555, %v3491, %v3619
  %v3684 = vsel %vm3556, %v3492, %v3620
  %v3685 = vsel %vm3557, %v3493, %v3621
  %v3686 = vsel %vm3558, %v3494, %v3622
  %v3687 = vsel %vm3559, %v3495, %v3623
  %v3688 = vsel %vm3560, %v3496, %v3624
  %v3689 = vsel %vm3561, %v3497, %v3625
  %v3690 = vsel %vm3562, %v3498, %v3626
  %v3691 = vsel %vm3563, %v3499, %v3627
  %v3692 = vsel %vm3564, %v3500, %v3628
  %v3693 = vsel %vm3565, %v3501, %v3629
  %v3694 = vsel %vm3566, %v3502, %v3630
  %v3695 = vsel %vm3567, %v3503, %v3631
  %v3696 = vsel %vm3568, %v3504, %v3632
  %v3697 = vsel %vm3569, %v3505, %v3633
  %v3698 = vsel %vm3570, %v3506, %v3634
  %v3699 = vsel %vm3571, %v3507, %v3635
  %v3700 = vsel %vm3572, %v3508, %v3636
  %v3701 = vsel %vm3573, %v3509, %v3637
  %v3702 = vsel %vm3574, %v3510, %v3638
  %v3703 = vsel %vm3575, %v3511, %v3639
  %v3704 = vsel %vm3576, %v3512, %v3640
  %v3705 = vsel %vm3577, %v3513, %v3641
  %v3706 = vsel %vm3578, %v3514, %v3642
  %v3707 = vsel %vm3579, %v3515, %v3643
  %v3708 = vsel %vm3580, %v3516, %v3644
  %v3709 = vsel %vm3581, %v3517, %v3645
  %v3710 = vsel %vm3582, %v3518, %v3646
  %v3711 = vsel %vm3583, %v3519, %v3647
  %v3712 = vsel %vm3584, %v3520, %v3648
  %v3713 = vsel %vm3585, %v3521, %v3649
  %v3714 = vsel %vm3586, %v3522, %v3650
  %v3715 = vsel %vm3587, %v3523, %v3651
  %v3716 = vsel %vm3588, %v3524, %v3652
  %v3717 = vsel %vm3589, %v3525, %v3653
  %v3718 = vsel %vm3590, %v3526, %v3654
  %v3719 = vsel %vm3591, %v3527, %v3655
  %v3720 = vsel %vm3592, %v3528, %v3656
  %v3721 = vsel %vm3593, %v3529, %v3657
  %v3722 = vsel %vm3594, %v3530, %v3658
  %v3723 = vsel %vm3595, %v3531, %v3659
  %v3724 = vsel %vm3596, %v3532, %v3660
  %v3725 = vsel %vm3597, %v3533, %v3661
  %v3726 = vsel %vm3598, %v3534, %v3662
  %v3727 = vsel %vm3599, %v3535, %v3663
  %v3728 = vsel %vm3600, %v3536, %v3664
  %v3729 = vsel %vm3601, %v3537, %v3665
  %v3730 = vsel %vm3602, %v3538, %v3666
  %v3731 = vsel %vm3603, %v3539, %v3667
  %v3732 = vsel %vm3604, %v3540, %v3668
  %v3733 = vsel %vm3605, %v3541, %v3669
  %v3734 = vsel %vm3606, %v3542, %v3670
  %v3735 = vsel %vm3607, %v3543, %v3671
  %v3736 = vsel %vm3608, %v3544, %v3672
  %v3737 = vsel %vm3609, %v3545, %v3673
  %3738 = vst.msk [vmem:[%s4] sm:$0xff] %vm2196, %v3674
  %3739 = vst.msk [vmem:[%s4 + $0x8] sm:$0xff] %vm2196, %v3675
  %3740 = vst.msk [vmem:[%s4 + $0x10] sm:$0xff] %vm2196, %v3676
  %3741 = vst.msk [vmem:[%s4 + $0x18] sm:$0xff] %vm2196, %v3677
  %3742 = vst.msk [vmem:[%s4 + $0x20] sm:$0xff] %vm2196, %v3678
  %3743 = vst.msk [vmem:[%s4 + $0x28] sm:$0xff] %vm2196, %v3679
  %3744 = vst.msk [vmem:[%s4 + $0x30] sm:$0xff] %vm2196, %v3680
  %3745 = vst.msk [vmem:[%s4 + $0x38] sm:$0xff] %vm2196, %v3681
  %3746 = vst.msk [vmem:[%s4 + $0x40] sm:$0xff] %vm2196, %v3682
  %3747 = vst.msk [vmem:[%s4 + $0x48] sm:$0xff] %vm2196, %v3683
  %3748 = vst.msk [vmem:[%s4 + $0x50] sm:$0xff] %vm2196, %v3684
  %3749 = vst.msk [vmem:[%s4 + $0x58] sm:$0xff] %vm2196, %v3685
  %3750 = vst.msk [vmem:[%s4 + $0x60] sm:$0xff] %vm2196, %v3686
  %3751 = vst.msk [vmem:[%s4 + $0x68] sm:$0xff] %vm2196, %v3687
  %3752 = vst.msk [vmem:[%s4 + $0x70] sm:$0xff] %vm2196, %v3688
  %3753 = vst.msk [vmem:[%s4 + $0x78] sm:$0xff] %vm2196, %v3689
  %3754 = vst.msk [vmem:[%s4 + $0x80] sm:$0xff] %vm2196, %v3690
  %3755 = vst.msk [vmem:[%s4 + $0x88] sm:$0xff] %vm2196, %v3691
  %3756 = vst.msk [vmem:[%s4 + $0x90] sm:$0xff] %vm2196, %v3692
  %3757 = vst.msk [vmem:[%s4 + $0x98] sm:$0xff] %vm2196, %v3693
  %3758 = vst.msk [vmem:[%s4 + $0xa0] sm:$0xff] %vm2196, %v3694
  %3759 = vst.msk [vmem:[%s4 + $0xa8] sm:$0xff] %vm2196, %v3695
  %3760 = vst.msk [vmem:[%s4 + $0xb0] sm:$0xff] %vm2196, %v3696
  %3761 = vst.msk [vmem:[%s4 + $0xb8] sm:$0xff] %vm2196, %v3697
  %3762 = vst.msk [vmem:[%s4 + $0xc0] sm:$0xff] %vm2196, %v3698
  %3763 = vst.msk [vmem:[%s4 + $0xc8] sm:$0xff] %vm2196, %v3699
  %3764 = vst.msk [vmem:[%s4 + $0xd0] sm:$0xff] %vm2196, %v3700
  %3765 = vst.msk [vmem:[%s4 + $0xd8] sm:$0xff] %vm2196, %v3701
  %3766 = vst.msk [vmem:[%s4 + $0xe0] sm:$0xff] %vm2196, %v3702
  %3767 = vst.msk [vmem:[%s4 + $0xe8] sm:$0xff] %vm2196, %v3703
  %3768 = vst.msk [vmem:[%s4 + $0xf0] sm:$0xff] %vm2196, %v3704
  %3769 = vst.msk [vmem:[%s4 + $0xf8] sm:$0xff] %vm2196, %v3705
  %3770 = vst.msk [vmem:[%s4 + $0x100] sm:$0xff] %vm2196, %v3706
  %3771 = vst.msk [vmem:[%s4 + $0x108] sm:$0xff] %vm2196, %v3707
  %3772 = vst.msk [vmem:[%s4 + $0x110] sm:$0xff] %vm2196, %v3708
  %3773 = vst.msk [vmem:[%s4 + $0x118] sm:$0xff] %vm2196, %v3709
  %3774 = vst.msk [vmem:[%s4 + $0x120] sm:$0xff] %vm2196, %v3710
  %3775 = vst.msk [vmem:[%s4 + $0x128] sm:$0xff] %vm2196, %v3711
  %3776 = vst.msk [vmem:[%s4 + $0x130] sm:$0xff] %vm2196, %v3712
  %3777 = vst.msk [vmem:[%s4 + $0x138] sm:$0xff] %vm2196, %v3713
  %3778 = vst.msk [vmem:[%s4 + $0x140] sm:$0xff] %vm2196, %v3714
  %3779 = vst.msk [vmem:[%s4 + $0x148] sm:$0xff] %vm2196, %v3715
  %3780 = vst.msk [vmem:[%s4 + $0x150] sm:$0xff] %vm2196, %v3716
  %3781 = vst.msk [vmem:[%s4 + $0x158] sm:$0xff] %vm2196, %v3717
  %3782 = vst.msk [vmem:[%s4 + $0x160] sm:$0xff] %vm2196, %v3718
  %3783 = vst.msk [vmem:[%s4 + $0x168] sm:$0xff] %vm2196, %v3719
  %3784 = vst.msk [vmem:[%s4 + $0x170] sm:$0xff] %vm2196, %v3720
  %3785 = vst.msk [vmem:[%s4 + $0x178] sm:$0xff] %vm2196, %v3721
  %3786 = vst.msk [vmem:[%s4 + $0x180] sm:$0xff] %vm2196, %v3722
  %3787 = vst.msk [vmem:[%s4 + $0x188] sm:$0xff] %vm2196, %v3723
  %3788 = vst.msk [vmem:[%s4 + $0x190] sm:$0xff] %vm2196, %v3724
  %3789 = vst.msk [vmem:[%s4 + $0x198] sm:$0xff] %vm2196, %v3725
  %3790 = vst.msk [vmem:[%s4 + $0x1a0] sm:$0xff] %vm2196, %v3726
  %3791 = vst.msk [vmem:[%s4 + $0x1a8] sm:$0xff] %vm2196, %v3727
  %3792 = vst.msk [vmem:[%s4 + $0x1b0] sm:$0xff] %vm2196, %v3728
  %3793 = vst.msk [vmem:[%s4 + $0x1b8] sm:$0xff] %vm2196, %v3729
  %3794 = vst.msk [vmem:[%s4 + $0x1c0] sm:$0xff] %vm2196, %v3730
  %3795 = vst.msk [vmem:[%s4 + $0x1c8] sm:$0xff] %vm2196, %v3731
  %3796 = vst.msk [vmem:[%s4 + $0x1d0] sm:$0xff] %vm2196, %v3732
  %3797 = vst.msk [vmem:[%s4 + $0x1d8] sm:$0xff] %vm2196, %v3733
  %3798 = vst.msk [vmem:[%s4 + $0x1e0] sm:$0xff] %vm2196, %v3734
  %3799 = vst.msk [vmem:[%s4 + $0x1e8] sm:$0xff] %vm2196, %v3735
  %3800 = vst.msk [vmem:[%s4 + $0x1f0] sm:$0xff] %vm2196, %v3736
  %3801 = vst.msk [vmem:[%s4 + $0x1f8] sm:$0xff] %vm2196, %v3737
  // Predicated region
  $region18: #{tpu_custom_call.1} parent=0 // pred_check
    _
  $region19: #{tpu_custom_call.1} parent=0 // pred_check_branch
    %3803 = sbr.rel (0) target = $region21
  $region20: #{tpu_custom_call.1} parent=0 // pred_region
    _
  $region21: #{tpu_custom_call.1} parent=0 // pred_fallthru
    _
  // Predicated region
  $region22: #{tpu_custom_call.1} parent=0 // pred_check
    _
  $region23: #{tpu_custom_call.1} parent=0 // pred_check_branch
    %3805 = sbr.rel (0) target = $region25
  $region24: #{tpu_custom_call.1} parent=0 // pred_region
    _
  $region25: #{tpu_custom_call.1} parent=0 // pred_fallthru
    _

</llo_original>
